<compile_context>
chip_gen: v7x
topology: tpu7x:2x2x1
jax: 0.10.0
libtpu: 0.0.40
codegen_flags: <defaults>
</compile_context>

<pallas_src>
import functools

import jax
import jax.numpy as jnp
import numpy as np
from jax import lax
from jax.experimental import pallas as pl
from jax.experimental.pallas import tpu as pltpu

_LANE = 128


def _round_up(x, m):
    return ((x + m - 1) // m) * m


def _basic_block_kernel(stride, has_proj, *refs):
    """Fused BasicBlock for one batch element.

    refs (has_proj=True):
      x_ref  : (s*s, Hq, Wq, Cin_p)     bf16  phase-de-interleaved padded input
      w1_ref : (9*Cin_p, Cout_p)        bf16  conv1 weights, im2col layout
      s1/b1  : (1, Cout_p)              f32   folded BN1 scale / bias
      w2_ref : (9*Cout_p, Cout_p)       bf16  conv2 weights, im2col layout
      s2/b2  : (1, Cout_p)              f32   folded BN2 scale / bias
      ws_ref : (Cin_p, Cout_p)          bf16  1x1 projection shortcut weights
      ss/bs  : (1, Cout_p)              f32   folded shortcut BN scale / bias
      out_ref: (Hout, Wout, Cout_p)     f32
      mid_ref: (Hout+2, Wout+2, Cout_p) f32   VMEM scratch (padded conv1 out)
    """
    if has_proj:
        (x_ref, w1_ref, s1_ref, b1_ref, w2_ref, s2_ref, b2_ref,
         ws_ref, ss_ref, bs_ref, out_ref, mid_ref) = refs
    else:
        (x_ref, w1_ref, s1_ref, b1_ref, w2_ref, s2_ref, b2_ref,
         out_ref, mid_ref) = refs

    Hout, Wout, Cp_out = out_ref.shape
    Cp_in = x_ref.shape[-1]
    NT = Hout * Wout

    # Zero only the 1-element halo border of the scratch (the interior is
    # fully overwritten below).  Done every step: it is tiny (~2*(H+W)*C
    # elements) and stays correct when the batch grid axis is sharded across
    # TensorCores (each core has its own scratch instance).
    zrow = jnp.zeros((1, Wout + 2, Cp_out), jnp.float32)
    zcol = jnp.zeros((Hout, 1, Cp_out), jnp.float32)
    mid_ref[0:1, :, :] = zrow
    mid_ref[Hout + 1:Hout + 2, :, :] = zrow
    mid_ref[1:1 + Hout, 0:1, :] = zcol
    mid_ref[1:1 + Hout, Wout + 1:Wout + 2, :] = zcol

    # Phase planes (stride x stride de-interleave, prepared in the wrapper)
    # make every filter-tap window a contiguous, unstrided slice.
    planes = [x_ref[i] for i in range(stride * stride)]

    def tap_x(kh, kw):
        p = planes[(kh % stride) * stride + (kw % stride)]
        return p[kh // stride:kh // stride + Hout,
                 kw // stride:kw // stride + Wout, :]

    # ---- conv1 (3x3, stride) as one im2col matmul + bn1 + relu ------------
    patches1 = jnp.concatenate(
        [tap_x(kh, kw) for kh in range(3) for kw in range(3)],
        axis=-1).reshape(NT, 9 * Cp_in)
    acc1 = jnp.dot(patches1, w1_ref[...],
                   preferred_element_type=jnp.float32)
    mid = jnp.maximum(acc1 * s1_ref[...] + b1_ref[...], 0.0)

    # Interior-only store; the zeroed border is never touched.
    mid_ref[1:1 + Hout, 1:1 + Wout, :] = mid.reshape(Hout, Wout, Cp_out)

    # ---- conv2 (3x3, stride 1) as one im2col matmul + bn2 ------------------
    patches2 = jnp.concatenate(
        [mid_ref[kh:kh + Hout, kw:kw + Wout, :].astype(jnp.bfloat16)
         for kh in range(3) for kw in range(3)],
        axis=-1).reshape(NT, 9 * Cp_out)
    acc2 = jnp.dot(patches2, w2_ref[...],
                   preferred_element_type=jnp.float32)
    out = acc2 * s2_ref[...] + b2_ref[...]

    # ---- shortcut -----------------------------------------------------------
    if has_proj:
        xs = tap_x(1, 1).reshape(NT, Cp_in)        # == x[:, ::s, ::s] im2col
        sc = jnp.dot(xs, ws_ref[...], preferred_element_type=jnp.float32)
        sc = sc * ss_ref[...] + bs_ref[...]
    else:
        # Identity shortcut (stride == 1, Cin == Cout): add the input directly.
        sc = tap_x(1, 1).reshape(NT, Cp_in).astype(jnp.float32)

    out_ref[...] = jnp.maximum(out + sc, 0.0).reshape(
        Hout, Wout, Cp_out).astype(out_ref.dtype)


def basic_block_forward(x_nchw, params, stride):
    """BasicBlock forward. Input/output are NCHW to mirror the PyTorch module."""
    N, Cin, H, W = x_nchw.shape
    Cout = params["w1"].shape[0]
    Hout = (H + 2 - 3) // stride + 1
    Wout = (W + 2 - 3) // stride + 1
    eps = 1e-5

    Cin_p = _round_up(Cin, _LANE)
    Cout_p = _round_up(Cout, _LANE)
    has_proj = (stride != 1) or (Cin != Cout)

    def pad_axis(a, axis, tgt):
        pads = [(0, 0)] * a.ndim
        pads[axis] = (0, tgt - a.shape[axis])
        return jnp.pad(a, pads)

    # NCHW -> NHWC, lane-pad channels, spatial zero-pad of 1, cast to bf16.
    x = jnp.transpose(x_nchw, (0, 2, 3, 1)).astype(jnp.float32)
    x = pad_axis(x, 3, Cin_p)
    x_pad = jnp.pad(x, ((0, 0), (1, 1), (1, 1), (0, 0))).astype(jnp.bfloat16)

    # stride x stride phase de-interleave so all in-kernel taps are unstrided.
    if stride == 1:
        x_ph = x_pad[:, None]                        # (N, 1, H+2, W+2, Cin_p)
    else:
        Hq, Wq = Hout + 1, Wout + 1
        planes = []
        for ph in range(stride):
            for pw in range(stride):
                p = x_pad[:, ph::stride, pw::stride, :][:, :Hq, :Wq, :]
                p = jnp.pad(p, ((0, 0), (0, Hq - p.shape[1]),
                                (0, Wq - p.shape[2]), (0, 0)))
                planes.append(p)
        x_ph = jnp.stack(planes, axis=1)             # (N, s*s, Hq, Wq, Cin_p)

    # OIHW -> HWIO -> lane-pad -> 2-D im2col layout (9*Cin_p, Cout_p), bf16.
    def prep_w3x3(w, cin_p):
        w = jnp.transpose(w, (2, 3, 1, 0)).astype(jnp.float32)   # HWIO
        w = pad_axis(pad_axis(w, 2, cin_p), 3, Cout_p)
        return w.reshape(9 * cin_p, Cout_p).astype(jnp.bfloat16)

    w1m = prep_w3x3(params["w1"], Cin_p)
    w2m = prep_w3x3(params["w2"], Cout_p)

    def fold_bn(g, b, m, v):
        s = (g / jnp.sqrt(v + eps)).astype(jnp.float32)
        bb = (b - m * s).astype(jnp.float32)
        return (pad_axis(s.reshape(1, -1), 1, Cout_p),
                pad_axis(bb.reshape(1, -1), 1, Cout_p))

    s1, b1 = fold_bn(params["bn1_gamma"], params["bn1_beta"],
                     params["bn1_mean"], params["bn1_var"])
    s2, b2 = fold_bn(params["bn2_gamma"], params["bn2_beta"],
                     params["bn2_mean"], params["bn2_var"])

    n_ph, Hq, Wq = x_ph.shape[1], x_ph.shape[2], x_ph.shape[3]

    bn_spec = pl.BlockSpec((1, Cout_p), lambda n: (0, 0))
    in_specs = [
        pl.BlockSpec((None, n_ph, Hq, Wq, Cin_p), lambda n: (n, 0, 0, 0, 0)),
        pl.BlockSpec((9 * Cin_p, Cout_p), lambda n: (0, 0)),
        bn_spec, bn_spec,
        pl.BlockSpec((9 * Cout_p, Cout_p), lambda n: (0, 0)),
        bn_spec, bn_spec,
    ]
    args = [x_ph, w1m, s1, b1, w2m, s2, b2]

    if has_proj:
        ws = jnp.transpose(params["ws"][:, :, 0, 0], (1, 0)).astype(jnp.float32)
        ws = pad_axis(pad_axis(ws, 0, Cin_p), 1, Cout_p).astype(jnp.bfloat16)
        ss, bs = fold_bn(params["bns_gamma"], params["bns_beta"],
                         params["bns_mean"], params["bns_var"])
        in_specs += [pl.BlockSpec((Cin_p, Cout_p), lambda n: (0, 0)),
                     bn_spec, bn_spec]
        args += [ws, ss, bs]

    flops_per_n = 2 * Hout * Wout * Cout_p * (
        9 * Cin_p + 9 * Cout_p + (Cin_p if has_proj else 0))
    bytes_accessed = sum(int(a.size) * a.dtype.itemsize for a in args)
    bytes_accessed += N * Hout * Wout * Cout_p * 4

    kernel = functools.partial(_basic_block_kernel, stride, has_proj)

    out_nhwc = pl.pallas_call(
        kernel,
        out_shape=jax.ShapeDtypeStruct((N, Hout, Wout, Cout_p), jnp.float32),
        grid_spec=pltpu.PrefetchScalarGridSpec(
            num_scalar_prefetch=0,
            grid=(N,),
            in_specs=in_specs,
            out_specs=pl.BlockSpec((None, Hout, Wout, Cout_p),
                                   lambda n: (n, 0, 0, 0)),
            scratch_shapes=[pltpu.VMEM((Hout + 2, Wout + 2, Cout_p),
                                       jnp.float32)],
        ),
        compiler_params=pltpu.CompilerParams(
            dimension_semantics=("parallel",),
            vmem_limit_bytes=48 * 1024 * 1024),
        cost_estimate=pl.CostEstimate(
            flops=int(N * flops_per_n),
            transcendentals=0,
            bytes_accessed=int(bytes_accessed)),
    )(*args)

    # Drop channel padding, back to NCHW.
    return jnp.transpose(out_nhwc[..., :Cout], (0, 3, 1, 2))


def _reference_forward(x, params, stride):
    """Pure-JAX reference (NCHW, eval-mode BN).

    Matched precision: conv operands in bf16 with f32 accumulation (the
    kernel's MXU path); BN / ReLU / residual add stay in f32.
    """
    eps = 1e-5
    Cin, Cout = x.shape[1], params["w1"].shape[0]
    xq = x.astype(jnp.bfloat16).astype(jnp.float32)

    def conv(y, w, s, p):
        return lax.conv_general_dilated(
            y.astype(jnp.bfloat16), w.astype(jnp.bfloat16), (s, s),
            [(p, p), (p, p)],
            dimension_numbers=("NCHW", "OIHW", "NCHW"),
            preferred_element_type=jnp.float32)

    def bn(y, g, b, m, v):
        sc = g / jnp.sqrt(v + eps)
        return y * sc[None, :, None, None] + (b - m * sc)[None, :, None, None]

    out = jax.nn.relu(bn(conv(xq, params["w1"], stride, 1),
                         params["bn1_gamma"], params["bn1_beta"],
                         params["bn1_mean"], params["bn1_var"]))
    out = bn(conv(out, params["w2"], 1, 1),
             params["bn2_gamma"], params["bn2_beta"],
             params["bn2_mean"], params["bn2_var"])
    if stride != 1 or Cin != Cout:
        short = bn(conv(xq, params["ws"], stride, 0),
                   params["bns_gamma"], params["bns_beta"],
                   params["bns_mean"], params["bns_var"])
    else:
        short = xq
    return jax.nn.relu(out + short)


def _init_params(key, cin, cout):
    ks = jax.random.split(key, 16)
    return {
        "w1": jax.random.normal(ks[0], (cout, cin, 3, 3), jnp.float32) * 0.2,
        "bn1_gamma": jax.random.uniform(ks[1], (cout,), jnp.float32, 0.5, 1.5),
        "bn1_beta": jax.random.normal(ks[2], (cout,), jnp.float32) * 0.1,
        "bn1_mean": jax.random.normal(ks[3], (cout,), jnp.float32) * 0.1,
        "bn1_var": jax.random.uniform(ks[4], (cout,), jnp.float32, 0.5, 1.5),
        "w2": jax.random.normal(ks[5], (cout, cout, 3, 3), jnp.float32) * 0.2,
        "bn2_gamma": jax.random.uniform(ks[6], (cout,), jnp.float32, 0.5, 1.5),
        "bn2_beta": jax.random.normal(ks[7], (cout,), jnp.float32) * 0.1,
        "bn2_mean": jax.random.normal(ks[8], (cout,), jnp.float32) * 0.1,
        "bn2_var": jax.random.uniform(ks[9], (cout,), jnp.float32, 0.5, 1.5),
        # 1x1 shortcut conv + BN (used when stride != 1 or cin != cout)
        "ws": jax.random.normal(ks[10], (cout, cin, 1, 1), jnp.float32) * 0.2,
        "bns_gamma": jax.random.uniform(ks[11], (cout,), jnp.float32, 0.5, 1.5),
        "bns_beta": jax.random.normal(ks[12], (cout,), jnp.float32) * 0.1,
        "bns_mean": jax.random.normal(ks[13], (cout,), jnp.float32) * 0.1,
        "bns_var": jax.random.uniform(ks[14], (cout,), jnp.float32, 0.5, 1.5),
    }


if __name__ == "__main__":
    key = jax.random.PRNGKey(0)
    k_x, k_p, k_x2, k_p2 = jax.random.split(key, 4)

    # Case 1: projection shortcut (Cin != Cout) — 1x1-conv/BN path active.
    N, Cin, H, W = 2, 4, 16, 16
    Cout, stride = 8, 1
    x = jax.random.normal(k_x, (N, Cin, H, W), jnp.float32)
    params = _init_params(k_p, Cin, Cout)

    out = jax.block_until_ready(basic_block_forward(x, params, stride))
    ref = jax.block_until_ready(_reference_forward(x, params, stride))
    assert out.shape == ref.shape, (out.shape, ref.shape)
    np.testing.assert_allclose(np.asarray(out), np.asarray(ref),
                               rtol=2e-2, atol=2e-2)

    # Case 2: identity shortcut (stride == 1, Cin == Cout) — specialized kernel.
    x2 = jax.random.normal(k_x2, (N, Cout, H, W), jnp.float32)
    params2 = _init_params(k_p2, Cout, Cout)
    out2 = jax.block_until_ready(basic_block_forward(x2, params2, 1))
    ref2 = jax.block_until_ready(_reference_forward(x2, params2, 1))
    np.testing.assert_allclose(np.asarray(out2), np.asarray(ref2),
                               rtol=2e-2, atol=2e-2)

    print("KERNEL_OK")
</pallas_src>

<mosaic_0001>
module attributes {stable_mosaic.version = 11 : i64} {
  func.func @_basic_block_kernel(%arg0: i32, %arg1: memref<1x1x18x18x128xbf16, #tpu.memory_space<vmem>>, %arg2: memref<1152x128xbf16, #tpu.memory_space<vmem>>, %arg3: memref<1x128xf32, #tpu.memory_space<vmem>>, %arg4: memref<1x128xf32, #tpu.memory_space<vmem>>, %arg5: memref<1152x128xbf16, #tpu.memory_space<vmem>>, %arg6: memref<1x128xf32, #tpu.memory_space<vmem>>, %arg7: memref<1x128xf32, #tpu.memory_space<vmem>>, %arg8: memref<128x128xbf16, #tpu.memory_space<vmem>>, %arg9: memref<1x128xf32, #tpu.memory_space<vmem>>, %arg10: memref<1x128xf32, #tpu.memory_space<vmem>>, %arg11: memref<1x16x16x128xf32, #tpu.memory_space<vmem>>, %arg12: memref<18x18x128xf32, #tpu.memory_space<vmem>>) attributes {dimension_semantics = [#tpu.dimension_semantics<parallel>], iteration_bounds = array<i64: 2>, scalar_prefetch = 0 : i64, scratch_operands = 1 : i64, tpu.core_type = #tpu.core_type<tc>, window_params = [{transform_indices = @transform_0, window_bounds = array<i64: 1, 1, 18, 18, 128>}, {pipeline_mode = #tpu.pipeline_mode<synchronous>, transform_indices = @transform_1, window_bounds = array<i64: 1152, 128>}, {pipeline_mode = #tpu.pipeline_mode<synchronous>, transform_indices = @transform_2, window_bounds = array<i64: 1, 128>}, {pipeline_mode = #tpu.pipeline_mode<synchronous>, transform_indices = @transform_3, window_bounds = array<i64: 1, 128>}, {pipeline_mode = #tpu.pipeline_mode<synchronous>, transform_indices = @transform_4, window_bounds = array<i64: 1152, 128>}, {pipeline_mode = #tpu.pipeline_mode<synchronous>, transform_indices = @transform_5, window_bounds = array<i64: 1, 128>}, {pipeline_mode = #tpu.pipeline_mode<synchronous>, transform_indices = @transform_6, window_bounds = array<i64: 1, 128>}, {pipeline_mode = #tpu.pipeline_mode<synchronous>, transform_indices = @transform_7, window_bounds = array<i64: 128, 128>}, {pipeline_mode = #tpu.pipeline_mode<synchronous>, transform_indices = @transform_8, window_bounds = array<i64: 1, 128>}, {pipeline_mode = #tpu.pipeline_mode<synchronous>, transform_indices = @transform_9, window_bounds = array<i64: 1, 128>}, {transform_indices = @transform_10, window_bounds = array<i64: 1, 16, 16, 128>}]} {
    %cst = arith.constant 0.000000e+00 : f32
    %0 = vector.broadcast %cst : f32 to vector<1x18x128xf32>
    %cst_0 = arith.constant 0.000000e+00 : f32
    %1 = vector.broadcast %cst_0 : f32 to vector<16x1x128xf32>
    %c0 = arith.constant 0 : index
    %c0_1 = arith.constant 0 : index
    %c0_2 = arith.constant 0 : index
    %2 = vector.load %arg12[%c0, %c0_1, %c0_2] : memref<18x18x128xf32, #tpu.memory_space<vmem>>, vector<1x18x128xf32>
    tpu.vector_store %arg12[%c0, %c0_1, %c0_2], %0 {strides = array<i32>} : memref<18x18x128xf32, #tpu.memory_space<vmem>>, vector<1x18x128xf32>,
    %c17 = arith.constant 17 : index
    %c0_3 = arith.constant 0 : index
    %c0_4 = arith.constant 0 : index
    %3 = vector.load %arg12[%c17, %c0_3, %c0_4] : memref<18x18x128xf32, #tpu.memory_space<vmem>>, vector<1x18x128xf32>
    tpu.vector_store %arg12[%c17, %c0_3, %c0_4], %0 {strides = array<i32>} : memref<18x18x128xf32, #tpu.memory_space<vmem>>, vector<1x18x128xf32>,
    %c1 = arith.constant 1 : index
    %c0_5 = arith.constant 0 : index
    %c0_6 = arith.constant 0 : index
    %4 = vector.load %arg12[%c1, %c0_5, %c0_6] : memref<18x18x128xf32, #tpu.memory_space<vmem>>, vector<16x1x128xf32>
    tpu.vector_store %arg12[%c1, %c0_5, %c0_6], %1 {strides = array<i32>} : memref<18x18x128xf32, #tpu.memory_space<vmem>>, vector<16x1x128xf32>,
    %c1_7 = arith.constant 1 : index
    %c17_8 = arith.constant 17 : index
    %c0_9 = arith.constant 0 : index
    %5 = vector.load %arg12[%c1_7, %c17_8, %c0_9] : memref<18x18x128xf32, #tpu.memory_space<vmem>>, vector<16x1x128xf32>
    tpu.vector_store %arg12[%c1_7, %c17_8, %c0_9], %1 {strides = array<i32>} : memref<18x18x128xf32, #tpu.memory_space<vmem>>, vector<16x1x128xf32>,
    %c0_10 = arith.constant 0 : index
    %c0_11 = arith.constant 0 : index
    %c0_12 = arith.constant 0 : index
    %c0_13 = arith.constant 0 : index
    %c0_14 = arith.constant 0 : index
    %6 = vector.load %arg1[%c0_10, %c0_11, %c0_12, %c0_13, %c0_14] : memref<1x1x18x18x128xbf16, #tpu.memory_space<vmem>>, vector<1x1x18x18x128xbf16>
    %7 = vector.shape_cast %6 : vector<1x1x18x18x128xbf16> to vector<18x18x128xbf16>
    %8 = vector.extract_strided_slice %7 {offsets = [0, 0, 0], sizes = [16, 16, 128], strides = [1, 1, 1]} : vector<18x18x128xbf16> to vector<16x16x128xbf16>
    %9 = vector.extract_strided_slice %7 {offsets = [0, 1, 0], sizes = [16, 16, 128], strides = [1, 1, 1]} : vector<18x18x128xbf16> to vector<16x16x128xbf16>
    %10 = vector.extract_strided_slice %7 {offsets = [0, 2, 0], sizes = [16, 16, 128], strides = [1, 1, 1]} : vector<18x18x128xbf16> to vector<16x16x128xbf16>
    %11 = vector.extract_strided_slice %7 {offsets = [1, 0, 0], sizes = [16, 16, 128], strides = [1, 1, 1]} : vector<18x18x128xbf16> to vector<16x16x128xbf16>
    %12 = vector.extract_strided_slice %7 {offsets = [1, 1, 0], sizes = [16, 16, 128], strides = [1, 1, 1]} : vector<18x18x128xbf16> to vector<16x16x128xbf16>
    %13 = vector.extract_strided_slice %7 {offsets = [1, 2, 0], sizes = [16, 16, 128], strides = [1, 1, 1]} : vector<18x18x128xbf16> to vector<16x16x128xbf16>
    %14 = vector.extract_strided_slice %7 {offsets = [2, 0, 0], sizes = [16, 16, 128], strides = [1, 1, 1]} : vector<18x18x128xbf16> to vector<16x16x128xbf16>
    %15 = vector.extract_strided_slice %7 {offsets = [2, 1, 0], sizes = [16, 16, 128], strides = [1, 1, 1]} : vector<18x18x128xbf16> to vector<16x16x128xbf16>
    %16 = vector.extract_strided_slice %7 {offsets = [2, 2, 0], sizes = [16, 16, 128], strides = [1, 1, 1]} : vector<18x18x128xbf16> to vector<16x16x128xbf16>
    %17 = tpu.concatenate %8, %9, %10, %11, %12, %13, %14, %15, %16 in 2 : vector<16x16x128xbf16>, vector<16x16x128xbf16>, vector<16x16x128xbf16>, vector<16x16x128xbf16>, vector<16x16x128xbf16>, vector<16x16x128xbf16>, vector<16x16x128xbf16>, vector<16x16x128xbf16>, vector<16x16x128xbf16> -> vector<16x16x1152xbf16>
    %18 = vector.shape_cast %17 : vector<16x16x1152xbf16> to vector<256x1152xbf16>
    %c0_15 = arith.constant 0 : index
    %c0_16 = arith.constant 0 : index
    %19 = vector.load %arg2[%c0_15, %c0_16] : memref<1152x128xbf16, #tpu.memory_space<vmem>>, vector<1152x128xbf16>
    %cst_17 = arith.constant dense<0.000000e+00> : vector<256x128xf32>
    %20 = tpu.matmul %18, %19, %cst_17 {dimension_numbers = #tpu.dot_dimension_numbers<[1], [0], [0], [1], [0, 0, 1, 1], [], []>} : vector<256x1152xbf16>, vector<1152x128xbf16>, vector<256x128xf32> -> vector<256x128xf32>
    %c0_18 = arith.constant 0 : index
    %c0_19 = arith.constant 0 : index
    %21 = vector.load %arg3[%c0_18, %c0_19] : memref<1x128xf32, #tpu.memory_space<vmem>>, vector<1x128xf32>
    %22 = vector.broadcast %21 : vector<1x128xf32> to vector<256x128xf32>
    %23 = arith.mulf %20, %22 : vector<256x128xf32>
    %c0_20 = arith.constant 0 : index
    %c0_21 = arith.constant 0 : index
    %24 = vector.load %arg4[%c0_20, %c0_21] : memref<1x128xf32, #tpu.memory_space<vmem>>, vector<1x128xf32>
    %25 = vector.broadcast %24 : vector<1x128xf32> to vector<256x128xf32>
    %26 = arith.addf %23, %25 : vector<256x128xf32>
    %cst_22 = arith.constant 0.000000e+00 : f32
    %27 = vector.broadcast %cst_22 : f32 to vector<256x128xf32>
    %28 = arith.maximumf %26, %27 : vector<256x128xf32>
    %29 = vector.shape_cast %28 : vector<256x128xf32> to vector<16x16x128xf32>
    %c1_23 = arith.constant 1 : index
    %c1_24 = arith.constant 1 : index
    %c0_25 = arith.constant 0 : index
    %30 = vector.load %arg12[%c1_23, %c1_24, %c0_25] : memref<18x18x128xf32, #tpu.memory_space<vmem>>, vector<16x16x128xf32>
    tpu.vector_store %arg12[%c1_23, %c1_24, %c0_25], %29 {strides = array<i32>} : memref<18x18x128xf32, #tpu.memory_space<vmem>>, vector<16x16x128xf32>,
    %c0_26 = arith.constant 0 : index
    %c0_27 = arith.constant 0 : index
    %c0_28 = arith.constant 0 : index
    %31 = vector.load %arg12[%c0_26, %c0_27, %c0_28] : memref<18x18x128xf32, #tpu.memory_space<vmem>>, vector<16x16x128xf32>
    %32 = arith.truncf %31 : vector<16x16x128xf32> to vector<16x16x128xbf16>
    %c0_29 = arith.constant 0 : index
    %c1_30 = arith.constant 1 : index
    %c0_31 = arith.constant 0 : index
    %33 = vector.load %arg12[%c0_29, %c1_30, %c0_31] : memref<18x18x128xf32, #tpu.memory_space<vmem>>, vector<16x16x128xf32>
    %34 = arith.truncf %33 : vector<16x16x128xf32> to vector<16x16x128xbf16>
    %c0_32 = arith.constant 0 : index
    %c2 = arith.constant 2 : index
    %c0_33 = arith.constant 0 : index
    %35 = vector.load %arg12[%c0_32, %c2, %c0_33] : memref<18x18x128xf32, #tpu.memory_space<vmem>>, vector<16x16x128xf32>
    %36 = arith.truncf %35 : vector<16x16x128xf32> to vector<16x16x128xbf16>
    %c1_34 = arith.constant 1 : index
    %c0_35 = arith.constant 0 : index
    %c0_36 = arith.constant 0 : index
    %37 = vector.load %arg12[%c1_34, %c0_35, %c0_36] : memref<18x18x128xf32, #tpu.memory_space<vmem>>, vector<16x16x128xf32>
    %38 = arith.truncf %37 : vector<16x16x128xf32> to vector<16x16x128xbf16>
    %c1_37 = arith.constant 1 : index
    %c1_38 = arith.constant 1 : index
    %c0_39 = arith.constant 0 : index
    %39 = vector.load %arg12[%c1_37, %c1_38, %c0_39] : memref<18x18x128xf32, #tpu.memory_space<vmem>>, vector<16x16x128xf32>
    %40 = arith.truncf %39 : vector<16x16x128xf32> to vector<16x16x128xbf16>
    %c1_40 = arith.constant 1 : index
    %c2_41 = arith.constant 2 : index
    %c0_42 = arith.constant 0 : index
    %41 = vector.load %arg12[%c1_40, %c2_41, %c0_42] : memref<18x18x128xf32, #tpu.memory_space<vmem>>, vector<16x16x128xf32>
    %42 = arith.truncf %41 : vector<16x16x128xf32> to vector<16x16x128xbf16>
    %c2_43 = arith.constant 2 : index
    %c0_44 = arith.constant 0 : index
    %c0_45 = arith.constant 0 : index
    %43 = vector.load %arg12[%c2_43, %c0_44, %c0_45] : memref<18x18x128xf32, #tpu.memory_space<vmem>>, vector<16x16x128xf32>
    %44 = arith.truncf %43 : vector<16x16x128xf32> to vector<16x16x128xbf16>
    %c2_46 = arith.constant 2 : index
    %c1_47 = arith.constant 1 : index
    %c0_48 = arith.constant 0 : index
    %45 = vector.load %arg12[%c2_46, %c1_47, %c0_48] : memref<18x18x128xf32, #tpu.memory_space<vmem>>, vector<16x16x128xf32>
    %46 = arith.truncf %45 : vector<16x16x128xf32> to vector<16x16x128xbf16>
    %c2_49 = arith.constant 2 : index
    %c2_50 = arith.constant 2 : index
    %c0_51 = arith.constant 0 : index
    %47 = vector.load %arg12[%c2_49, %c2_50, %c0_51] : memref<18x18x128xf32, #tpu.memory_space<vmem>>, vector<16x16x128xf32>
    %48 = arith.truncf %47 : vector<16x16x128xf32> to vector<16x16x128xbf16>
    %49 = tpu.concatenate %32, %34, %36, %38, %40, %42, %44, %46, %48 in 2 : vector<16x16x128xbf16>, vector<16x16x128xbf16>, vector<16x16x128xbf16>, vector<16x16x128xbf16>, vector<16x16x128xbf16>, vector<16x16x128xbf16>, vector<16x16x128xbf16>, vector<16x16x128xbf16>, vector<16x16x128xbf16> -> vector<16x16x1152xbf16>
    %50 = vector.shape_cast %49 : vector<16x16x1152xbf16> to vector<256x1152xbf16>
    %c0_52 = arith.constant 0 : index
    %c0_53 = arith.constant 0 : index
    %51 = vector.load %arg5[%c0_52, %c0_53] : memref<1152x128xbf16, #tpu.memory_space<vmem>>, vector<1152x128xbf16>
    %cst_54 = arith.constant dense<0.000000e+00> : vector<256x128xf32>
    %52 = tpu.matmul %50, %51, %cst_54 {dimension_numbers = #tpu.dot_dimension_numbers<[1], [0], [0], [1], [0, 0, 1, 1], [], []>} : vector<256x1152xbf16>, vector<1152x128xbf16>, vector<256x128xf32> -> vector<256x128xf32>
    %c0_55 = arith.constant 0 : index
    %c0_56 = arith.constant 0 : index
    %53 = vector.load %arg6[%c0_55, %c0_56] : memref<1x128xf32, #tpu.memory_space<vmem>>, vector<1x128xf32>
    %54 = vector.broadcast %53 : vector<1x128xf32> to vector<256x128xf32>
    %55 = arith.mulf %52, %54 : vector<256x128xf32>
    %c0_57 = arith.constant 0 : index
    %c0_58 = arith.constant 0 : index
    %56 = vector.load %arg7[%c0_57, %c0_58] : memref<1x128xf32, #tpu.memory_space<vmem>>, vector<1x128xf32>
    %57 = vector.broadcast %56 : vector<1x128xf32> to vector<256x128xf32>
    %58 = arith.addf %55, %57 : vector<256x128xf32>
    %59 = vector.extract_strided_slice %7 {offsets = [1, 1, 0], sizes = [16, 16, 128], strides = [1, 1, 1]} : vector<18x18x128xbf16> to vector<16x16x128xbf16>
    %60 = vector.shape_cast %59 : vector<16x16x128xbf16> to vector<256x128xbf16>
    %c0_59 = arith.constant 0 : index
    %c0_60 = arith.constant 0 : index
    %61 = vector.load %arg8[%c0_59, %c0_60] : memref<128x128xbf16, #tpu.memory_space<vmem>>, vector<128x128xbf16>
    %cst_61 = arith.constant dense<0.000000e+00> : vector<256x128xf32>
    %62 = tpu.matmul %60, %61, %cst_61 {dimension_numbers = #tpu.dot_dimension_numbers<[1], [0], [0], [1], [0, 0, 1, 1], [], []>} : vector<256x128xbf16>, vector<128x128xbf16>, vector<256x128xf32> -> vector<256x128xf32>
    %c0_62 = arith.constant 0 : index
    %c0_63 = arith.constant 0 : index
    %63 = vector.load %arg9[%c0_62, %c0_63] : memref<1x128xf32, #tpu.memory_space<vmem>>, vector<1x128xf32>
    %64 = vector.broadcast %63 : vector<1x128xf32> to vector<256x128xf32>
    %65 = arith.mulf %62, %64 : vector<256x128xf32>
    %c0_64 = arith.constant 0 : index
    %c0_65 = arith.constant 0 : index
    %66 = vector.load %arg10[%c0_64, %c0_65] : memref<1x128xf32, #tpu.memory_space<vmem>>, vector<1x128xf32>
    %67 = vector.broadcast %66 : vector<1x128xf32> to vector<256x128xf32>
    %68 = arith.addf %65, %67 : vector<256x128xf32>
    %69 = arith.addf %58, %68 : vector<256x128xf32>
    %cst_66 = arith.constant 0.000000e+00 : f32
    %70 = vector.broadcast %cst_66 : f32 to vector<256x128xf32>
    %71 = arith.maximumf %69, %70 : vector<256x128xf32>
    %72 = vector.shape_cast %71 : vector<256x128xf32> to vector<16x16x128xf32>
    %c0_67 = arith.constant 0 : index
    %c0_68 = arith.constant 0 : index
    %c0_69 = arith.constant 0 : index
    %c0_70 = arith.constant 0 : index
    %73 = vector.load %arg11[%c0_67, %c0_68, %c0_69, %c0_70] : memref<1x16x16x128xf32, #tpu.memory_space<vmem>>, vector<1x16x16x128xf32>
    %74 = vector.shape_cast %73 : vector<1x16x16x128xf32> to vector<16x16x128xf32>
    %75 = vector.shape_cast %72 : vector<16x16x128xf32> to vector<1x16x16x128xf32>
    tpu.vector_store %arg11[%c0_67, %c0_68, %c0_69, %c0_70], %75 {strides = array<i32>} : memref<1x16x16x128xf32, #tpu.memory_space<vmem>>, vector<1x16x16x128xf32>,
    return
  }
  func.func @transform_0(%arg0: i32) -> (i32, i32, i32, i32, i32) {
    %c0_i32 = arith.constant 0 : i32
    %c0_i32_0 = arith.constant 0 : i32
    %c0_i32_1 = arith.constant 0 : i32
    %c0_i32_2 = arith.constant 0 : i32
    %c0_i32_3 = arith.constant 0 : i32
    return %arg0, %c0_i32, %c0_i32_0, %c0_i32_1, %c0_i32_2 : i32, i32, i32, i32, i32
  }
  func.func @transform_1(%arg0: i32) -> (i32, i32) {
    %c0_i32 = arith.constant 0 : i32
    %c0_i32_0 = arith.constant 0 : i32
    %c0_i32_1 = arith.constant 0 : i32
    return %c0_i32, %c0_i32_0 : i32, i32
  }
  func.func @transform_2(%arg0: i32) -> (i32, i32) {
    %c0_i32 = arith.constant 0 : i32
    %c0_i32_0 = arith.constant 0 : i32
    %c0_i32_1 = arith.constant 0 : i32
    return %c0_i32, %c0_i32_0 : i32, i32
  }
  func.func @transform_3(%arg0: i32) -> (i32, i32) {
    %c0_i32 = arith.constant 0 : i32
    %c0_i32_0 = arith.constant 0 : i32
    %c0_i32_1 = arith.constant 0 : i32
    return %c0_i32, %c0_i32_0 : i32, i32
  }
  func.func @transform_4(%arg0: i32) -> (i32, i32) {
    %c0_i32 = arith.constant 0 : i32
    %c0_i32_0 = arith.constant 0 : i32
    %c0_i32_1 = arith.constant 0 : i32
    return %c0_i32, %c0_i32_0 : i32, i32
  }
  func.func @transform_5(%arg0: i32) -> (i32, i32) {
    %c0_i32 = arith.constant 0 : i32
    %c0_i32_0 = arith.constant 0 : i32
    %c0_i32_1 = arith.constant 0 : i32
    return %c0_i32, %c0_i32_0 : i32, i32
  }
  func.func @transform_6(%arg0: i32) -> (i32, i32) {
    %c0_i32 = arith.constant 0 : i32
    %c0_i32_0 = arith.constant 0 : i32
    %c0_i32_1 = arith.constant 0 : i32
    return %c0_i32, %c0_i32_0 : i32, i32
  }
  func.func @transform_7(%arg0: i32) -> (i32, i32) {
    %c0_i32 = arith.constant 0 : i32
    %c0_i32_0 = arith.constant 0 : i32
    %c0_i32_1 = arith.constant 0 : i32
    return %c0_i32, %c0_i32_0 : i32, i32
  }
  func.func @transform_8(%arg0: i32) -> (i32, i32) {
    %c0_i32 = arith.constant 0 : i32
    %c0_i32_0 = arith.constant 0 : i32
    %c0_i32_1 = arith.constant 0 : i32
    return %c0_i32, %c0_i32_0 : i32, i32
  }
  func.func @transform_9(%arg0: i32) -> (i32, i32) {
    %c0_i32 = arith.constant 0 : i32
    %c0_i32_0 = arith.constant 0 : i32
    %c0_i32_1 = arith.constant 0 : i32
    return %c0_i32, %c0_i32_0 : i32, i32
  }
  func.func @transform_10(%arg0: i32) -> (i32, i32, i32, i32) {
    %c0_i32 = arith.constant 0 : i32
    %c0_i32_0 = arith.constant 0 : i32
    %c0_i32_1 = arith.constant 0 : i32
    %c0_i32_2 = arith.constant 0 : i32
    return %arg0, %c0_i32, %c0_i32_0, %c0_i32_1 : i32, i32, i32, i32
  }
}

</mosaic_0001>

<llo_original>
// kernel: tpu_custom_call.1
$region0: #{tpu_custom_call.1}
  #allocation0 [shape = 'u32[]', space=smem, size = 0x4, offset = 0x4, fixed_abs, tag = 'smem constant byte address 0x4 - core index']
  #allocation1 [shape = 'u32[144,128]{1,0:T(1,128)}', space=vmem, size = 0x12000, scoped, tag = 'internal scratch']
  #allocation2 [shape = 'f32[18,18,128]{2,1,0:T(8,128)}', space=vmem, size = 0x36000, scoped, tag = 'scratch operand']
  %s0 = inlined_call_operand.vmem [shape: bf16[2,1,18,18,128], index: 0, kind: input, shape index: {}]
  %s1 = inlined_call_operand.vmem [shape: bf16[1152,128], index: 1, kind: input, shape index: {}]
  %s2 = inlined_call_operand.vmem [shape: f32[1,128], index: 2, kind: input, shape index: {}]
  %s3 = inlined_call_operand.vmem [shape: f32[1,128], index: 3, kind: input, shape index: {}]
  %s4 = inlined_call_operand.hbm [shape: bf16[1152,128], index: 4, kind: input, shape index: {}]
  %s5 = inlined_call_operand.vmem [shape: f32[1,128], index: 5, kind: input, shape index: {}]
  %s6 = inlined_call_operand.vmem [shape: f32[1,128], index: 6, kind: input, shape index: {}]
  %s7 = inlined_call_operand.vmem [shape: bf16[128,128], index: 7, kind: input, shape index: {}]
  %s8 = inlined_call_operand.vmem [shape: f32[1,128], index: 8, kind: input, shape index: {}]
  %s9 = inlined_call_operand.vmem [shape: f32[1,128], index: 9, kind: input, shape index: {}]
  %s10 = inlined_call_operand.hbm [shape: f32[2,16,16,128], index: 10, kind: output, shape index: {}]
  %s11 = sld [smem:[#allocation0]]
  $region77: #{tpu_custom_call.1} parent=0
    _
  %s13 = ssub.s32 1, %s11
  %s14 = scalar_select 0, %s13, %s11
  $region1: #{tpu_custom_call.1} parent=0
    #allocation3 [shape = 'u8[294912]{0}', space=vmem, size = 0x48000, scoped, tag = 'input window, operand 4, single buffered']
    #allocation4 [shape = 's32[2]{0}', space=sflag, size = 0x8, scoped, tag = 'scoped memory for tpu_custom_call.1']
    #allocation5 [shape = 's32[2]{0}', space=sflag, size = 0x8, scoped, tag = 'scoped memory for tpu_custom_call.1']
    #allocation6 [shape = 'u8[262144]{0}', space=vmem, size = 0x40000, scoped, tag = 'output window, operand 0']
    %15 = vsyncpa [#allocation4], 0
    %16 = vsyncpa [#allocation5], 0
    %s17 = scalar_lea.sflag [#allocation5], 1
    %18 = vsyncpa %s17, 0
    loop: start=0, step=1, limit=4
    $region2: #{tpu_custom_call.1} parent=1 // loop_pre_header
      _
    $region3: #{tpu_custom_call.1} parent=1 // loop_header
      %s20 = sphi 0, %s24
      %p21 = scmp.ge.s32.totalorder %s20, 4
      %s30 = sphi 0, %s32
      %s33 = sphi 0, %s30
      %s34 = sphi 0, %s33
      %s50 = sphi 0, %s34
      %s54 = sphi 0, %s54
      %s56 = sphi 0, %s54
      %s57 = sphi 0, %s56
      %s71 = sphi 0, %s57
      %s75 = sphi 0, %s75
      %s77 = sphi 0, %s75
      %s78 = sphi 0, %s77
      %s92 = sphi 0, %s78
      %s96 = sphi 0, %s96
      %s98 = sphi 0, %s96
      %s99 = sphi 0, %s98
      %s113 = sphi 0, %s99
      %s117 = sphi 0, %s117
      %s119 = sphi 0, %s117
      %s120 = sphi 0, %s119
      %s134 = sphi 0, %s120
      %s138 = sphi 0, %s138
      %s140 = sphi 0, %s138
      %s141 = sphi 0, %s140
      %s155 = sphi 0, %s141
      %s159 = sphi 0, %s159
      %s161 = sphi 0, %s159
      %s162 = sphi 0, %s161
      %s176 = sphi 0, %s162
      %s180 = sphi 0, %s180
      %s182 = sphi 0, %s180
      %s183 = sphi 0, %s182
      %s197 = sphi 0, %s183
      %s201 = sphi 0, %s201
      %s203 = sphi 0, %s201
      %s204 = sphi 0, %s203
      %s218 = sphi 0, %s204
      %s222 = sphi 0, %s222
      %s224 = sphi 0, %s222
      %s225 = sphi 0, %s224
      %s239 = sphi 0, %s225
      %s245 = sphi 0, %s247
      %s248 = sphi 0, %s245
      %s249 = sphi 0, %s248
      %s265 = sphi 0, %s249
    $region4: #{tpu_custom_call.1} parent=1 // loop_header_branch
      %23 = sbr.rel (%p21) target = $region8
    $region5: #{tpu_custom_call.1} parent=1 // loop_body
      %s25 = ssub.s32 %s20, 1
      %s26 = ssub.s32 %s20, 2
      %s27 = sadd.s32 %s20, 1
      %s28 = ssub.s32 %s20, %s27
      %p29 = scmp.eq.s32.totalorder %s28, 0
      %s31 = sadd.s32 %s30, 1
      %s32 = scalar_select %p29, %s30, %s31
      %p35 = pneg %p29
      %p36 = scmp.eq.s32.totalorder %s20, 1
      %p37 = por %p35, %p36
      %p38 = scmp.ne.s32.totalorder %s30, %s33
      %p39 = scmp.eq.s32.totalorder %s20, 0
      %p40 = por %p38, %p39
      %p41 = scmp.ne.s32.totalorder %s30, %s33
      %p42 = scmp.eq.s32.totalorder %s25, 1
      %p43 = por %p41, %p42
      %p44 = scmp.ne.s32.totalorder %s33, %s34
      %p45 = scmp.eq.s32.totalorder %s25, 0
      %p46 = por %p44, %p45
      %p47 = scmp.ne.s32.totalorder %s33, %s34
      %p48 = scmp.eq.s32.totalorder %s26, 1
      %p49 = por %p47, %p48
      %p51 = scmp.ne.s32.totalorder %s34, %s50
      %p52 = scmp.eq.s32.totalorder %s26, 0
      %p53 = por %p51, %p52
      %s55 = sadd.s32 %s54, 1
      %p58 = scmp.eq.s32.totalorder %s20, 1
      %p59 = scmp.ne.s32.totalorder %s54, %s56
      %p60 = scmp.eq.s32.totalorder %s20, 0
      %p61 = por %p59, %p60
      %p62 = scmp.ne.s32.totalorder %s54, %s56
      %p63 = scmp.eq.s32.totalorder %s25, 1
      %p64 = por %p62, %p63
      %p65 = scmp.ne.s32.totalorder %s56, %s57
      %p66 = scmp.eq.s32.totalorder %s25, 0
      %p67 = por %p65, %p66
      %p68 = scmp.ne.s32.totalorder %s56, %s57
      %p69 = scmp.eq.s32.totalorder %s26, 1
      %p70 = por %p68, %p69
      %p72 = scmp.ne.s32.totalorder %s57, %s71
      %p73 = scmp.eq.s32.totalorder %s26, 0
      %p74 = por %p72, %p73
      %s76 = sadd.s32 %s75, 1
      %p79 = scmp.eq.s32.totalorder %s20, 1
      %p80 = scmp.ne.s32.totalorder %s75, %s77
      %p81 = scmp.eq.s32.totalorder %s20, 0
      %p82 = por %p80, %p81
      %p83 = scmp.ne.s32.totalorder %s75, %s77
      %p84 = scmp.eq.s32.totalorder %s25, 1
      %p85 = por %p83, %p84
      %p86 = scmp.ne.s32.totalorder %s77, %s78
      %p87 = scmp.eq.s32.totalorder %s25, 0
      %p88 = por %p86, %p87
      %p89 = scmp.ne.s32.totalorder %s77, %s78
      %p90 = scmp.eq.s32.totalorder %s26, 1
      %p91 = por %p89, %p90
      %p93 = scmp.ne.s32.totalorder %s78, %s92
      %p94 = scmp.eq.s32.totalorder %s26, 0
      %p95 = por %p93, %p94
      %s97 = sadd.s32 %s96, 1
      %p100 = scmp.eq.s32.totalorder %s20, 1
      %p101 = scmp.ne.s32.totalorder %s96, %s98
      %p102 = scmp.eq.s32.totalorder %s20, 0
      %p103 = por %p101, %p102
      %p104 = scmp.ne.s32.totalorder %s96, %s98
      %p105 = scmp.eq.s32.totalorder %s25, 1
      %p106 = por %p104, %p105
      %p107 = scmp.ne.s32.totalorder %s98, %s99
      %p108 = scmp.eq.s32.totalorder %s25, 0
      %p109 = por %p107, %p108
      %p110 = scmp.ne.s32.totalorder %s98, %s99
      %p111 = scmp.eq.s32.totalorder %s26, 1
      %p112 = por %p110, %p111
      %p114 = scmp.ne.s32.totalorder %s99, %s113
      %p115 = scmp.eq.s32.totalorder %s26, 0
      %p116 = por %p114, %p115
      %s118 = sadd.s32 %s117, 1
      %p121 = scmp.eq.s32.totalorder %s20, 1
      %p122 = scmp.ne.s32.totalorder %s117, %s119
      %p123 = scmp.eq.s32.totalorder %s20, 0
      %p124 = por %p122, %p123
      %p125 = scmp.ne.s32.totalorder %s117, %s119
      %p126 = scmp.eq.s32.totalorder %s25, 1
      %p127 = por %p125, %p126
      %p128 = scmp.ne.s32.totalorder %s119, %s120
      %p129 = scmp.eq.s32.totalorder %s25, 0
      %p130 = por %p128, %p129
      %p131 = scmp.ne.s32.totalorder %s119, %s120
      %p132 = scmp.eq.s32.totalorder %s26, 1
      %p133 = por %p131, %p132
      %p135 = scmp.ne.s32.totalorder %s120, %s134
      %p136 = scmp.eq.s32.totalorder %s26, 0
      %p137 = por %p135, %p136
      %s139 = sadd.s32 %s138, 1
      %p142 = scmp.eq.s32.totalorder %s20, 1
      %p143 = scmp.ne.s32.totalorder %s138, %s140
      %p144 = scmp.eq.s32.totalorder %s20, 0
      %p145 = por %p143, %p144
      %p146 = scmp.ne.s32.totalorder %s138, %s140
      %p147 = scmp.eq.s32.totalorder %s25, 1
      %p148 = por %p146, %p147
      %p149 = scmp.ne.s32.totalorder %s140, %s141
      %p150 = scmp.eq.s32.totalorder %s25, 0
      %p151 = por %p149, %p150
      %p152 = scmp.ne.s32.totalorder %s140, %s141
      %p153 = scmp.eq.s32.totalorder %s26, 1
      %p154 = por %p152, %p153
      %p156 = scmp.ne.s32.totalorder %s141, %s155
      %p157 = scmp.eq.s32.totalorder %s26, 0
      %p158 = por %p156, %p157
      %s160 = sadd.s32 %s159, 1
      %p163 = scmp.eq.s32.totalorder %s20, 1
      %p164 = scmp.ne.s32.totalorder %s159, %s161
      %p165 = scmp.eq.s32.totalorder %s20, 0
      %p166 = por %p164, %p165
      %p167 = scmp.ne.s32.totalorder %s159, %s161
      %p168 = scmp.eq.s32.totalorder %s25, 1
      %p169 = por %p167, %p168
      %p170 = scmp.ne.s32.totalorder %s161, %s162
      %p171 = scmp.eq.s32.totalorder %s25, 0
      %p172 = por %p170, %p171
      %p173 = scmp.ne.s32.totalorder %s161, %s162
      %p174 = scmp.eq.s32.totalorder %s26, 1
      %p175 = por %p173, %p174
      %p177 = scmp.ne.s32.totalorder %s162, %s176
      %p178 = scmp.eq.s32.totalorder %s26, 0
      %p179 = por %p177, %p178
      %s181 = sadd.s32 %s180, 1
      %p184 = scmp.eq.s32.totalorder %s20, 1
      %p185 = scmp.ne.s32.totalorder %s180, %s182
      %p186 = scmp.eq.s32.totalorder %s20, 0
      %p187 = por %p185, %p186
      %p188 = scmp.ne.s32.totalorder %s180, %s182
      %p189 = scmp.eq.s32.totalorder %s25, 1
      %p190 = por %p188, %p189
      %p191 = scmp.ne.s32.totalorder %s182, %s183
      %p192 = scmp.eq.s32.totalorder %s25, 0
      %p193 = por %p191, %p192
      %p194 = scmp.ne.s32.totalorder %s182, %s183
      %p195 = scmp.eq.s32.totalorder %s26, 1
      %p196 = por %p194, %p195
      %p198 = scmp.ne.s32.totalorder %s183, %s197
      %p199 = scmp.eq.s32.totalorder %s26, 0
      %p200 = por %p198, %p199
      %s202 = sadd.s32 %s201, 1
      %p205 = scmp.eq.s32.totalorder %s20, 1
      %p206 = scmp.ne.s32.totalorder %s201, %s203
      %p207 = scmp.eq.s32.totalorder %s20, 0
      %p208 = por %p206, %p207
      %p209 = scmp.ne.s32.totalorder %s201, %s203
      %p210 = scmp.eq.s32.totalorder %s25, 1
      %p211 = por %p209, %p210
      %p212 = scmp.ne.s32.totalorder %s203, %s204
      %p213 = scmp.eq.s32.totalorder %s25, 0
      %p214 = por %p212, %p213
      %p215 = scmp.ne.s32.totalorder %s203, %s204
      %p216 = scmp.eq.s32.totalorder %s26, 1
      %p217 = por %p215, %p216
      %p219 = scmp.ne.s32.totalorder %s204, %s218
      %p220 = scmp.eq.s32.totalorder %s26, 0
      %p221 = por %p219, %p220
      %s223 = sadd.s32 %s222, 1
      %p226 = scmp.eq.s32.totalorder %s20, 1
      %p227 = scmp.ne.s32.totalorder %s222, %s224
      %p228 = scmp.eq.s32.totalorder %s20, 0
      %p229 = por %p227, %p228
      %p230 = scmp.ne.s32.totalorder %s222, %s224
      %p231 = scmp.eq.s32.totalorder %s25, 1
      %p232 = por %p230, %p231
      %p233 = scmp.ne.s32.totalorder %s224, %s225
      %p234 = scmp.eq.s32.totalorder %s25, 0
      %p235 = por %p233, %p234
      %p236 = scmp.ne.s32.totalorder %s224, %s225
      %p237 = scmp.eq.s32.totalorder %s26, 1
      %p238 = por %p236, %p237
      %p240 = scmp.ne.s32.totalorder %s225, %s239
      %p241 = scmp.eq.s32.totalorder %s26, 0
      %p242 = por %p240, %p241
      %s243 = ssub.s32 %s20, %s27
      %p244 = scmp.eq.s32.totalorder %s243, 0
      %s246 = sadd.s32 %s245, 1
      %s247 = scalar_select %p244, %s245, %s246
      %p250 = pneg %p244
      %p251 = scmp.eq.s32.totalorder %s20, 1
      %p252 = por %p250, %p251
      %p253 = scmp.ne.s32.totalorder %s245, %s248
      %p254 = scmp.eq.s32.totalorder %s20, 0
      %p255 = por %p253, %p254
      %p256 = scmp.ne.s32.totalorder %s245, %s248
      %p257 = scmp.eq.s32.totalorder %s25, 1
      %p258 = por %p256, %p257
      %p259 = scmp.ne.s32.totalorder %s248, %s249
      %p260 = scmp.eq.s32.totalorder %s25, 0
      %p261 = por %p259, %p260
      %p262 = scmp.ne.s32.totalorder %s248, %s249
      %p263 = scmp.eq.s32.totalorder %s26, 1
      %p264 = por %p262, %p263
      %p266 = scmp.ne.s32.totalorder %s249, %s265
      %p267 = scmp.eq.s32.totalorder %s26, 0
      %p268 = por %p266, %p267
      %p269 = scmp.le.s32.totalorder 1, %s20
      %p270 = scmp.lt.s32.totalorder %s20, 3
      %p271 = pnand %p269, %p270
      %p272 = pneg %p271
      // Predicated region
      $region9: #{tpu_custom_call.1} parent=5 // pred_check
        _
      $region10: #{tpu_custom_call.1} parent=5 // pred_check_branch
        %274 = sbr.rel (%p271) target = $region12
      $region11: #{tpu_custom_call.1} parent=5 // pred_region
        %s275 = ssub.s32 %s20, 1
        // Predicated region
        $region13: #{tpu_custom_call.1} parent=11 // pred_check
          %p276 = pneg %p67
        $region14: #{tpu_custom_call.1} parent=11 // pred_check_branch
          %278 = sbr.rel (%p276) target = $region16
        $region15: #{tpu_custom_call.1} parent=11 // pred_region
          _
        $region16: #{tpu_custom_call.1} parent=11 // pred_fallthru
          _
        // Predicated region
        $region17: #{tpu_custom_call.1} parent=11 // pred_check
          %p279 = pneg %p88
        $region18: #{tpu_custom_call.1} parent=11 // pred_check_branch
          %281 = sbr.rel (%p279) target = $region20
        $region19: #{tpu_custom_call.1} parent=11 // pred_region
          _
        $region20: #{tpu_custom_call.1} parent=11 // pred_fallthru
          _
        // Predicated region
        $region21: #{tpu_custom_call.1} parent=11 // pred_check
          %p282 = pneg %p109
        $region22: #{tpu_custom_call.1} parent=11 // pred_check_branch
          %284 = sbr.rel (%p282) target = $region24
        $region23: #{tpu_custom_call.1} parent=11 // pred_region
          _
        $region24: #{tpu_custom_call.1} parent=11 // pred_fallthru
          _
        // Predicated region
        $region25: #{tpu_custom_call.1} parent=11 // pred_check
          %p285 = pneg %p130
        $region26: #{tpu_custom_call.1} parent=11 // pred_check_branch
          %287 = sbr.rel (%p285) target = $region28
        $region27: #{tpu_custom_call.1} parent=11 // pred_region
          %s289 = ssub.s32 9216, 9216
          %290 = vsyncadd [#allocation4], %s289
          %s291 = sshll.u32 [#allocation3], 4
          %s292 = int_to_ptr.vmem [resolvable:$true] %s291
          %297 = dma.hbm_to_vmem [thread:$0]  %s4, 9216, %s292, [#allocation4], 64, 64, 4
        $region28: #{tpu_custom_call.1} parent=11 // pred_fallthru
          _
        // Predicated region
        $region29: #{tpu_custom_call.1} parent=11 // pred_check
          %p298 = pneg %p151
        $region30: #{tpu_custom_call.1} parent=11 // pred_check_branch
          %300 = sbr.rel (%p298) target = $region32
        $region31: #{tpu_custom_call.1} parent=11 // pred_region
          _
        $region32: #{tpu_custom_call.1} parent=11 // pred_fallthru
          _
        // Predicated region
        $region33: #{tpu_custom_call.1} parent=11 // pred_check
          %p301 = pneg %p172
        $region34: #{tpu_custom_call.1} parent=11 // pred_check_branch
          %303 = sbr.rel (%p301) target = $region36
        $region35: #{tpu_custom_call.1} parent=11 // pred_region
          _
        $region36: #{tpu_custom_call.1} parent=11 // pred_fallthru
          _
        // Predicated region
        $region37: #{tpu_custom_call.1} parent=11 // pred_check
          %p304 = pneg %p193
        $region38: #{tpu_custom_call.1} parent=11 // pred_check_branch
          %306 = sbr.rel (%p304) target = $region40
        $region39: #{tpu_custom_call.1} parent=11 // pred_region
          _
        $region40: #{tpu_custom_call.1} parent=11 // pred_fallthru
          _
        // Predicated region
        $region41: #{tpu_custom_call.1} parent=11 // pred_check
          %p307 = pneg %p214
        $region42: #{tpu_custom_call.1} parent=11 // pred_check_branch
          %309 = sbr.rel (%p307) target = $region44
        $region43: #{tpu_custom_call.1} parent=11 // pred_region
          _
        $region44: #{tpu_custom_call.1} parent=11 // pred_fallthru
          _
        // Predicated region
        $region45: #{tpu_custom_call.1} parent=11 // pred_check
          %p310 = pneg %p235
        $region46: #{tpu_custom_call.1} parent=11 // pred_check_branch
          %312 = sbr.rel (%p310) target = $region48
        $region47: #{tpu_custom_call.1} parent=11 // pred_region
          _
        $region48: #{tpu_custom_call.1} parent=11 // pred_fallthru
          _
      $region12: #{tpu_custom_call.1} parent=5 // pred_fallthru
        _
      %p313 = scmp.lt.s32.totalorder %s20, 2
      // Predicated region
      $region49: #{tpu_custom_call.1} parent=5 // pred_check
        %p314 = pneg %p313
      $region50: #{tpu_custom_call.1} parent=5 // pred_check_branch
        %316 = sbr.rel (%p314) target = $region52
      $region51: #{tpu_custom_call.1} parent=5 // pred_region
        // Predicated region
        $region53: #{tpu_custom_call.1} parent=51 // pred_check
          %p317 = pneg %p40
        $region54: #{tpu_custom_call.1} parent=51 // pred_check_branch
          %319 = sbr.rel (%p317) target = $region56
        $region55: #{tpu_custom_call.1} parent=51 // pred_region
          %p320 = scmp.lt.s32.totalorder %s20, 1
          %s321 = scalar_select %p320, %s20, 1
          %s322 = smul.addr %s321, 54
          %s323 = smul.addr %s322, 4
          %s324 = scalar_lea.vmem %s0, %s323
        $region56: #{tpu_custom_call.1} parent=51 // pred_fallthru
          _
      $region52: #{tpu_custom_call.1} parent=5 // pred_fallthru
        _
      %p325 = scmp.le.s32.totalorder 1, %s20
      %p326 = scmp.lt.s32.totalorder %s20, 3
      %p327 = pnand %p325, %p326
      %p328 = pneg %p327
      // Predicated region
      $region57: #{tpu_custom_call.1} parent=5 // pred_check
        _
      $region58: #{tpu_custom_call.1} parent=5 // pred_check_branch
        %330 = sbr.rel (%p327) target = $region60
      $region59: #{tpu_custom_call.1} parent=5 // pred_region
        %s331 = ssub.s32 %s20, 1
        // Predicated region
        $region61: #{tpu_custom_call.1} parent=59 // pred_check
          %p332 = pneg %p130
        $region62: #{tpu_custom_call.1} parent=59 // pred_check_branch
          %334 = sbr.rel (%p332) target = $region64
        $region63: #{tpu_custom_call.1} parent=59 // pred_region
          %335 = dma.done [#allocation4], 9216
        $region64: #{tpu_custom_call.1} parent=59 // pred_fallthru
          _
        %p336 = scmp.lt.s32.totalorder %s25, 1
        %s337 = scalar_select %p336, %s25, 1
        %s338 = smul.addr %s337, 54
        %s339 = smul.addr %s338, 4
        %s340 = scalar_lea.vmem %s0, %s339
        %p341 = pneg %p46
        %p342 = pneg %p43
        %p343 = pneg %p67
        %p344 = pneg %p64
        %p345 = pneg %p88
        %p346 = pneg %p85
        %p347 = pneg %p109
        %p348 = pneg %p106
        %p349 = pneg %p130
        %p350 = pneg %p127
        %p351 = pneg %p151
        %p352 = pneg %p148
        %p353 = pneg %p172
        %p354 = pneg %p169
        %p355 = pneg %p193
        %p356 = pneg %p190
        %p357 = pneg %p214
        %p358 = pneg %p211
        %p359 = pneg %p235
        %p360 = pneg %p232
        %p361 = pneg %p261
        %p362 = pneg %p258
        %s363 = sand.u32 %s248, 1
        %s364 = scalar_lea.sflag [#allocation5], %s363
        %s365 = sand.u32 %s248, 1
        %s366 = smul.addr %s365, 256
        %s367 = scalar_lea.vmem [#allocation6], %s366
        %p368 = scmp.lt.s32.totalorder %s25, 1
        %s369 = scalar_select %p368, %s25, 1
        %s370 = smul.addr %s369, 54
        %s371 = smul.addr %s370, 4
        %s372 = scalar_lea.vmem %s0, %s371
        %374 = vst [vmem:[#allocation2] sm:$0xff] 0.0
        %375 = vst [vmem:[#allocation2 + $0x8] sm:$0xff] 0.0
        %376 = vst [vmem:[#allocation2 + $0x10] sm:$0x3] 0.0
        %s377 = scalar_lea.vmem [#allocation2], 408
        %378 = vst [vmem:[%s377] sm:$0xff] 0.0
        %379 = vst [vmem:[%s377 + $0x8] sm:$0xff] 0.0
        %380 = vst [vmem:[%s377 + $0x10] sm:$0x3] 0.0
        %s381 = scalar_lea.vmem [#allocation2], 24
        %382 = vst [vmem:[%s381] sm:$0x1] 0.0
        %383 = vst [vmem:[%s381 + $0x18] sm:$0x1] 0.0
        %384 = vst [vmem:[%s381 + $0x30] sm:$0x1] 0.0
        %385 = vst [vmem:[%s381 + $0x48] sm:$0x1] 0.0
        %386 = vst [vmem:[%s381 + $0x60] sm:$0x1] 0.0
        %387 = vst [vmem:[%s381 + $0x78] sm:$0x1] 0.0
        %388 = vst [vmem:[%s381 + $0x90] sm:$0x1] 0.0
        %389 = vst [vmem:[%s381 + $0xa8] sm:$0x1] 0.0
        %390 = vst [vmem:[%s381 + $0xc0] sm:$0x1] 0.0
        %391 = vst [vmem:[%s381 + $0xd8] sm:$0x1] 0.0
        %392 = vst [vmem:[%s381 + $0xf0] sm:$0x1] 0.0
        %393 = vst [vmem:[%s381 + $0x108] sm:$0x1] 0.0
        %394 = vst [vmem:[%s381 + $0x120] sm:$0x1] 0.0
        %395 = vst [vmem:[%s381 + $0x138] sm:$0x1] 0.0
        %396 = vst [vmem:[%s381 + $0x150] sm:$0x1] 0.0
        %397 = vst [vmem:[%s381 + $0x168] sm:$0x1] 0.0
        %398 = vst [vmem:[%s381 + $0x11] sm:$0x1] 0.0
        %399 = vst [vmem:[%s381 + $0x29] sm:$0x1] 0.0
        %400 = vst [vmem:[%s381 + $0x41] sm:$0x1] 0.0
        %401 = vst [vmem:[%s381 + $0x59] sm:$0x1] 0.0
        %402 = vst [vmem:[%s381 + $0x71] sm:$0x1] 0.0
        %403 = vst [vmem:[%s381 + $0x89] sm:$0x1] 0.0
        %404 = vst [vmem:[%s381 + $0xa1] sm:$0x1] 0.0
        %405 = vst [vmem:[%s381 + $0xb9] sm:$0x1] 0.0
        %406 = vst [vmem:[%s381 + $0xd1] sm:$0x1] 0.0
        %407 = vst [vmem:[%s381 + $0xe9] sm:$0x1] 0.0
        %408 = vst [vmem:[%s381 + $0x101] sm:$0x1] 0.0
        %409 = vst [vmem:[%s381 + $0x119] sm:$0x1] 0.0
        %410 = vst [vmem:[%s381 + $0x131] sm:$0x1] 0.0
        %411 = vst [vmem:[%s381 + $0x149] sm:$0x1] 0.0
        %412 = vst [vmem:[%s381 + $0x161] sm:$0x1] 0.0
        %413 = vst [vmem:[%s381 + $0x179] sm:$0x1] 0.0
        %v414 = vld [vmem:[%s372] sm:$0xf]
        %v415 = vld [vmem:[%s372 + $0x4] sm:$0xf]
        %v416 = vld [vmem:[%s372 + $0x8] sm:$0x1]
        %v417 = vld [vmem:[%s372 + $0xc] sm:$0xf]
        %v418 = vld [vmem:[%s372 + $0x10] sm:$0xf]
        %v419 = vld [vmem:[%s372 + $0x14] sm:$0x1]
        %v420 = vld [vmem:[%s372 + $0x18] sm:$0xf]
        %v421 = vld [vmem:[%s372 + $0x1c] sm:$0xf]
        %v422 = vld [vmem:[%s372 + $0x20] sm:$0x1]
        %v423 = vld [vmem:[%s372 + $0x24] sm:$0xf]
        %v424 = vld [vmem:[%s372 + $0x28] sm:$0xf]
        %v425 = vld [vmem:[%s372 + $0x2c] sm:$0x1]
        %v426 = vld [vmem:[%s372 + $0x30] sm:$0xf]
        %v427 = vld [vmem:[%s372 + $0x34] sm:$0xf]
        %v428 = vld [vmem:[%s372 + $0x38] sm:$0x1]
        %v429 = vld [vmem:[%s372 + $0x3c] sm:$0xf]
        %v430 = vld [vmem:[%s372 + $0x40] sm:$0xf]
        %v431 = vld [vmem:[%s372 + $0x44] sm:$0x1]
        %v432 = vld [vmem:[%s372 + $0x48] sm:$0xf]
        %v433 = vld [vmem:[%s372 + $0x4c] sm:$0xf]
        %v434 = vld [vmem:[%s372 + $0x50] sm:$0x1]
        %v435 = vld [vmem:[%s372 + $0x54] sm:$0xf]
        %v436 = vld [vmem:[%s372 + $0x58] sm:$0xf]
        %v437 = vld [vmem:[%s372 + $0x5c] sm:$0x1]
        %v438 = vld [vmem:[%s372 + $0x60] sm:$0xf]
        %v439 = vld [vmem:[%s372 + $0x64] sm:$0xf]
        %v440 = vld [vmem:[%s372 + $0x68] sm:$0x1]
        %v441 = vld [vmem:[%s372 + $0x6c] sm:$0xf]
        %v442 = vld [vmem:[%s372 + $0x70] sm:$0xf]
        %v443 = vld [vmem:[%s372 + $0x74] sm:$0x1]
        %v444 = vld [vmem:[%s372 + $0x78] sm:$0xf]
        %v445 = vld [vmem:[%s372 + $0x7c] sm:$0xf]
        %v446 = vld [vmem:[%s372 + $0x80] sm:$0x1]
        %v447 = vld [vmem:[%s372 + $0x84] sm:$0xf]
        %v448 = vld [vmem:[%s372 + $0x88] sm:$0xf]
        %v449 = vld [vmem:[%s372 + $0x8c] sm:$0x1]
        %v450 = vld [vmem:[%s372 + $0x90] sm:$0xf]
        %v451 = vld [vmem:[%s372 + $0x94] sm:$0xf]
        %v452 = vld [vmem:[%s372 + $0x98] sm:$0x1]
        %v453 = vld [vmem:[%s372 + $0x9c] sm:$0xf]
        %v454 = vld [vmem:[%s372 + $0xa0] sm:$0xf]
        %v455 = vld [vmem:[%s372 + $0xa4] sm:$0x1]
        %v456 = vld [vmem:[%s372 + $0xa8] sm:$0xf]
        %v457 = vld [vmem:[%s372 + $0xac] sm:$0xf]
        %v458 = vld [vmem:[%s372 + $0xb0] sm:$0x1]
        %v459 = vld [vmem:[%s372 + $0xb4] sm:$0xf]
        %v460 = vld [vmem:[%s372 + $0xb8] sm:$0xf]
        %v461 = vld [vmem:[%s372 + $0xbc] sm:$0x1]
        %v462 = vld [vmem:[%s372 + $0xc0] sm:$0xf]
        %v463 = vld [vmem:[%s372 + $0xc4] sm:$0xf]
        %v464 = vld [vmem:[%s372 + $0xc8] sm:$0x1]
        %v465 = vld [vmem:[%s372 + $0xcc] sm:$0xf]
        %v466 = vld [vmem:[%s372 + $0xd0] sm:$0xf]
        %v467 = vld [vmem:[%s372 + $0xd4] sm:$0x1]
        %v500 = vunpack.c.l.b16 %v414
        %v501 = vunpack.c.l.b16 %v415
        %v502 = vunpack.c.l.b16 %v417
        %v503 = vunpack.c.l.b16 %v418
        %v504 = vunpack.c.l.b16 %v420
        %v505 = vunpack.c.l.b16 %v421
        %v506 = vunpack.c.l.b16 %v423
        %v507 = vunpack.c.l.b16 %v424
        %v508 = vunpack.c.l.b16 %v426
        %v509 = vunpack.c.l.b16 %v427
        %v510 = vunpack.c.l.b16 %v429
        %v511 = vunpack.c.l.b16 %v430
        %v512 = vunpack.c.l.b16 %v432
        %v513 = vunpack.c.l.b16 %v433
        %v514 = vunpack.c.l.b16 %v435
        %v515 = vunpack.c.l.b16 %v436
        %v516 = vunpack.c.l.b16 %v438
        %v517 = vunpack.c.l.b16 %v439
        %v518 = vunpack.c.l.b16 %v441
        %v519 = vunpack.c.l.b16 %v442
        %v520 = vunpack.c.l.b16 %v444
        %v521 = vunpack.c.l.b16 %v445
        %v522 = vunpack.c.l.b16 %v447
        %v523 = vunpack.c.l.b16 %v448
        %v524 = vunpack.c.l.b16 %v450
        %v525 = vunpack.c.l.b16 %v451
        %v526 = vunpack.c.l.b16 %v453
        %v527 = vunpack.c.l.b16 %v454
        %v528 = vunpack.c.l.b16 %v456
        %v529 = vunpack.c.l.b16 %v457
        %v530 = vunpack.c.l.b16 %v459
        %v531 = vunpack.c.l.b16 %v460
        %v532 = vpack.c.b16 %v501, %v500
        %v533 = vpack.c.b16 %v503, %v502
        %v534 = vpack.c.b16 %v505, %v504
        %v535 = vpack.c.b16 %v507, %v506
        %v536 = vpack.c.b16 %v509, %v508
        %v537 = vpack.c.b16 %v511, %v510
        %v538 = vpack.c.b16 %v513, %v512
        %v539 = vpack.c.b16 %v515, %v514
        %v540 = vpack.c.b16 %v517, %v516
        %v541 = vpack.c.b16 %v519, %v518
        %v542 = vpack.c.b16 %v521, %v520
        %v543 = vpack.c.b16 %v523, %v522
        %v544 = vpack.c.b16 %v525, %v524
        %v545 = vpack.c.b16 %v527, %v526
        %v546 = vpack.c.b16 %v529, %v528
        %v547 = vpack.c.b16 %v531, %v530
        %v580 = vunpack.c.l.b16 %v416
        %v581 = vunpack.c.l.b16 %v419
        %v582 = vunpack.c.l.b16 %v422
        %v583 = vunpack.c.l.b16 %v425
        %v584 = vunpack.c.l.b16 %v428
        %v585 = vunpack.c.l.b16 %v431
        %v586 = vunpack.c.l.b16 %v434
        %v587 = vunpack.c.l.b16 %v437
        %v588 = vunpack.c.l.b16 %v440
        %v589 = vunpack.c.l.b16 %v443
        %v590 = vunpack.c.l.b16 %v446
        %v591 = vunpack.c.l.b16 %v449
        %v592 = vunpack.c.l.b16 %v452
        %v593 = vunpack.c.l.b16 %v455
        %v594 = vunpack.c.l.b16 %v458
        %v595 = vunpack.c.l.b16 %v461
        %v596 = vpack.c.b16 %v580, %v580
        %v597 = vpack.c.b16 %v581, %v581
        %v598 = vpack.c.b16 %v582, %v582
        %v599 = vpack.c.b16 %v583, %v583
        %v600 = vpack.c.b16 %v584, %v584
        %v601 = vpack.c.b16 %v585, %v585
        %v602 = vpack.c.b16 %v586, %v586
        %v603 = vpack.c.b16 %v587, %v587
        %v604 = vpack.c.b16 %v588, %v588
        %v605 = vpack.c.b16 %v589, %v589
        %v606 = vpack.c.b16 %v590, %v590
        %v607 = vpack.c.b16 %v591, %v591
        %v608 = vpack.c.b16 %v592, %v592
        %v609 = vpack.c.b16 %v593, %v593
        %v610 = vpack.c.b16 %v594, %v594
        %v611 = vpack.c.b16 %v595, %v595
        %vm612 = vsmask.f32 7424
        %v614 = vshrl.u32 %v532, 16
        %v616 = vshll.u32 %v532, 16
        %v618 = vrot.slane %v616, 1
        %v619 = vor.u32 %v614, %v618
        %v621 = vshll.u32 %v596, 16
        %v623 = vrot.slane %v621, 1
        %v624 = vsel %vm612, %v619, %v623
        %v626 = vshrl.u32 %v533, 16
        %v628 = vshll.u32 %v533, 16
        %v630 = vrot.slane %v628, 1
        %v631 = vor.u32 %v626, %v630
        %v633 = vshll.u32 %v597, 16
        %v635 = vrot.slane %v633, 1
        %v636 = vsel %vm612, %v631, %v635
        %v638 = vshrl.u32 %v534, 16
        %v640 = vshll.u32 %v534, 16
        %v642 = vrot.slane %v640, 1
        %v643 = vor.u32 %v638, %v642
        %v645 = vshll.u32 %v598, 16
        %v647 = vrot.slane %v645, 1
        %v648 = vsel %vm612, %v643, %v647
        %v650 = vshrl.u32 %v535, 16
        %v652 = vshll.u32 %v535, 16
        %v654 = vrot.slane %v652, 1
        %v655 = vor.u32 %v650, %v654
        %v657 = vshll.u32 %v599, 16
        %v659 = vrot.slane %v657, 1
        %v660 = vsel %vm612, %v655, %v659
        %v662 = vshrl.u32 %v536, 16
        %v664 = vshll.u32 %v536, 16
        %v666 = vrot.slane %v664, 1
        %v667 = vor.u32 %v662, %v666
        %v669 = vshll.u32 %v600, 16
        %v671 = vrot.slane %v669, 1
        %v672 = vsel %vm612, %v667, %v671
        %v674 = vshrl.u32 %v537, 16
        %v676 = vshll.u32 %v537, 16
        %v678 = vrot.slane %v676, 1
        %v679 = vor.u32 %v674, %v678
        %v681 = vshll.u32 %v601, 16
        %v683 = vrot.slane %v681, 1
        %v684 = vsel %vm612, %v679, %v683
        %v686 = vshrl.u32 %v538, 16
        %v688 = vshll.u32 %v538, 16
        %v690 = vrot.slane %v688, 1
        %v691 = vor.u32 %v686, %v690
        %v693 = vshll.u32 %v602, 16
        %v695 = vrot.slane %v693, 1
        %v696 = vsel %vm612, %v691, %v695
        %v698 = vshrl.u32 %v539, 16
        %v700 = vshll.u32 %v539, 16
        %v702 = vrot.slane %v700, 1
        %v703 = vor.u32 %v698, %v702
        %v705 = vshll.u32 %v603, 16
        %v707 = vrot.slane %v705, 1
        %v708 = vsel %vm612, %v703, %v707
        %v710 = vshrl.u32 %v540, 16
        %v712 = vshll.u32 %v540, 16
        %v714 = vrot.slane %v712, 1
        %v715 = vor.u32 %v710, %v714
        %v717 = vshll.u32 %v604, 16
        %v719 = vrot.slane %v717, 1
        %v720 = vsel %vm612, %v715, %v719
        %v722 = vshrl.u32 %v541, 16
        %v724 = vshll.u32 %v541, 16
        %v726 = vrot.slane %v724, 1
        %v727 = vor.u32 %v722, %v726
        %v729 = vshll.u32 %v605, 16
        %v731 = vrot.slane %v729, 1
        %v732 = vsel %vm612, %v727, %v731
        %v734 = vshrl.u32 %v542, 16
        %v736 = vshll.u32 %v542, 16
        %v738 = vrot.slane %v736, 1
        %v739 = vor.u32 %v734, %v738
        %v741 = vshll.u32 %v606, 16
        %v743 = vrot.slane %v741, 1
        %v744 = vsel %vm612, %v739, %v743
        %v746 = vshrl.u32 %v543, 16
        %v748 = vshll.u32 %v543, 16
        %v750 = vrot.slane %v748, 1
        %v751 = vor.u32 %v746, %v750
        %v753 = vshll.u32 %v607, 16
        %v755 = vrot.slane %v753, 1
        %v756 = vsel %vm612, %v751, %v755
        %v758 = vshrl.u32 %v544, 16
        %v760 = vshll.u32 %v544, 16
        %v762 = vrot.slane %v760, 1
        %v763 = vor.u32 %v758, %v762
        %v765 = vshll.u32 %v608, 16
        %v767 = vrot.slane %v765, 1
        %v768 = vsel %vm612, %v763, %v767
        %v770 = vshrl.u32 %v545, 16
        %v772 = vshll.u32 %v545, 16
        %v774 = vrot.slane %v772, 1
        %v775 = vor.u32 %v770, %v774
        %v777 = vshll.u32 %v609, 16
        %v779 = vrot.slane %v777, 1
        %v780 = vsel %vm612, %v775, %v779
        %v782 = vshrl.u32 %v546, 16
        %v784 = vshll.u32 %v546, 16
        %v786 = vrot.slane %v784, 1
        %v787 = vor.u32 %v782, %v786
        %v789 = vshll.u32 %v610, 16
        %v791 = vrot.slane %v789, 1
        %v792 = vsel %vm612, %v787, %v791
        %v794 = vshrl.u32 %v547, 16
        %v796 = vshll.u32 %v547, 16
        %v798 = vrot.slane %v796, 1
        %v799 = vor.u32 %v794, %v798
        %v801 = vshll.u32 %v611, 16
        %v803 = vrot.slane %v801, 1
        %v804 = vsel %vm612, %v799, %v803
        %vm821 = vcmask 1046528
        %v822 = vrot.slane %v532, 1
        %v823 = vrot.slane %v596, 1
        %v824 = vsel %vm821, %v822, %v823
        %v825 = vrot.slane %v533, 1
        %v826 = vrot.slane %v597, 1
        %v827 = vsel %vm821, %v825, %v826
        %v828 = vrot.slane %v534, 1
        %v829 = vrot.slane %v598, 1
        %v830 = vsel %vm821, %v828, %v829
        %v831 = vrot.slane %v535, 1
        %v832 = vrot.slane %v599, 1
        %v833 = vsel %vm821, %v831, %v832
        %v834 = vrot.slane %v536, 1
        %v835 = vrot.slane %v600, 1
        %v836 = vsel %vm821, %v834, %v835
        %v837 = vrot.slane %v537, 1
        %v838 = vrot.slane %v601, 1
        %v839 = vsel %vm821, %v837, %v838
        %v840 = vrot.slane %v538, 1
        %v841 = vrot.slane %v602, 1
        %v842 = vsel %vm821, %v840, %v841
        %v843 = vrot.slane %v539, 1
        %v844 = vrot.slane %v603, 1
        %v845 = vsel %vm821, %v843, %v844
        %v846 = vrot.slane %v540, 1
        %v847 = vrot.slane %v604, 1
        %v848 = vsel %vm821, %v846, %v847
        %v849 = vrot.slane %v541, 1
        %v850 = vrot.slane %v605, 1
        %v851 = vsel %vm821, %v849, %v850
        %v852 = vrot.slane %v542, 1
        %v853 = vrot.slane %v606, 1
        %v854 = vsel %vm821, %v852, %v853
        %v855 = vrot.slane %v543, 1
        %v856 = vrot.slane %v607, 1
        %v857 = vsel %vm821, %v855, %v856
        %v858 = vrot.slane %v544, 1
        %v859 = vrot.slane %v608, 1
        %v860 = vsel %vm821, %v858, %v859
        %v861 = vrot.slane %v545, 1
        %v862 = vrot.slane %v609, 1
        %v863 = vsel %vm821, %v861, %v862
        %v864 = vrot.slane %v546, 1
        %v865 = vrot.slane %v610, 1
        %v866 = vsel %vm821, %v864, %v865
        %v867 = vrot.slane %v547, 1
        %v868 = vrot.slane %v611, 1
        %v869 = vsel %vm821, %v867, %v868
        %v888 = vunpack.c.l.b16 %v462
        %v889 = vunpack.c.l.b16 %v463
        %v890 = vpack.c.b16 %v889, %v888
        %v893 = vunpack.c.l.b16 %v464
        %v894 = vpack.c.b16 %v893, %v893
        %v896 = vshrl.u32 %v890, 16
        %v898 = vshll.u32 %v890, 16
        %v900 = vrot.slane %v898, 1
        %v901 = vor.u32 %v896, %v900
        %v903 = vshll.u32 %v894, 16
        %v905 = vrot.slane %v903, 1
        %v906 = vsel %vm612, %v901, %v905
        %v908 = vrot.slane %v890, 1
        %v909 = vrot.slane %v894, 1
        %v910 = vsel %vm821, %v908, %v909
        %v914 = vunpack.c.l.b16 %v465
        %v915 = vunpack.c.l.b16 %v466
        %v916 = vpack.c.b16 %v915, %v914
        %v919 = vunpack.c.l.b16 %v467
        %v920 = vpack.c.b16 %v919, %v919
        %v922 = vshrl.u32 %v916, 16
        %v924 = vshll.u32 %v916, 16
        %v926 = vrot.slane %v924, 1
        %v927 = vor.u32 %v922, %v926
        %v929 = vshll.u32 %v920, 16
        %v931 = vrot.slane %v929, 1
        %v932 = vsel %vm612, %v927, %v931
        %v934 = vrot.slane %v916, 1
        %v935 = vrot.slane %v920, 1
        %v936 = vsel %vm821, %v934, %v935
        %v938 = vld [vmem:[%s1] sm:$0xf]
        %v939 = vld [vmem:[%s1 + $0x4] sm:$0xf]
        %v940 = vld [vmem:[%s1 + $0x8] sm:$0xf]
        %v941 = vld [vmem:[%s1 + $0xc] sm:$0xf]
        %v942 = vld [vmem:[%s1 + $0x10] sm:$0xf]
        %v943 = vld [vmem:[%s1 + $0x14] sm:$0xf]
        %v944 = vld [vmem:[%s1 + $0x18] sm:$0xf]
        %v945 = vld [vmem:[%s1 + $0x1c] sm:$0xf]
        %v946 = vld [vmem:[%s1 + $0x20] sm:$0xf]
        %v947 = vld [vmem:[%s1 + $0x24] sm:$0xf]
        %v948 = vld [vmem:[%s1 + $0x28] sm:$0xf]
        %v949 = vld [vmem:[%s1 + $0x2c] sm:$0xf]
        %v950 = vld [vmem:[%s1 + $0x30] sm:$0xf]
        %v951 = vld [vmem:[%s1 + $0x34] sm:$0xf]
        %v952 = vld [vmem:[%s1 + $0x38] sm:$0xf]
        %v953 = vld [vmem:[%s1 + $0x3c] sm:$0xf]
        %v954 = vld [vmem:[%s1 + $0x40] sm:$0xf]
        %v955 = vld [vmem:[%s1 + $0x44] sm:$0xf]
        %v956 = vld [vmem:[%s1 + $0x48] sm:$0xf]
        %v957 = vld [vmem:[%s1 + $0x4c] sm:$0xf]
        %v958 = vld [vmem:[%s1 + $0x50] sm:$0xf]
        %v959 = vld [vmem:[%s1 + $0x54] sm:$0xf]
        %v960 = vld [vmem:[%s1 + $0x58] sm:$0xf]
        %v961 = vld [vmem:[%s1 + $0x5c] sm:$0xf]
        %v962 = vld [vmem:[%s1 + $0x60] sm:$0xf]
        %v963 = vld [vmem:[%s1 + $0x64] sm:$0xf]
        %v964 = vld [vmem:[%s1 + $0x68] sm:$0xf]
        %v965 = vld [vmem:[%s1 + $0x6c] sm:$0xf]
        %v966 = vld [vmem:[%s1 + $0x70] sm:$0xf]
        %v967 = vld [vmem:[%s1 + $0x74] sm:$0xf]
        %v968 = vld [vmem:[%s1 + $0x78] sm:$0xf]
        %v969 = vld [vmem:[%s1 + $0x7c] sm:$0xf]
        %v970 = vld [vmem:[%s1 + $0x80] sm:$0xf]
        %v971 = vld [vmem:[%s1 + $0x84] sm:$0xf]
        %v972 = vld [vmem:[%s1 + $0x88] sm:$0xf]
        %v973 = vld [vmem:[%s1 + $0x8c] sm:$0xf]
        %v974 = vld [vmem:[%s1 + $0x90] sm:$0xf]
        %v975 = vld [vmem:[%s1 + $0x94] sm:$0xf]
        %v976 = vld [vmem:[%s1 + $0x98] sm:$0xf]
        %v977 = vld [vmem:[%s1 + $0x9c] sm:$0xf]
        %v978 = vld [vmem:[%s1 + $0xa0] sm:$0xf]
        %v979 = vld [vmem:[%s1 + $0xa4] sm:$0xf]
        %v980 = vld [vmem:[%s1 + $0xa8] sm:$0xf]
        %v981 = vld [vmem:[%s1 + $0xac] sm:$0xf]
        %v982 = vld [vmem:[%s1 + $0xb0] sm:$0xf]
        %v983 = vld [vmem:[%s1 + $0xb4] sm:$0xf]
        %v984 = vld [vmem:[%s1 + $0xb8] sm:$0xf]
        %v985 = vld [vmem:[%s1 + $0xbc] sm:$0xf]
        %v986 = vld [vmem:[%s1 + $0xc0] sm:$0xf]
        %v987 = vld [vmem:[%s1 + $0xc4] sm:$0xf]
        %v988 = vld [vmem:[%s1 + $0xc8] sm:$0xf]
        %v989 = vld [vmem:[%s1 + $0xcc] sm:$0xf]
        %v990 = vld [vmem:[%s1 + $0xd0] sm:$0xf]
        %v991 = vld [vmem:[%s1 + $0xd4] sm:$0xf]
        %v992 = vld [vmem:[%s1 + $0xd8] sm:$0xf]
        %v993 = vld [vmem:[%s1 + $0xdc] sm:$0xf]
        %v994 = vld [vmem:[%s1 + $0xe0] sm:$0xf]
        %v995 = vld [vmem:[%s1 + $0xe4] sm:$0xf]
        %v996 = vld [vmem:[%s1 + $0xe8] sm:$0xf]
        %v997 = vld [vmem:[%s1 + $0xec] sm:$0xf]
        %v998 = vld [vmem:[%s1 + $0xf0] sm:$0xf]
        %v999 = vld [vmem:[%s1 + $0xf4] sm:$0xf]
        %v1000 = vld [vmem:[%s1 + $0xf8] sm:$0xf]
        %v1001 = vld [vmem:[%s1 + $0xfc] sm:$0xf]
        %v1002 = vld [vmem:[%s1 + $0x100] sm:$0xf]
        %v1003 = vld [vmem:[%s1 + $0x104] sm:$0xf]
        %v1004 = vld [vmem:[%s1 + $0x108] sm:$0xf]
        %v1005 = vld [vmem:[%s1 + $0x10c] sm:$0xf]
        %v1006 = vld [vmem:[%s1 + $0x110] sm:$0xf]
        %v1007 = vld [vmem:[%s1 + $0x114] sm:$0xf]
        %v1008 = vld [vmem:[%s1 + $0x118] sm:$0xf]
        %v1009 = vld [vmem:[%s1 + $0x11c] sm:$0xf]
        %v1010 = vld [vmem:[%s1 + $0x120] sm:$0xf]
        %v1011 = vld [vmem:[%s1 + $0x124] sm:$0xf]
        %v1012 = vld [vmem:[%s1 + $0x128] sm:$0xf]
        %v1013 = vld [vmem:[%s1 + $0x12c] sm:$0xf]
        %v1014 = vld [vmem:[%s1 + $0x130] sm:$0xf]
        %v1015 = vld [vmem:[%s1 + $0x134] sm:$0xf]
        %v1016 = vld [vmem:[%s1 + $0x138] sm:$0xf]
        %v1017 = vld [vmem:[%s1 + $0x13c] sm:$0xf]
        %v1018 = vld [vmem:[%s1 + $0x140] sm:$0xf]
        %v1019 = vld [vmem:[%s1 + $0x144] sm:$0xf]
        %v1020 = vld [vmem:[%s1 + $0x148] sm:$0xf]
        %v1021 = vld [vmem:[%s1 + $0x14c] sm:$0xf]
        %v1022 = vld [vmem:[%s1 + $0x150] sm:$0xf]
        %v1023 = vld [vmem:[%s1 + $0x154] sm:$0xf]
        %v1024 = vld [vmem:[%s1 + $0x158] sm:$0xf]
        %v1025 = vld [vmem:[%s1 + $0x15c] sm:$0xf]
        %v1026 = vld [vmem:[%s1 + $0x160] sm:$0xf]
        %v1027 = vld [vmem:[%s1 + $0x164] sm:$0xf]
        %v1028 = vld [vmem:[%s1 + $0x168] sm:$0xf]
        %v1029 = vld [vmem:[%s1 + $0x16c] sm:$0xf]
        %v1030 = vld [vmem:[%s1 + $0x170] sm:$0xf]
        %v1031 = vld [vmem:[%s1 + $0x174] sm:$0xf]
        %v1032 = vld [vmem:[%s1 + $0x178] sm:$0xf]
        %v1033 = vld [vmem:[%s1 + $0x17c] sm:$0xf]
        %v1034 = vld [vmem:[%s1 + $0x180] sm:$0xf]
        %v1035 = vld [vmem:[%s1 + $0x184] sm:$0xf]
        %v1036 = vld [vmem:[%s1 + $0x188] sm:$0xf]
        %v1037 = vld [vmem:[%s1 + $0x18c] sm:$0xf]
        %v1038 = vld [vmem:[%s1 + $0x190] sm:$0xf]
        %v1039 = vld [vmem:[%s1 + $0x194] sm:$0xf]
        %v1040 = vld [vmem:[%s1 + $0x198] sm:$0xf]
        %v1041 = vld [vmem:[%s1 + $0x19c] sm:$0xf]
        %v1042 = vld [vmem:[%s1 + $0x1a0] sm:$0xf]
        %v1043 = vld [vmem:[%s1 + $0x1a4] sm:$0xf]
        %v1044 = vld [vmem:[%s1 + $0x1a8] sm:$0xf]
        %v1045 = vld [vmem:[%s1 + $0x1ac] sm:$0xf]
        %v1046 = vld [vmem:[%s1 + $0x1b0] sm:$0xf]
        %v1047 = vld [vmem:[%s1 + $0x1b4] sm:$0xf]
        %v1048 = vld [vmem:[%s1 + $0x1b8] sm:$0xf]
        %v1049 = vld [vmem:[%s1 + $0x1bc] sm:$0xf]
        %v1050 = vld [vmem:[%s1 + $0x1c0] sm:$0xf]
        %v1051 = vld [vmem:[%s1 + $0x1c4] sm:$0xf]
        %v1052 = vld [vmem:[%s1 + $0x1c8] sm:$0xf]
        %v1053 = vld [vmem:[%s1 + $0x1cc] sm:$0xf]
        %v1054 = vld [vmem:[%s1 + $0x1d0] sm:$0xf]
        %v1055 = vld [vmem:[%s1 + $0x1d4] sm:$0xf]
        %v1056 = vld [vmem:[%s1 + $0x1d8] sm:$0xf]
        %v1057 = vld [vmem:[%s1 + $0x1dc] sm:$0xf]
        %v1058 = vld [vmem:[%s1 + $0x1e0] sm:$0xf]
        %v1059 = vld [vmem:[%s1 + $0x1e4] sm:$0xf]
        %v1060 = vld [vmem:[%s1 + $0x1e8] sm:$0xf]
        %v1061 = vld [vmem:[%s1 + $0x1ec] sm:$0xf]
        %v1062 = vld [vmem:[%s1 + $0x1f0] sm:$0xf]
        %v1063 = vld [vmem:[%s1 + $0x1f4] sm:$0xf]
        %v1064 = vld [vmem:[%s1 + $0x1f8] sm:$0xf]
        %v1065 = vld [vmem:[%s1 + $0x1fc] sm:$0xf]
        %v1066 = vld [vmem:[%s1 + $0x200] sm:$0xf]
        %v1067 = vld [vmem:[%s1 + $0x204] sm:$0xf]
        %v1068 = vld [vmem:[%s1 + $0x208] sm:$0xf]
        %v1069 = vld [vmem:[%s1 + $0x20c] sm:$0xf]
        %v1070 = vld [vmem:[%s1 + $0x210] sm:$0xf]
        %v1071 = vld [vmem:[%s1 + $0x214] sm:$0xf]
        %v1072 = vld [vmem:[%s1 + $0x218] sm:$0xf]
        %v1073 = vld [vmem:[%s1 + $0x21c] sm:$0xf]
        %v1074 = vld [vmem:[%s1 + $0x220] sm:$0xf]
        %v1075 = vld [vmem:[%s1 + $0x224] sm:$0xf]
        %v1076 = vld [vmem:[%s1 + $0x228] sm:$0xf]
        %v1077 = vld [vmem:[%s1 + $0x22c] sm:$0xf]
        %v1078 = vld [vmem:[%s1 + $0x230] sm:$0xf]
        %v1079 = vld [vmem:[%s1 + $0x234] sm:$0xf]
        %v1080 = vld [vmem:[%s1 + $0x238] sm:$0xf]
        %v1081 = vld [vmem:[%s1 + $0x23c] sm:$0xf]
        %v1226 = vunpack.c.l.b16 %v938
        %v1227 = vunpack.c.l.b16 %v939
        %v1228 = vunpack.c.l.b16 %v940
        %v1229 = vunpack.c.l.b16 %v941
        %v1230 = vunpack.c.l.b16 %v942
        %v1231 = vunpack.c.l.b16 %v943
        %v1232 = vunpack.c.l.b16 %v944
        %v1233 = vunpack.c.l.b16 %v945
        %v1234 = vunpack.c.l.b16 %v946
        %v1235 = vunpack.c.l.b16 %v947
        %v1236 = vunpack.c.l.b16 %v948
        %v1237 = vunpack.c.l.b16 %v949
        %v1238 = vunpack.c.l.b16 %v950
        %v1239 = vunpack.c.l.b16 %v951
        %v1240 = vunpack.c.l.b16 %v952
        %v1241 = vunpack.c.l.b16 %v953
        %v1242 = vunpack.c.l.b16 %v954
        %v1243 = vunpack.c.l.b16 %v955
        %v1244 = vunpack.c.l.b16 %v956
        %v1245 = vunpack.c.l.b16 %v957
        %v1246 = vunpack.c.l.b16 %v958
        %v1247 = vunpack.c.l.b16 %v959
        %v1248 = vunpack.c.l.b16 %v960
        %v1249 = vunpack.c.l.b16 %v961
        %v1250 = vunpack.c.l.b16 %v962
        %v1251 = vunpack.c.l.b16 %v963
        %v1252 = vunpack.c.l.b16 %v964
        %v1253 = vunpack.c.l.b16 %v965
        %v1254 = vunpack.c.l.b16 %v966
        %v1255 = vunpack.c.l.b16 %v967
        %v1256 = vunpack.c.l.b16 %v968
        %v1257 = vunpack.c.l.b16 %v969
        %v1258 = vunpack.c.l.b16 %v970
        %v1259 = vunpack.c.l.b16 %v971
        %v1260 = vunpack.c.l.b16 %v972
        %v1261 = vunpack.c.l.b16 %v973
        %v1262 = vunpack.c.l.b16 %v974
        %v1263 = vunpack.c.l.b16 %v975
        %v1264 = vunpack.c.l.b16 %v976
        %v1265 = vunpack.c.l.b16 %v977
        %v1266 = vunpack.c.l.b16 %v978
        %v1267 = vunpack.c.l.b16 %v979
        %v1268 = vunpack.c.l.b16 %v980
        %v1269 = vunpack.c.l.b16 %v981
        %v1270 = vunpack.c.l.b16 %v982
        %v1271 = vunpack.c.l.b16 %v983
        %v1272 = vunpack.c.l.b16 %v984
        %v1273 = vunpack.c.l.b16 %v985
        %v1274 = vunpack.c.l.b16 %v986
        %v1275 = vunpack.c.l.b16 %v987
        %v1276 = vunpack.c.l.b16 %v988
        %v1277 = vunpack.c.l.b16 %v989
        %v1278 = vunpack.c.l.b16 %v990
        %v1279 = vunpack.c.l.b16 %v991
        %v1280 = vunpack.c.l.b16 %v992
        %v1281 = vunpack.c.l.b16 %v993
        %v1282 = vunpack.c.l.b16 %v994
        %v1283 = vunpack.c.l.b16 %v995
        %v1284 = vunpack.c.l.b16 %v996
        %v1285 = vunpack.c.l.b16 %v997
        %v1286 = vunpack.c.l.b16 %v998
        %v1287 = vunpack.c.l.b16 %v999
        %v1288 = vunpack.c.l.b16 %v1000
        %v1289 = vunpack.c.l.b16 %v1001
        %v1290 = vunpack.c.l.b16 %v1002
        %v1291 = vunpack.c.l.b16 %v1003
        %v1292 = vunpack.c.l.b16 %v1004
        %v1293 = vunpack.c.l.b16 %v1005
        %v1294 = vunpack.c.l.b16 %v1006
        %v1295 = vunpack.c.l.b16 %v1007
        %v1296 = vunpack.c.l.b16 %v1008
        %v1297 = vunpack.c.l.b16 %v1009
        %v1298 = vunpack.c.l.b16 %v1010
        %v1299 = vunpack.c.l.b16 %v1011
        %v1300 = vunpack.c.l.b16 %v1012
        %v1301 = vunpack.c.l.b16 %v1013
        %v1302 = vunpack.c.l.b16 %v1014
        %v1303 = vunpack.c.l.b16 %v1015
        %v1304 = vunpack.c.l.b16 %v1016
        %v1305 = vunpack.c.l.b16 %v1017
        %v1306 = vunpack.c.l.b16 %v1018
        %v1307 = vunpack.c.l.b16 %v1019
        %v1308 = vunpack.c.l.b16 %v1020
        %v1309 = vunpack.c.l.b16 %v1021
        %v1310 = vunpack.c.l.b16 %v1022
        %v1311 = vunpack.c.l.b16 %v1023
        %v1312 = vunpack.c.l.b16 %v1024
        %v1313 = vunpack.c.l.b16 %v1025
        %v1314 = vunpack.c.l.b16 %v1026
        %v1315 = vunpack.c.l.b16 %v1027
        %v1316 = vunpack.c.l.b16 %v1028
        %v1317 = vunpack.c.l.b16 %v1029
        %v1318 = vunpack.c.l.b16 %v1030
        %v1319 = vunpack.c.l.b16 %v1031
        %v1320 = vunpack.c.l.b16 %v1032
        %v1321 = vunpack.c.l.b16 %v1033
        %v1322 = vunpack.c.l.b16 %v1034
        %v1323 = vunpack.c.l.b16 %v1035
        %v1324 = vunpack.c.l.b16 %v1036
        %v1325 = vunpack.c.l.b16 %v1037
        %v1326 = vunpack.c.l.b16 %v1038
        %v1327 = vunpack.c.l.b16 %v1039
        %v1328 = vunpack.c.l.b16 %v1040
        %v1329 = vunpack.c.l.b16 %v1041
        %v1330 = vunpack.c.l.b16 %v1042
        %v1331 = vunpack.c.l.b16 %v1043
        %v1332 = vunpack.c.l.b16 %v1044
        %v1333 = vunpack.c.l.b16 %v1045
        %v1334 = vunpack.c.l.b16 %v1046
        %v1335 = vunpack.c.l.b16 %v1047
        %v1336 = vunpack.c.l.b16 %v1048
        %v1337 = vunpack.c.l.b16 %v1049
        %v1338 = vunpack.c.l.b16 %v1050
        %v1339 = vunpack.c.l.b16 %v1051
        %v1340 = vunpack.c.l.b16 %v1052
        %v1341 = vunpack.c.l.b16 %v1053
        %v1342 = vunpack.c.l.b16 %v1054
        %v1343 = vunpack.c.l.b16 %v1055
        %v1344 = vunpack.c.l.b16 %v1056
        %v1345 = vunpack.c.l.b16 %v1057
        %v1346 = vunpack.c.l.b16 %v1058
        %v1347 = vunpack.c.l.b16 %v1059
        %v1348 = vunpack.c.l.b16 %v1060
        %v1349 = vunpack.c.l.b16 %v1061
        %v1350 = vunpack.c.l.b16 %v1062
        %v1351 = vunpack.c.l.b16 %v1063
        %v1352 = vunpack.c.l.b16 %v1064
        %v1353 = vunpack.c.l.b16 %v1065
        %v1354 = vunpack.c.l.b16 %v1066
        %v1355 = vunpack.c.l.b16 %v1067
        %v1356 = vunpack.c.l.b16 %v1068
        %v1357 = vunpack.c.l.b16 %v1069
        %v1358 = vunpack.c.l.b16 %v1070
        %v1359 = vunpack.c.l.b16 %v1071
        %v1360 = vunpack.c.l.b16 %v1072
        %v1361 = vunpack.c.l.b16 %v1073
        %v1362 = vunpack.c.l.b16 %v1074
        %v1363 = vunpack.c.l.b16 %v1075
        %v1364 = vunpack.c.l.b16 %v1076
        %v1365 = vunpack.c.l.b16 %v1077
        %v1366 = vunpack.c.l.b16 %v1078
        %v1367 = vunpack.c.l.b16 %v1079
        %v1368 = vunpack.c.l.b16 %v1080
        %v1369 = vunpack.c.l.b16 %v1081
        %v1370 = vpack.c.b16 %v1227, %v1226
        %v1371 = vpack.c.b16 %v1229, %v1228
        %v1372 = vpack.c.b16 %v1231, %v1230
        %v1373 = vpack.c.b16 %v1233, %v1232
        %v1374 = vpack.c.b16 %v1235, %v1234
        %v1375 = vpack.c.b16 %v1237, %v1236
        %v1376 = vpack.c.b16 %v1239, %v1238
        %v1377 = vpack.c.b16 %v1241, %v1240
        %v1378 = vpack.c.b16 %v1243, %v1242
        %v1379 = vpack.c.b16 %v1245, %v1244
        %v1380 = vpack.c.b16 %v1247, %v1246
        %v1381 = vpack.c.b16 %v1249, %v1248
        %v1382 = vpack.c.b16 %v1251, %v1250
        %v1383 = vpack.c.b16 %v1253, %v1252
        %v1384 = vpack.c.b16 %v1255, %v1254
        %v1385 = vpack.c.b16 %v1257, %v1256
        %v1386 = vpack.c.b16 %v1259, %v1258
        %v1387 = vpack.c.b16 %v1261, %v1260
        %v1388 = vpack.c.b16 %v1263, %v1262
        %v1389 = vpack.c.b16 %v1265, %v1264
        %v1390 = vpack.c.b16 %v1267, %v1266
        %v1391 = vpack.c.b16 %v1269, %v1268
        %v1392 = vpack.c.b16 %v1271, %v1270
        %v1393 = vpack.c.b16 %v1273, %v1272
        %v1394 = vpack.c.b16 %v1275, %v1274
        %v1395 = vpack.c.b16 %v1277, %v1276
        %v1396 = vpack.c.b16 %v1279, %v1278
        %v1397 = vpack.c.b16 %v1281, %v1280
        %v1398 = vpack.c.b16 %v1283, %v1282
        %v1399 = vpack.c.b16 %v1285, %v1284
        %v1400 = vpack.c.b16 %v1287, %v1286
        %v1401 = vpack.c.b16 %v1289, %v1288
        %v1402 = vpack.c.b16 %v1291, %v1290
        %v1403 = vpack.c.b16 %v1293, %v1292
        %v1404 = vpack.c.b16 %v1295, %v1294
        %v1405 = vpack.c.b16 %v1297, %v1296
        %v1406 = vpack.c.b16 %v1299, %v1298
        %v1407 = vpack.c.b16 %v1301, %v1300
        %v1408 = vpack.c.b16 %v1303, %v1302
        %v1409 = vpack.c.b16 %v1305, %v1304
        %v1410 = vpack.c.b16 %v1307, %v1306
        %v1411 = vpack.c.b16 %v1309, %v1308
        %v1412 = vpack.c.b16 %v1311, %v1310
        %v1413 = vpack.c.b16 %v1313, %v1312
        %v1414 = vpack.c.b16 %v1315, %v1314
        %v1415 = vpack.c.b16 %v1317, %v1316
        %v1416 = vpack.c.b16 %v1319, %v1318
        %v1417 = vpack.c.b16 %v1321, %v1320
        %v1418 = vpack.c.b16 %v1323, %v1322
        %v1419 = vpack.c.b16 %v1325, %v1324
        %v1420 = vpack.c.b16 %v1327, %v1326
        %v1421 = vpack.c.b16 %v1329, %v1328
        %v1422 = vpack.c.b16 %v1331, %v1330
        %v1423 = vpack.c.b16 %v1333, %v1332
        %v1424 = vpack.c.b16 %v1335, %v1334
        %v1425 = vpack.c.b16 %v1337, %v1336
        %v1426 = vpack.c.b16 %v1339, %v1338
        %v1427 = vpack.c.b16 %v1341, %v1340
        %v1428 = vpack.c.b16 %v1343, %v1342
        %v1429 = vpack.c.b16 %v1345, %v1344
        %v1430 = vpack.c.b16 %v1347, %v1346
        %v1431 = vpack.c.b16 %v1349, %v1348
        %v1432 = vpack.c.b16 %v1351, %v1350
        %v1433 = vpack.c.b16 %v1353, %v1352
        %v1434 = vpack.c.b16 %v1355, %v1354
        %v1435 = vpack.c.b16 %v1357, %v1356
        %v1436 = vpack.c.b16 %v1359, %v1358
        %v1437 = vpack.c.b16 %v1361, %v1360
        %v1438 = vpack.c.b16 %v1363, %v1362
        %v1439 = vpack.c.b16 %v1365, %v1364
        %v1440 = vpack.c.b16 %v1367, %v1366
        %v1441 = vpack.c.b16 %v1369, %v1368
        %1514 = vmatprep.subr.bf16.mxu0 0
        %1515 = vmatpush1.bf16.msra.mxu0 %v1370
        %1516 = vmatprep.subr.bf16.mxu0 0
        %1517 = vmatpush1.bf16.msra.mxu0 %v1371
        %1518 = vmatprep.subr.bf16.mxu0 0
        %1519 = vmatpush1.bf16.msra.mxu0 %v1372
        %1520 = vmatprep.subr.bf16.mxu0 0
        %1521 = vmatpush1.bf16.msra.mxu0 %v1373
        %1522 = vmatprep.subr.bf16.mxu0 0
        %1523 = vmatpush1.bf16.msra.mxu0 %v1374
        %1524 = vmatprep.subr.bf16.mxu0 0
        %1525 = vmatpush1.bf16.msra.mxu0 %v1375
        %1526 = vmatprep.subr.bf16.mxu0 0
        %1527 = vmatpush1.bf16.msra.mxu0 %v1376
        %1528 = vmatprep.subr.bf16.mxu0 0
        %1529 = vmatpush1.bf16.msra.mxu0 %v1377
        %1530 = vmatprep.subr.bf16.mxu0 0
        %1531 = vmatpush1.bf16.msra.mxu0 %v1378
        %1532 = vmatprep.subr.bf16.mxu0 0
        %1533 = vmatpush1.bf16.msra.mxu0 %v1379
        %1534 = vmatprep.subr.bf16.mxu0 0
        %1535 = vmatpush1.bf16.msra.mxu0 %v1380
        %1536 = vmatprep.subr.bf16.mxu0 0
        %1537 = vmatpush1.bf16.msra.mxu0 %v1381
        %1538 = vmatprep.subr.bf16.mxu0 0
        %1539 = vmatpush1.bf16.msra.mxu0 %v1382
        %1540 = vmatprep.subr.bf16.mxu0 0
        %1541 = vmatpush1.bf16.msra.mxu0 %v1383
        %1542 = vmatprep.subr.bf16.mxu0 0
        %1543 = vmatpush1.bf16.msra.mxu0 %v1384
        %1544 = vmatprep.subr.bf16.mxu0 0
        %1545 = vmatpush1.bf16.msra.mxu0 %v1385
        %1546 = vmatprep.mubr.bf16.mxu0 %v624
        %1547 = vmatmul.mubr.bf16.gmra.mrb[0].mxu0 %v532
        %v1548 = vpop.f32.mrb[0].mxu0
        %v1549 = vadd.f32 0.0, %v1548
        %v1550 = vpop.f32.mrb[0].mxu0
        %v1551 = vpop.f32.mrb[0].mxu0
        %v1552 = vadd.f32 0.0, %v1551
        %v1553 = vpop.f32.mrb[0].mxu0
        %1554 = vmatprep.mubr.bf16.mxu0 %v636
        %1555 = vmatmul.mubr.bf16.gmra.mrb[0].mxu0 %v533
        %v1556 = vpop.f32.mrb[0].mxu0
        %v1557 = vadd.f32 0.0, %v1556
        %v1558 = vpop.f32.mrb[0].mxu0
        %v1559 = vpop.f32.mrb[0].mxu0
        %v1560 = vadd.f32 0.0, %v1559
        %v1561 = vpop.f32.mrb[0].mxu0
        %1562 = vmatprep.mubr.bf16.mxu0 %v648
        %1563 = vmatmul.mubr.bf16.gmra.mrb[0].mxu0 %v534
        %v1564 = vpop.f32.mrb[0].mxu0
        %v1565 = vadd.f32 0.0, %v1564
        %v1566 = vpop.f32.mrb[0].mxu0
        %v1567 = vpop.f32.mrb[0].mxu0
        %v1568 = vadd.f32 0.0, %v1567
        %v1569 = vpop.f32.mrb[0].mxu0
        %1570 = vmatprep.mubr.bf16.mxu0 %v660
        %1571 = vmatmul.mubr.bf16.gmra.mrb[0].mxu0 %v535
        %v1572 = vpop.f32.mrb[0].mxu0
        %v1573 = vadd.f32 0.0, %v1572
        %v1574 = vpop.f32.mrb[0].mxu0
        %v1575 = vpop.f32.mrb[0].mxu0
        %v1576 = vadd.f32 0.0, %v1575
        %v1577 = vpop.f32.mrb[0].mxu0
        %1578 = vmatprep.mubr.bf16.mxu0 %v672
        %1579 = vmatmul.mubr.bf16.gmra.mrb[0].mxu0 %v536
        %v1580 = vpop.f32.mrb[0].mxu0
        %v1581 = vadd.f32 0.0, %v1580
        %v1582 = vpop.f32.mrb[0].mxu0
        %v1583 = vpop.f32.mrb[0].mxu0
        %v1584 = vadd.f32 0.0, %v1583
        %v1585 = vpop.f32.mrb[0].mxu0
        %1586 = vmatprep.mubr.bf16.mxu0 %v684
        %1587 = vmatmul.mubr.bf16.gmra.mrb[0].mxu0 %v537
        %v1588 = vpop.f32.mrb[0].mxu0
        %v1589 = vadd.f32 0.0, %v1588
        %v1590 = vpop.f32.mrb[0].mxu0
        %v1591 = vpop.f32.mrb[0].mxu0
        %v1592 = vadd.f32 0.0, %v1591
        %v1593 = vpop.f32.mrb[0].mxu0
        %1594 = vmatprep.mubr.bf16.mxu0 %v696
        %1595 = vmatmul.mubr.bf16.gmra.mrb[0].mxu0 %v538
        %v1596 = vpop.f32.mrb[0].mxu0
        %v1597 = vadd.f32 0.0, %v1596
        %v1598 = vpop.f32.mrb[0].mxu0
        %v1599 = vpop.f32.mrb[0].mxu0
        %v1600 = vadd.f32 0.0, %v1599
        %v1601 = vpop.f32.mrb[0].mxu0
        %1602 = vmatprep.mubr.bf16.mxu0 %v708
        %1603 = vmatmul.mubr.bf16.gmra.mrb[0].mxu0 %v539
        %v1604 = vpop.f32.mrb[0].mxu0
        %v1605 = vadd.f32 0.0, %v1604
        %v1606 = vpop.f32.mrb[0].mxu0
        %v1607 = vpop.f32.mrb[0].mxu0
        %v1608 = vadd.f32 0.0, %v1607
        %v1609 = vpop.f32.mrb[0].mxu0
        %1610 = vmatprep.mubr.bf16.mxu0 %v720
        %1611 = vmatmul.mubr.bf16.gmra.mrb[0].mxu0 %v540
        %v1612 = vpop.f32.mrb[0].mxu0
        %v1613 = vadd.f32 0.0, %v1612
        %v1614 = vpop.f32.mrb[0].mxu0
        %v1615 = vpop.f32.mrb[0].mxu0
        %v1616 = vadd.f32 0.0, %v1615
        %v1617 = vpop.f32.mrb[0].mxu0
        %1618 = vmatprep.mubr.bf16.mxu0 %v732
        %1619 = vmatmul.mubr.bf16.gmra.mrb[0].mxu0 %v541
        %v1620 = vpop.f32.mrb[0].mxu0
        %v1621 = vadd.f32 0.0, %v1620
        %v1622 = vpop.f32.mrb[0].mxu0
        %v1623 = vpop.f32.mrb[0].mxu0
        %v1624 = vadd.f32 0.0, %v1623
        %v1625 = vpop.f32.mrb[0].mxu0
        %1626 = vmatprep.mubr.bf16.mxu0 %v744
        %1627 = vmatmul.mubr.bf16.gmra.mrb[0].mxu0 %v542
        %v1628 = vpop.f32.mrb[0].mxu0
        %v1629 = vadd.f32 0.0, %v1628
        %v1630 = vpop.f32.mrb[0].mxu0
        %v1631 = vpop.f32.mrb[0].mxu0
        %v1632 = vadd.f32 0.0, %v1631
        %v1633 = vpop.f32.mrb[0].mxu0
        %1634 = vmatprep.mubr.bf16.mxu0 %v756
        %1635 = vmatmul.mubr.bf16.gmra.mrb[0].mxu0 %v543
        %v1636 = vpop.f32.mrb[0].mxu0
        %v1637 = vadd.f32 0.0, %v1636
        %v1638 = vpop.f32.mrb[0].mxu0
        %v1639 = vpop.f32.mrb[0].mxu0
        %v1640 = vadd.f32 0.0, %v1639
        %v1641 = vpop.f32.mrb[0].mxu0
        %1642 = vmatprep.mubr.bf16.mxu0 %v768
        %1643 = vmatmul.mubr.bf16.gmra.mrb[0].mxu0 %v544
        %v1644 = vpop.f32.mrb[0].mxu0
        %v1645 = vadd.f32 0.0, %v1644
        %v1646 = vpop.f32.mrb[0].mxu0
        %v1647 = vpop.f32.mrb[0].mxu0
        %v1648 = vadd.f32 0.0, %v1647
        %v1649 = vpop.f32.mrb[0].mxu0
        %1650 = vmatprep.mubr.bf16.mxu0 %v780
        %1651 = vmatmul.mubr.bf16.gmra.mrb[0].mxu0 %v545
        %v1652 = vpop.f32.mrb[0].mxu0
        %v1653 = vadd.f32 0.0, %v1652
        %v1654 = vpop.f32.mrb[0].mxu0
        %v1655 = vpop.f32.mrb[0].mxu0
        %v1656 = vadd.f32 0.0, %v1655
        %v1657 = vpop.f32.mrb[0].mxu0
        %1658 = vmatprep.mubr.bf16.mxu0 %v792
        %1659 = vmatmul.mubr.bf16.gmra.mrb[0].mxu0 %v546
        %v1660 = vpop.f32.mrb[0].mxu0
        %v1661 = vadd.f32 0.0, %v1660
        %v1662 = vpop.f32.mrb[0].mxu0
        %v1663 = vpop.f32.mrb[0].mxu0
        %v1664 = vadd.f32 0.0, %v1663
        %v1665 = vpop.f32.mrb[0].mxu0
        %1666 = vmatprep.mubr.bf16.mxu0 %v804
        %1667 = vmatmul.mubr.bf16.gmra.mrb[0].mxu0 %v547
        %v1668 = vpop.f32.mrb[0].mxu0
        %v1669 = vadd.f32 0.0, %v1668
        %v1670 = vpop.f32.mrb[0].mxu0
        %v1671 = vpop.f32.mrb[0].mxu0
        %v1672 = vadd.f32 0.0, %v1671
        %v1673 = vpop.f32.mrb[0].mxu0
        %1674 = vdwg.mxu0
        %1675 = vmatprep.subr.bf16.mxu0 0
        %1676 = vmatpush1.bf16.msra.mxu0 %v1386
        %1677 = vmatprep.subr.bf16.mxu0 0
        %1678 = vmatpush1.bf16.msra.mxu0 %v1387
        %1679 = vmatprep.subr.bf16.mxu0 0
        %1680 = vmatpush1.bf16.msra.mxu0 %v1388
        %1681 = vmatprep.subr.bf16.mxu0 0
        %1682 = vmatpush1.bf16.msra.mxu0 %v1389
        %1683 = vmatprep.subr.bf16.mxu0 0
        %1684 = vmatpush1.bf16.msra.mxu0 %v1390
        %1685 = vmatprep.subr.bf16.mxu0 0
        %1686 = vmatpush1.bf16.msra.mxu0 %v1391
        %1687 = vmatprep.subr.bf16.mxu0 0
        %1688 = vmatpush1.bf16.msra.mxu0 %v1392
        %1689 = vmatprep.subr.bf16.mxu0 0
        %1690 = vmatpush1.bf16.msra.mxu0 %v1393
        %1691 = vmatprep.subr.bf16.mxu0 0
        %1692 = vmatpush1.bf16.msra.mxu0 %v1394
        %1693 = vmatprep.subr.bf16.mxu0 0
        %1694 = vmatpush1.bf16.msra.mxu0 %v1395
        %1695 = vmatprep.subr.bf16.mxu0 0
        %1696 = vmatpush1.bf16.msra.mxu0 %v1396
        %1697 = vmatprep.subr.bf16.mxu0 0
        %1698 = vmatpush1.bf16.msra.mxu0 %v1397
        %1699 = vmatprep.subr.bf16.mxu0 0
        %1700 = vmatpush1.bf16.msra.mxu0 %v1398
        %1701 = vmatprep.subr.bf16.mxu0 0
        %1702 = vmatpush1.bf16.msra.mxu0 %v1399
        %1703 = vmatprep.subr.bf16.mxu0 0
        %1704 = vmatpush1.bf16.msra.mxu0 %v1400
        %1705 = vmatprep.subr.bf16.mxu0 0
        %1706 = vmatpush1.bf16.msra.mxu0 %v1401
        %1707 = vmatprep.mubr.bf16.mxu0 %v533
        %1708 = vmatmul.mubr.bf16.gmra.mrb[0].mxu0 %v824
        %v1709 = vpop.f32.mrb[0].mxu0
        %v1710 = vadd.f32 %v1549, %v1709
        %v1711 = vpop.f32.mrb[0].mxu0
        %v1712 = vpop.f32.mrb[0].mxu0
        %v1713 = vadd.f32 %v1552, %v1712
        %v1714 = vpop.f32.mrb[0].mxu0
        %1715 = vmatprep.mubr.bf16.mxu0 %v534
        %1716 = vmatmul.mubr.bf16.gmra.mrb[0].mxu0 %v827
        %v1717 = vpop.f32.mrb[0].mxu0
        %v1718 = vadd.f32 %v1557, %v1717
        %v1719 = vpop.f32.mrb[0].mxu0
        %v1720 = vpop.f32.mrb[0].mxu0
        %v1721 = vadd.f32 %v1560, %v1720
        %v1722 = vpop.f32.mrb[0].mxu0
        %1723 = vmatprep.mubr.bf16.mxu0 %v535
        %1724 = vmatmul.mubr.bf16.gmra.mrb[0].mxu0 %v830
        %v1725 = vpop.f32.mrb[0].mxu0
        %v1726 = vadd.f32 %v1565, %v1725
        %v1727 = vpop.f32.mrb[0].mxu0
        %v1728 = vpop.f32.mrb[0].mxu0
        %v1729 = vadd.f32 %v1568, %v1728
        %v1730 = vpop.f32.mrb[0].mxu0
        %1731 = vmatprep.mubr.bf16.mxu0 %v536
        %1732 = vmatmul.mubr.bf16.gmra.mrb[0].mxu0 %v833
        %v1733 = vpop.f32.mrb[0].mxu0
        %v1734 = vadd.f32 %v1573, %v1733
        %v1735 = vpop.f32.mrb[0].mxu0
        %v1736 = vpop.f32.mrb[0].mxu0
        %v1737 = vadd.f32 %v1576, %v1736
        %v1738 = vpop.f32.mrb[0].mxu0
        %1739 = vmatprep.mubr.bf16.mxu0 %v537
        %1740 = vmatmul.mubr.bf16.gmra.mrb[0].mxu0 %v836
        %v1741 = vpop.f32.mrb[0].mxu0
        %v1742 = vadd.f32 %v1581, %v1741
        %v1743 = vpop.f32.mrb[0].mxu0
        %v1744 = vpop.f32.mrb[0].mxu0
        %v1745 = vadd.f32 %v1584, %v1744
        %v1746 = vpop.f32.mrb[0].mxu0
        %1747 = vmatprep.mubr.bf16.mxu0 %v538
        %1748 = vmatmul.mubr.bf16.gmra.mrb[0].mxu0 %v839
        %v1749 = vpop.f32.mrb[0].mxu0
        %v1750 = vadd.f32 %v1589, %v1749
        %v1751 = vpop.f32.mrb[0].mxu0
        %v1752 = vpop.f32.mrb[0].mxu0
        %v1753 = vadd.f32 %v1592, %v1752
        %v1754 = vpop.f32.mrb[0].mxu0
        %1755 = vmatprep.mubr.bf16.mxu0 %v539
        %1756 = vmatmul.mubr.bf16.gmra.mrb[0].mxu0 %v842
        %v1757 = vpop.f32.mrb[0].mxu0
        %v1758 = vadd.f32 %v1597, %v1757
        %v1759 = vpop.f32.mrb[0].mxu0
        %v1760 = vpop.f32.mrb[0].mxu0
        %v1761 = vadd.f32 %v1600, %v1760
        %v1762 = vpop.f32.mrb[0].mxu0
        %1763 = vmatprep.mubr.bf16.mxu0 %v540
        %1764 = vmatmul.mubr.bf16.gmra.mrb[0].mxu0 %v845
        %v1765 = vpop.f32.mrb[0].mxu0
        %v1766 = vadd.f32 %v1605, %v1765
        %v1767 = vpop.f32.mrb[0].mxu0
        %v1768 = vpop.f32.mrb[0].mxu0
        %v1769 = vadd.f32 %v1608, %v1768
        %v1770 = vpop.f32.mrb[0].mxu0
        %1771 = vmatprep.mubr.bf16.mxu0 %v541
        %1772 = vmatmul.mubr.bf16.gmra.mrb[0].mxu0 %v848
        %v1773 = vpop.f32.mrb[0].mxu0
        %v1774 = vadd.f32 %v1613, %v1773
        %v1775 = vpop.f32.mrb[0].mxu0
        %v1776 = vpop.f32.mrb[0].mxu0
        %v1777 = vadd.f32 %v1616, %v1776
        %v1778 = vpop.f32.mrb[0].mxu0
        %1779 = vmatprep.mubr.bf16.mxu0 %v542
        %1780 = vmatmul.mubr.bf16.gmra.mrb[0].mxu0 %v851
        %v1781 = vpop.f32.mrb[0].mxu0
        %v1782 = vadd.f32 %v1621, %v1781
        %v1783 = vpop.f32.mrb[0].mxu0
        %v1784 = vpop.f32.mrb[0].mxu0
        %v1785 = vadd.f32 %v1624, %v1784
        %v1786 = vpop.f32.mrb[0].mxu0
        %1787 = vmatprep.mubr.bf16.mxu0 %v543
        %1788 = vmatmul.mubr.bf16.gmra.mrb[0].mxu0 %v854
        %v1789 = vpop.f32.mrb[0].mxu0
        %v1790 = vadd.f32 %v1629, %v1789
        %v1791 = vpop.f32.mrb[0].mxu0
        %v1792 = vpop.f32.mrb[0].mxu0
        %v1793 = vadd.f32 %v1632, %v1792
        %v1794 = vpop.f32.mrb[0].mxu0
        %1795 = vmatprep.mubr.bf16.mxu0 %v544
        %1796 = vmatmul.mubr.bf16.gmra.mrb[0].mxu0 %v857
        %v1797 = vpop.f32.mrb[0].mxu0
        %v1798 = vadd.f32 %v1637, %v1797
        %v1799 = vpop.f32.mrb[0].mxu0
        %v1800 = vpop.f32.mrb[0].mxu0
        %v1801 = vadd.f32 %v1640, %v1800
        %v1802 = vpop.f32.mrb[0].mxu0
        %1803 = vmatprep.mubr.bf16.mxu0 %v545
        %1804 = vmatmul.mubr.bf16.gmra.mrb[0].mxu0 %v860
        %v1805 = vpop.f32.mrb[0].mxu0
        %v1806 = vadd.f32 %v1645, %v1805
        %v1807 = vpop.f32.mrb[0].mxu0
        %v1808 = vpop.f32.mrb[0].mxu0
        %v1809 = vadd.f32 %v1648, %v1808
        %v1810 = vpop.f32.mrb[0].mxu0
        %1811 = vmatprep.mubr.bf16.mxu0 %v546
        %1812 = vmatmul.mubr.bf16.gmra.mrb[0].mxu0 %v863
        %v1813 = vpop.f32.mrb[0].mxu0
        %v1814 = vadd.f32 %v1653, %v1813
        %v1815 = vpop.f32.mrb[0].mxu0
        %v1816 = vpop.f32.mrb[0].mxu0
        %v1817 = vadd.f32 %v1656, %v1816
        %v1818 = vpop.f32.mrb[0].mxu0
        %1819 = vmatprep.mubr.bf16.mxu0 %v547
        %1820 = vmatmul.mubr.bf16.gmra.mrb[0].mxu0 %v866
        %v1821 = vpop.f32.mrb[0].mxu0
        %v1822 = vadd.f32 %v1661, %v1821
        %v1823 = vpop.f32.mrb[0].mxu0
        %v1824 = vpop.f32.mrb[0].mxu0
        %v1825 = vadd.f32 %v1664, %v1824
        %v1826 = vpop.f32.mrb[0].mxu0
        %1827 = vmatprep.mubr.bf16.mxu0 %v890
        %1828 = vmatmul.mubr.bf16.gmra.mrb[0].mxu0 %v869
        %v1829 = vpop.f32.mrb[0].mxu0
        %v1830 = vadd.f32 %v1669, %v1829
        %v1831 = vpop.f32.mrb[0].mxu0
        %v1832 = vpop.f32.mrb[0].mxu0
        %v1833 = vadd.f32 %v1672, %v1832
        %v1834 = vpop.f32.mrb[0].mxu0
        %1835 = vdwg.mxu0
        %1836 = vmatprep.subr.bf16.mxu0 0
        %1837 = vmatpush1.bf16.msra.mxu0 %v1402
        %1838 = vmatprep.subr.bf16.mxu0 0
        %1839 = vmatpush1.bf16.msra.mxu0 %v1403
        %1840 = vmatprep.subr.bf16.mxu0 0
        %1841 = vmatpush1.bf16.msra.mxu0 %v1404
        %1842 = vmatprep.subr.bf16.mxu0 0
        %1843 = vmatpush1.bf16.msra.mxu0 %v1405
        %1844 = vmatprep.subr.bf16.mxu0 0
        %1845 = vmatpush1.bf16.msra.mxu0 %v1406
        %1846 = vmatprep.subr.bf16.mxu0 0
        %1847 = vmatpush1.bf16.msra.mxu0 %v1407
        %1848 = vmatprep.subr.bf16.mxu0 0
        %1849 = vmatpush1.bf16.msra.mxu0 %v1408
        %1850 = vmatprep.subr.bf16.mxu0 0
        %1851 = vmatpush1.bf16.msra.mxu0 %v1409
        %1852 = vmatprep.subr.bf16.mxu0 0
        %1853 = vmatpush1.bf16.msra.mxu0 %v1410
        %1854 = vmatprep.subr.bf16.mxu0 0
        %1855 = vmatpush1.bf16.msra.mxu0 %v1411
        %1856 = vmatprep.subr.bf16.mxu0 0
        %1857 = vmatpush1.bf16.msra.mxu0 %v1412
        %1858 = vmatprep.subr.bf16.mxu0 0
        %1859 = vmatpush1.bf16.msra.mxu0 %v1413
        %1860 = vmatprep.subr.bf16.mxu0 0
        %1861 = vmatpush1.bf16.msra.mxu0 %v1414
        %1862 = vmatprep.subr.bf16.mxu0 0
        %1863 = vmatpush1.bf16.msra.mxu0 %v1415
        %1864 = vmatprep.subr.bf16.mxu0 0
        %1865 = vmatpush1.bf16.msra.mxu0 %v1416
        %1866 = vmatprep.subr.bf16.mxu0 0
        %1867 = vmatpush1.bf16.msra.mxu0 %v1417
        %1868 = vmatprep.mubr.bf16.mxu0 %v827
        %1869 = vmatmul.mubr.bf16.gmra.mrb[0].mxu0 %v636
        %v1870 = vpop.f32.mrb[0].mxu0
        %v1871 = vadd.f32 %v1710, %v1870
        %v1872 = vpop.f32.mrb[0].mxu0
        %v1873 = vpop.f32.mrb[0].mxu0
        %v1874 = vadd.f32 %v1713, %v1873
        %v1875 = vpop.f32.mrb[0].mxu0
        %1876 = vmatprep.mubr.bf16.mxu0 %v830
        %1877 = vmatmul.mubr.bf16.gmra.mrb[0].mxu0 %v648
        %v1878 = vpop.f32.mrb[0].mxu0
        %v1879 = vadd.f32 %v1718, %v1878
        %v1880 = vpop.f32.mrb[0].mxu0
        %v1881 = vpop.f32.mrb[0].mxu0
        %v1882 = vadd.f32 %v1721, %v1881
        %v1883 = vpop.f32.mrb[0].mxu0
        %1884 = vmatprep.mubr.bf16.mxu0 %v833
        %1885 = vmatmul.mubr.bf16.gmra.mrb[0].mxu0 %v660
        %v1886 = vpop.f32.mrb[0].mxu0
        %v1887 = vadd.f32 %v1726, %v1886
        %v1888 = vpop.f32.mrb[0].mxu0
        %v1889 = vpop.f32.mrb[0].mxu0
        %v1890 = vadd.f32 %v1729, %v1889
        %v1891 = vpop.f32.mrb[0].mxu0
        %1892 = vmatprep.mubr.bf16.mxu0 %v836
        %1893 = vmatmul.mubr.bf16.gmra.mrb[0].mxu0 %v672
        %v1894 = vpop.f32.mrb[0].mxu0
        %v1895 = vadd.f32 %v1734, %v1894
        %v1896 = vpop.f32.mrb[0].mxu0
        %v1897 = vpop.f32.mrb[0].mxu0
        %v1898 = vadd.f32 %v1737, %v1897
        %v1899 = vpop.f32.mrb[0].mxu0
        %1900 = vmatprep.mubr.bf16.mxu0 %v839
        %1901 = vmatmul.mubr.bf16.gmra.mrb[0].mxu0 %v684
        %v1902 = vpop.f32.mrb[0].mxu0
        %v1903 = vadd.f32 %v1742, %v1902
        %v1904 = vpop.f32.mrb[0].mxu0
        %v1905 = vpop.f32.mrb[0].mxu0
        %v1906 = vadd.f32 %v1745, %v1905
        %v1907 = vpop.f32.mrb[0].mxu0
        %1908 = vmatprep.mubr.bf16.mxu0 %v842
        %1909 = vmatmul.mubr.bf16.gmra.mrb[0].mxu0 %v696
        %v1910 = vpop.f32.mrb[0].mxu0
        %v1911 = vadd.f32 %v1750, %v1910
        %v1912 = vpop.f32.mrb[0].mxu0
        %v1913 = vpop.f32.mrb[0].mxu0
        %v1914 = vadd.f32 %v1753, %v1913
        %v1915 = vpop.f32.mrb[0].mxu0
        %1916 = vmatprep.mubr.bf16.mxu0 %v845
        %1917 = vmatmul.mubr.bf16.gmra.mrb[0].mxu0 %v708
        %v1918 = vpop.f32.mrb[0].mxu0
        %v1919 = vadd.f32 %v1758, %v1918
        %v1920 = vpop.f32.mrb[0].mxu0
        %v1921 = vpop.f32.mrb[0].mxu0
        %v1922 = vadd.f32 %v1761, %v1921
        %v1923 = vpop.f32.mrb[0].mxu0
        %1924 = vmatprep.mubr.bf16.mxu0 %v848
        %1925 = vmatmul.mubr.bf16.gmra.mrb[0].mxu0 %v720
        %v1926 = vpop.f32.mrb[0].mxu0
        %v1927 = vadd.f32 %v1766, %v1926
        %v1928 = vpop.f32.mrb[0].mxu0
        %v1929 = vpop.f32.mrb[0].mxu0
        %v1930 = vadd.f32 %v1769, %v1929
        %v1931 = vpop.f32.mrb[0].mxu0
        %1932 = vmatprep.mubr.bf16.mxu0 %v851
        %1933 = vmatmul.mubr.bf16.gmra.mrb[0].mxu0 %v732
        %v1934 = vpop.f32.mrb[0].mxu0
        %v1935 = vadd.f32 %v1774, %v1934
        %v1936 = vpop.f32.mrb[0].mxu0
        %v1937 = vpop.f32.mrb[0].mxu0
        %v1938 = vadd.f32 %v1777, %v1937
        %v1939 = vpop.f32.mrb[0].mxu0
        %1940 = vmatprep.mubr.bf16.mxu0 %v854
        %1941 = vmatmul.mubr.bf16.gmra.mrb[0].mxu0 %v744
        %v1942 = vpop.f32.mrb[0].mxu0
        %v1943 = vadd.f32 %v1782, %v1942
        %v1944 = vpop.f32.mrb[0].mxu0
        %v1945 = vpop.f32.mrb[0].mxu0
        %v1946 = vadd.f32 %v1785, %v1945
        %v1947 = vpop.f32.mrb[0].mxu0
        %1948 = vmatprep.mubr.bf16.mxu0 %v857
        %1949 = vmatmul.mubr.bf16.gmra.mrb[0].mxu0 %v756
        %v1950 = vpop.f32.mrb[0].mxu0
        %v1951 = vadd.f32 %v1790, %v1950
        %v1952 = vpop.f32.mrb[0].mxu0
        %v1953 = vpop.f32.mrb[0].mxu0
        %v1954 = vadd.f32 %v1793, %v1953
        %v1955 = vpop.f32.mrb[0].mxu0
        %1956 = vmatprep.mubr.bf16.mxu0 %v860
        %1957 = vmatmul.mubr.bf16.gmra.mrb[0].mxu0 %v768
        %v1958 = vpop.f32.mrb[0].mxu0
        %v1959 = vadd.f32 %v1798, %v1958
        %v1960 = vpop.f32.mrb[0].mxu0
        %v1961 = vpop.f32.mrb[0].mxu0
        %v1962 = vadd.f32 %v1801, %v1961
        %v1963 = vpop.f32.mrb[0].mxu0
        %1964 = vmatprep.mubr.bf16.mxu0 %v863
        %1965 = vmatmul.mubr.bf16.gmra.mrb[0].mxu0 %v780
        %v1966 = vpop.f32.mrb[0].mxu0
        %v1967 = vadd.f32 %v1806, %v1966
        %v1968 = vpop.f32.mrb[0].mxu0
        %v1969 = vpop.f32.mrb[0].mxu0
        %v1970 = vadd.f32 %v1809, %v1969
        %v1971 = vpop.f32.mrb[0].mxu0
        %1972 = vmatprep.mubr.bf16.mxu0 %v866
        %1973 = vmatmul.mubr.bf16.gmra.mrb[0].mxu0 %v792
        %v1974 = vpop.f32.mrb[0].mxu0
        %v1975 = vadd.f32 %v1814, %v1974
        %v1976 = vpop.f32.mrb[0].mxu0
        %v1977 = vpop.f32.mrb[0].mxu0
        %v1978 = vadd.f32 %v1817, %v1977
        %v1979 = vpop.f32.mrb[0].mxu0
        %1980 = vmatprep.mubr.bf16.mxu0 %v869
        %1981 = vmatmul.mubr.bf16.gmra.mrb[0].mxu0 %v804
        %v1982 = vpop.f32.mrb[0].mxu0
        %v1983 = vadd.f32 %v1822, %v1982
        %v1984 = vpop.f32.mrb[0].mxu0
        %v1985 = vpop.f32.mrb[0].mxu0
        %v1986 = vadd.f32 %v1825, %v1985
        %v1987 = vpop.f32.mrb[0].mxu0
        %1988 = vmatprep.mubr.bf16.mxu0 %v910
        %1989 = vmatmul.mubr.bf16.gmra.mrb[0].mxu0 %v906
        %v1990 = vpop.f32.mrb[0].mxu0
        %v1991 = vadd.f32 %v1830, %v1990
        %v1992 = vpop.f32.mrb[0].mxu0
        %v1993 = vpop.f32.mrb[0].mxu0
        %v1994 = vadd.f32 %v1833, %v1993
        %v1995 = vpop.f32.mrb[0].mxu0
        %1996 = vdwg.mxu0
        %1997 = vmatprep.subr.bf16.mxu0 0
        %1998 = vmatpush1.bf16.msra.mxu0 %v1418
        %1999 = vmatprep.subr.bf16.mxu0 0
        %2000 = vmatpush1.bf16.msra.mxu0 %v1419
        %2001 = vmatprep.subr.bf16.mxu0 0
        %2002 = vmatpush1.bf16.msra.mxu0 %v1420
        %2003 = vmatprep.subr.bf16.mxu0 0
        %2004 = vmatpush1.bf16.msra.mxu0 %v1421
        %2005 = vmatprep.subr.bf16.mxu0 0
        %2006 = vmatpush1.bf16.msra.mxu0 %v1422
        %2007 = vmatprep.subr.bf16.mxu0 0
        %2008 = vmatpush1.bf16.msra.mxu0 %v1423
        %2009 = vmatprep.subr.bf16.mxu0 0
        %2010 = vmatpush1.bf16.msra.mxu0 %v1424
        %2011 = vmatprep.subr.bf16.mxu0 0
        %2012 = vmatpush1.bf16.msra.mxu0 %v1425
        %2013 = vmatprep.subr.bf16.mxu0 0
        %2014 = vmatpush1.bf16.msra.mxu0 %v1426
        %2015 = vmatprep.subr.bf16.mxu0 0
        %2016 = vmatpush1.bf16.msra.mxu0 %v1427
        %2017 = vmatprep.subr.bf16.mxu0 0
        %2018 = vmatpush1.bf16.msra.mxu0 %v1428
        %2019 = vmatprep.subr.bf16.mxu0 0
        %2020 = vmatpush1.bf16.msra.mxu0 %v1429
        %2021 = vmatprep.subr.bf16.mxu0 0
        %2022 = vmatpush1.bf16.msra.mxu0 %v1430
        %2023 = vmatprep.subr.bf16.mxu0 0
        %2024 = vmatpush1.bf16.msra.mxu0 %v1431
        %2025 = vmatprep.subr.bf16.mxu0 0
        %2026 = vmatpush1.bf16.msra.mxu0 %v1432
        %2027 = vmatprep.subr.bf16.mxu0 0
        %2028 = vmatpush1.bf16.msra.mxu0 %v1433
        %2029 = vmatprep.mubr.bf16.mxu0 %v648
        %2030 = vmatmul.mubr.bf16.gmra.mrb[0].mxu0 %v534
        %v2031 = vpop.f32.mrb[0].mxu0
        %v2032 = vadd.f32 %v1871, %v2031
        %v2033 = vpop.f32.mrb[0].mxu0
        %v2034 = vpop.f32.mrb[0].mxu0
        %v2035 = vadd.f32 %v1874, %v2034
        %v2036 = vpop.f32.mrb[0].mxu0
        %2037 = vmatprep.mubr.bf16.mxu0 %v660
        %2038 = vmatmul.mubr.bf16.gmra.mrb[0].mxu0 %v535
        %v2039 = vpop.f32.mrb[0].mxu0
        %v2040 = vadd.f32 %v1879, %v2039
        %v2041 = vpop.f32.mrb[0].mxu0
        %v2042 = vpop.f32.mrb[0].mxu0
        %v2043 = vadd.f32 %v1882, %v2042
        %v2044 = vpop.f32.mrb[0].mxu0
        %2045 = vmatprep.mubr.bf16.mxu0 %v672
        %2046 = vmatmul.mubr.bf16.gmra.mrb[0].mxu0 %v536
        %v2047 = vpop.f32.mrb[0].mxu0
        %v2048 = vadd.f32 %v1887, %v2047
        %v2049 = vpop.f32.mrb[0].mxu0
        %v2050 = vpop.f32.mrb[0].mxu0
        %v2051 = vadd.f32 %v1890, %v2050
        %v2052 = vpop.f32.mrb[0].mxu0
        %2053 = vmatprep.mubr.bf16.mxu0 %v684
        %2054 = vmatmul.mubr.bf16.gmra.mrb[0].mxu0 %v537
        %v2055 = vpop.f32.mrb[0].mxu0
        %v2056 = vadd.f32 %v1895, %v2055
        %v2057 = vpop.f32.mrb[0].mxu0
        %v2058 = vpop.f32.mrb[0].mxu0
        %v2059 = vadd.f32 %v1898, %v2058
        %v2060 = vpop.f32.mrb[0].mxu0
        %2061 = vmatprep.mubr.bf16.mxu0 %v696
        %2062 = vmatmul.mubr.bf16.gmra.mrb[0].mxu0 %v538
        %v2063 = vpop.f32.mrb[0].mxu0
        %v2064 = vadd.f32 %v1903, %v2063
        %v2065 = vpop.f32.mrb[0].mxu0
        %v2066 = vpop.f32.mrb[0].mxu0
        %v2067 = vadd.f32 %v1906, %v2066
        %v2068 = vpop.f32.mrb[0].mxu0
        %2069 = vmatprep.mubr.bf16.mxu0 %v708
        %2070 = vmatmul.mubr.bf16.gmra.mrb[0].mxu0 %v539
        %v2071 = vpop.f32.mrb[0].mxu0
        %v2072 = vadd.f32 %v1911, %v2071
        %v2073 = vpop.f32.mrb[0].mxu0
        %v2074 = vpop.f32.mrb[0].mxu0
        %v2075 = vadd.f32 %v1914, %v2074
        %v2076 = vpop.f32.mrb[0].mxu0
        %2077 = vmatprep.mubr.bf16.mxu0 %v720
        %2078 = vmatmul.mubr.bf16.gmra.mrb[0].mxu0 %v540
        %v2079 = vpop.f32.mrb[0].mxu0
        %v2080 = vadd.f32 %v1919, %v2079
        %v2081 = vpop.f32.mrb[0].mxu0
        %v2082 = vpop.f32.mrb[0].mxu0
        %v2083 = vadd.f32 %v1922, %v2082
        %v2084 = vpop.f32.mrb[0].mxu0
        %2085 = vmatprep.mubr.bf16.mxu0 %v732
        %2086 = vmatmul.mubr.bf16.gmra.mrb[0].mxu0 %v541
        %v2087 = vpop.f32.mrb[0].mxu0
        %v2088 = vadd.f32 %v1927, %v2087
        %v2089 = vpop.f32.mrb[0].mxu0
        %v2090 = vpop.f32.mrb[0].mxu0
        %v2091 = vadd.f32 %v1930, %v2090
        %v2092 = vpop.f32.mrb[0].mxu0
        %2093 = vmatprep.mubr.bf16.mxu0 %v744
        %2094 = vmatmul.mubr.bf16.gmra.mrb[0].mxu0 %v542
        %v2095 = vpop.f32.mrb[0].mxu0
        %v2096 = vadd.f32 %v1935, %v2095
        %v2097 = vpop.f32.mrb[0].mxu0
        %v2098 = vpop.f32.mrb[0].mxu0
        %v2099 = vadd.f32 %v1938, %v2098
        %v2100 = vpop.f32.mrb[0].mxu0
        %2101 = vmatprep.mubr.bf16.mxu0 %v756
        %2102 = vmatmul.mubr.bf16.gmra.mrb[0].mxu0 %v543
        %v2103 = vpop.f32.mrb[0].mxu0
        %v2104 = vadd.f32 %v1943, %v2103
        %v2105 = vpop.f32.mrb[0].mxu0
        %v2106 = vpop.f32.mrb[0].mxu0
        %v2107 = vadd.f32 %v1946, %v2106
        %v2108 = vpop.f32.mrb[0].mxu0
        %2109 = vmatprep.mubr.bf16.mxu0 %v768
        %2110 = vmatmul.mubr.bf16.gmra.mrb[0].mxu0 %v544
        %v2111 = vpop.f32.mrb[0].mxu0
        %v2112 = vadd.f32 %v1951, %v2111
        %v2113 = vpop.f32.mrb[0].mxu0
        %v2114 = vpop.f32.mrb[0].mxu0
        %v2115 = vadd.f32 %v1954, %v2114
        %v2116 = vpop.f32.mrb[0].mxu0
        %2117 = vmatprep.mubr.bf16.mxu0 %v780
        %2118 = vmatmul.mubr.bf16.gmra.mrb[0].mxu0 %v545
        %v2119 = vpop.f32.mrb[0].mxu0
        %v2120 = vadd.f32 %v1959, %v2119
        %v2121 = vpop.f32.mrb[0].mxu0
        %v2122 = vpop.f32.mrb[0].mxu0
        %v2123 = vadd.f32 %v1962, %v2122
        %v2124 = vpop.f32.mrb[0].mxu0
        %2125 = vmatprep.mubr.bf16.mxu0 %v792
        %2126 = vmatmul.mubr.bf16.gmra.mrb[0].mxu0 %v546
        %v2127 = vpop.f32.mrb[0].mxu0
        %v2128 = vadd.f32 %v1967, %v2127
        %v2129 = vpop.f32.mrb[0].mxu0
        %v2130 = vpop.f32.mrb[0].mxu0
        %v2131 = vadd.f32 %v1970, %v2130
        %v2132 = vpop.f32.mrb[0].mxu0
        %2133 = vmatprep.mubr.bf16.mxu0 %v804
        %2134 = vmatmul.mubr.bf16.gmra.mrb[0].mxu0 %v547
        %v2135 = vpop.f32.mrb[0].mxu0
        %v2136 = vadd.f32 %v1975, %v2135
        %v2137 = vpop.f32.mrb[0].mxu0
        %v2138 = vpop.f32.mrb[0].mxu0
        %v2139 = vadd.f32 %v1978, %v2138
        %v2140 = vpop.f32.mrb[0].mxu0
        %2141 = vmatprep.mubr.bf16.mxu0 %v906
        %2142 = vmatmul.mubr.bf16.gmra.mrb[0].mxu0 %v890
        %v2143 = vpop.f32.mrb[0].mxu0
        %v2144 = vadd.f32 %v1983, %v2143
        %v2145 = vpop.f32.mrb[0].mxu0
        %v2146 = vpop.f32.mrb[0].mxu0
        %v2147 = vadd.f32 %v1986, %v2146
        %v2148 = vpop.f32.mrb[0].mxu0
        %2149 = vmatprep.mubr.bf16.mxu0 %v932
        %2150 = vmatmul.mubr.bf16.gmra.mrb[0].mxu0 %v916
        %v2151 = vpop.f32.mrb[0].mxu0
        %v2152 = vadd.f32 %v1991, %v2151
        %v2153 = vpop.f32.mrb[0].mxu0
        %v2154 = vpop.f32.mrb[0].mxu0
        %v2155 = vadd.f32 %v1994, %v2154
        %v2156 = vpop.f32.mrb[0].mxu0
        %2157 = vdwg.mxu0
        %2158 = vmatprep.subr.bf16.mxu0 0
        %2159 = vmatpush1.bf16.msra.mxu0 %v1434
        %2160 = vmatprep.subr.bf16.mxu0 0
        %2161 = vmatpush1.bf16.msra.mxu0 %v1435
        %2162 = vmatprep.subr.bf16.mxu0 0
        %2163 = vmatpush1.bf16.msra.mxu0 %v1436
        %2164 = vmatprep.subr.bf16.mxu0 0
        %2165 = vmatpush1.bf16.msra.mxu0 %v1437
        %2166 = vmatprep.subr.bf16.mxu0 0
        %2167 = vmatpush1.bf16.msra.mxu0 %v1438
        %2168 = vmatprep.subr.bf16.mxu0 0
        %2169 = vmatpush1.bf16.msra.mxu0 %v1439
        %2170 = vmatprep.subr.bf16.mxu0 0
        %2171 = vmatpush1.bf16.msra.mxu0 %v1440
        %2172 = vmatprep.subr.bf16.mxu0 0
        %2173 = vmatpush1.bf16.msra.mxu0 %v1441
        %2174 = vmatprep.subr.bf16.mxu0 0
        %2175 = vmatpush1.bf16.msra.mxu0 0
        %2176 = vmatprep.subr.bf16.mxu0 0
        %2177 = vmatpush1.bf16.msra.mxu0 0
        %2178 = vmatprep.subr.bf16.mxu0 0
        %2179 = vmatpush1.bf16.msra.mxu0 0
        %2180 = vmatprep.subr.bf16.mxu0 0
        %2181 = vmatpush1.bf16.msra.mxu0 0
        %2182 = vmatprep.subr.bf16.mxu0 0
        %2183 = vmatpush1.bf16.msra.mxu0 0
        %2184 = vmatprep.subr.bf16.mxu0 0
        %2185 = vmatpush1.bf16.msra.mxu0 0
        %2186 = vmatprep.subr.bf16.mxu0 0
        %2187 = vmatpush1.bf16.msra.mxu0 0
        %2188 = vmatprep.subr.bf16.mxu0 0
        %2189 = vmatpush1.bf16.msra.mxu0 0
        %2190 = vmatprep.mubr.bf16.mxu0 0
        %2191 = vmatmul.mubr.bf16.gmra.mrb[0].mxu0 %v830
        %v2192 = vpop.f32.mrb[0].mxu0
        %v2193 = vadd.f32 %v2032, %v2192
        %v2194 = vpop.f32.mrb[0].mxu0
        %v2195 = vpop.f32.mrb[0].mxu0
        %v2196 = vadd.f32 %v2035, %v2195
        %v2197 = vpop.f32.mrb[0].mxu0
        %2198 = vmatprep.mubr.bf16.mxu0 0
        %2199 = vmatmul.mubr.bf16.gmra.mrb[0].mxu0 %v833
        %v2200 = vpop.f32.mrb[0].mxu0
        %v2201 = vadd.f32 %v2040, %v2200
        %v2202 = vpop.f32.mrb[0].mxu0
        %v2203 = vpop.f32.mrb[0].mxu0
        %v2204 = vadd.f32 %v2043, %v2203
        %v2205 = vpop.f32.mrb[0].mxu0
        %2206 = vmatprep.mubr.bf16.mxu0 0
        %2207 = vmatmul.mubr.bf16.gmra.mrb[0].mxu0 %v836
        %v2208 = vpop.f32.mrb[0].mxu0
        %v2209 = vadd.f32 %v2048, %v2208
        %v2210 = vpop.f32.mrb[0].mxu0
        %v2211 = vpop.f32.mrb[0].mxu0
        %v2212 = vadd.f32 %v2051, %v2211
        %v2213 = vpop.f32.mrb[0].mxu0
        %2214 = vmatprep.mubr.bf16.mxu0 0
        %2215 = vmatmul.mubr.bf16.gmra.mrb[0].mxu0 %v839
        %v2216 = vpop.f32.mrb[0].mxu0
        %v2217 = vadd.f32 %v2056, %v2216
        %v2218 = vpop.f32.mrb[0].mxu0
        %v2219 = vpop.f32.mrb[0].mxu0
        %v2220 = vadd.f32 %v2059, %v2219
        %v2221 = vpop.f32.mrb[0].mxu0
        %2222 = vmatprep.mubr.bf16.mxu0 0
        %2223 = vmatmul.mubr.bf16.gmra.mrb[0].mxu0 %v842
        %v2224 = vpop.f32.mrb[0].mxu0
        %v2225 = vadd.f32 %v2064, %v2224
        %v2226 = vpop.f32.mrb[0].mxu0
        %v2227 = vpop.f32.mrb[0].mxu0
        %v2228 = vadd.f32 %v2067, %v2227
        %v2229 = vpop.f32.mrb[0].mxu0
        %2230 = vmatprep.mubr.bf16.mxu0 0
        %2231 = vmatmul.mubr.bf16.gmra.mrb[0].mxu0 %v845
        %v2232 = vpop.f32.mrb[0].mxu0
        %v2233 = vadd.f32 %v2072, %v2232
        %v2234 = vpop.f32.mrb[0].mxu0
        %v2235 = vpop.f32.mrb[0].mxu0
        %v2236 = vadd.f32 %v2075, %v2235
        %v2237 = vpop.f32.mrb[0].mxu0
        %2238 = vmatprep.mubr.bf16.mxu0 0
        %2239 = vmatmul.mubr.bf16.gmra.mrb[0].mxu0 %v848
        %v2240 = vpop.f32.mrb[0].mxu0
        %v2241 = vadd.f32 %v2080, %v2240
        %v2242 = vpop.f32.mrb[0].mxu0
        %v2243 = vpop.f32.mrb[0].mxu0
        %v2244 = vadd.f32 %v2083, %v2243
        %v2245 = vpop.f32.mrb[0].mxu0
        %2246 = vmatprep.mubr.bf16.mxu0 0
        %2247 = vmatmul.mubr.bf16.gmra.mrb[0].mxu0 %v851
        %v2248 = vpop.f32.mrb[0].mxu0
        %v2249 = vadd.f32 %v2088, %v2248
        %v2250 = vpop.f32.mrb[0].mxu0
        %v2251 = vpop.f32.mrb[0].mxu0
        %v2252 = vadd.f32 %v2091, %v2251
        %v2253 = vpop.f32.mrb[0].mxu0
        %2254 = vmatprep.mubr.bf16.mxu0 0
        %2255 = vmatmul.mubr.bf16.gmra.mrb[0].mxu0 %v854
        %v2256 = vpop.f32.mrb[0].mxu0
        %v2257 = vadd.f32 %v2096, %v2256
        %v2258 = vpop.f32.mrb[0].mxu0
        %v2259 = vpop.f32.mrb[0].mxu0
        %v2260 = vadd.f32 %v2099, %v2259
        %v2261 = vpop.f32.mrb[0].mxu0
        %2262 = vmatprep.mubr.bf16.mxu0 0
        %2263 = vmatmul.mubr.bf16.gmra.mrb[0].mxu0 %v857
        %v2264 = vpop.f32.mrb[0].mxu0
        %v2265 = vadd.f32 %v2104, %v2264
        %v2266 = vpop.f32.mrb[0].mxu0
        %v2267 = vpop.f32.mrb[0].mxu0
        %v2268 = vadd.f32 %v2107, %v2267
        %v2269 = vpop.f32.mrb[0].mxu0
        %2270 = vmatprep.mubr.bf16.mxu0 0
        %2271 = vmatmul.mubr.bf16.gmra.mrb[0].mxu0 %v860
        %v2272 = vpop.f32.mrb[0].mxu0
        %v2273 = vadd.f32 %v2112, %v2272
        %v2274 = vpop.f32.mrb[0].mxu0
        %v2275 = vpop.f32.mrb[0].mxu0
        %v2276 = vadd.f32 %v2115, %v2275
        %v2277 = vpop.f32.mrb[0].mxu0
        %2278 = vmatprep.mubr.bf16.mxu0 0
        %2279 = vmatmul.mubr.bf16.gmra.mrb[0].mxu0 %v863
        %v2280 = vpop.f32.mrb[0].mxu0
        %v2281 = vadd.f32 %v2120, %v2280
        %v2282 = vpop.f32.mrb[0].mxu0
        %v2283 = vpop.f32.mrb[0].mxu0
        %v2284 = vadd.f32 %v2123, %v2283
        %v2285 = vpop.f32.mrb[0].mxu0
        %2286 = vmatprep.mubr.bf16.mxu0 0
        %2287 = vmatmul.mubr.bf16.gmra.mrb[0].mxu0 %v866
        %v2288 = vpop.f32.mrb[0].mxu0
        %v2289 = vadd.f32 %v2128, %v2288
        %v2290 = vpop.f32.mrb[0].mxu0
        %v2291 = vpop.f32.mrb[0].mxu0
        %v2292 = vadd.f32 %v2131, %v2291
        %v2293 = vpop.f32.mrb[0].mxu0
        %2294 = vmatprep.mubr.bf16.mxu0 0
        %2295 = vmatmul.mubr.bf16.gmra.mrb[0].mxu0 %v869
        %v2296 = vpop.f32.mrb[0].mxu0
        %v2297 = vadd.f32 %v2136, %v2296
        %v2298 = vpop.f32.mrb[0].mxu0
        %v2299 = vpop.f32.mrb[0].mxu0
        %v2300 = vadd.f32 %v2139, %v2299
        %v2301 = vpop.f32.mrb[0].mxu0
        %2302 = vmatprep.mubr.bf16.mxu0 0
        %2303 = vmatmul.mubr.bf16.gmra.mrb[0].mxu0 %v910
        %v2304 = vpop.f32.mrb[0].mxu0
        %v2305 = vadd.f32 %v2144, %v2304
        %v2306 = vpop.f32.mrb[0].mxu0
        %v2307 = vpop.f32.mrb[0].mxu0
        %v2308 = vadd.f32 %v2147, %v2307
        %v2309 = vpop.f32.mrb[0].mxu0
        %2310 = vmatprep.mubr.bf16.mxu0 0
        %2311 = vmatmul.mubr.bf16.gmra.mrb[0].mxu0 %v936
        %v2312 = vpop.f32.mrb[0].mxu0
        %v2313 = vadd.f32 %v2152, %v2312
        %v2314 = vpop.f32.mrb[0].mxu0
        %v2315 = vpop.f32.mrb[0].mxu0
        %v2316 = vadd.f32 %v2155, %v2315
        %v2317 = vpop.f32.mrb[0].mxu0
        %2318 = vdwg.mxu0
        %v2319 = vld [vmem:[%s2] sm:$0x1]
        %v2321 = vlaneseq
        %v2322 = vshrl.u32 %v2321, 7
        %v2323 = vsub.s32 0, %v2322
        %v2324 = vrot.slane %v2319, %v2323
        %v2326 = vmul.f32 %v2193, %v2324
        %v2327 = vmul.f32 %v2196, %v2324
        %v2328 = vmul.f32 %v2201, %v2324
        %v2329 = vmul.f32 %v2204, %v2324
        %v2330 = vmul.f32 %v2209, %v2324
        %v2331 = vmul.f32 %v2212, %v2324
        %v2332 = vmul.f32 %v2217, %v2324
        %v2333 = vmul.f32 %v2220, %v2324
        %v2334 = vmul.f32 %v2225, %v2324
        %v2335 = vmul.f32 %v2228, %v2324
        %v2336 = vmul.f32 %v2233, %v2324
        %v2337 = vmul.f32 %v2236, %v2324
        %v2338 = vmul.f32 %v2241, %v2324
        %v2339 = vmul.f32 %v2244, %v2324
        %v2340 = vmul.f32 %v2249, %v2324
        %v2341 = vmul.f32 %v2252, %v2324
        %v2342 = vmul.f32 %v2257, %v2324
        %v2343 = vmul.f32 %v2260, %v2324
        %v2344 = vmul.f32 %v2265, %v2324
        %v2345 = vmul.f32 %v2268, %v2324
        %v2346 = vmul.f32 %v2273, %v2324
        %v2347 = vmul.f32 %v2276, %v2324
        %v2348 = vmul.f32 %v2281, %v2324
        %v2349 = vmul.f32 %v2284, %v2324
        %v2350 = vmul.f32 %v2289, %v2324
        %v2351 = vmul.f32 %v2292, %v2324
        %v2352 = vmul.f32 %v2297, %v2324
        %v2353 = vmul.f32 %v2300, %v2324
        %v2354 = vmul.f32 %v2305, %v2324
        %v2355 = vmul.f32 %v2308, %v2324
        %v2356 = vmul.f32 %v2313, %v2324
        %v2357 = vmul.f32 %v2316, %v2324
        %v2358 = vld [vmem:[%s3] sm:$0x1]
        %v2360 = vlaneseq
        %v2361 = vshrl.u32 %v2360, 7
        %v2362 = vsub.s32 0, %v2361
        %v2363 = vrot.slane %v2358, %v2362
        %v2365 = vadd.f32 %v2326, %v2363
        %v2366 = vadd.f32 %v2327, %v2363
        %v2367 = vadd.f32 %v2328, %v2363
        %v2368 = vadd.f32 %v2329, %v2363
        %v2369 = vadd.f32 %v2330, %v2363
        %v2370 = vadd.f32 %v2331, %v2363
        %v2371 = vadd.f32 %v2332, %v2363
        %v2372 = vadd.f32 %v2333, %v2363
        %v2373 = vadd.f32 %v2334, %v2363
        %v2374 = vadd.f32 %v2335, %v2363
        %v2375 = vadd.f32 %v2336, %v2363
        %v2376 = vadd.f32 %v2337, %v2363
        %v2377 = vadd.f32 %v2338, %v2363
        %v2378 = vadd.f32 %v2339, %v2363
        %v2379 = vadd.f32 %v2340, %v2363
        %v2380 = vadd.f32 %v2341, %v2363
        %v2381 = vadd.f32 %v2342, %v2363
        %v2382 = vadd.f32 %v2343, %v2363
        %v2383 = vadd.f32 %v2344, %v2363
        %v2384 = vadd.f32 %v2345, %v2363
        %v2385 = vadd.f32 %v2346, %v2363
        %v2386 = vadd.f32 %v2347, %v2363
        %v2387 = vadd.f32 %v2348, %v2363
        %v2388 = vadd.f32 %v2349, %v2363
        %v2389 = vadd.f32 %v2350, %v2363
        %v2390 = vadd.f32 %v2351, %v2363
        %v2391 = vadd.f32 %v2352, %v2363
        %v2392 = vadd.f32 %v2353, %v2363
        %v2393 = vadd.f32 %v2354, %v2363
        %v2394 = vadd.f32 %v2355, %v2363
        %v2395 = vadd.f32 %v2356, %v2363
        %v2396 = vadd.f32 %v2357, %v2363
        %v2397 = vmax.f32 %v2365, 0.0
        %v2398 = vmax.f32 %v2366, 0.0
        %v2399 = vmax.f32 %v2367, 0.0
        %v2400 = vmax.f32 %v2368, 0.0
        %v2401 = vmax.f32 %v2369, 0.0
        %v2402 = vmax.f32 %v2370, 0.0
        %v2403 = vmax.f32 %v2371, 0.0
        %v2404 = vmax.f32 %v2372, 0.0
        %v2405 = vmax.f32 %v2373, 0.0
        %v2406 = vmax.f32 %v2374, 0.0
        %v2407 = vmax.f32 %v2375, 0.0
        %v2408 = vmax.f32 %v2376, 0.0
        %v2409 = vmax.f32 %v2377, 0.0
        %v2410 = vmax.f32 %v2378, 0.0
        %v2411 = vmax.f32 %v2379, 0.0
        %v2412 = vmax.f32 %v2380, 0.0
        %v2413 = vmax.f32 %v2381, 0.0
        %v2414 = vmax.f32 %v2382, 0.0
        %v2415 = vmax.f32 %v2383, 0.0
        %v2416 = vmax.f32 %v2384, 0.0
        %v2417 = vmax.f32 %v2385, 0.0
        %v2418 = vmax.f32 %v2386, 0.0
        %v2419 = vmax.f32 %v2387, 0.0
        %v2420 = vmax.f32 %v2388, 0.0
        %v2421 = vmax.f32 %v2389, 0.0
        %v2422 = vmax.f32 %v2390, 0.0
        %v2423 = vmax.f32 %v2391, 0.0
        %v2424 = vmax.f32 %v2392, 0.0
        %v2425 = vmax.f32 %v2393, 0.0
        %v2426 = vmax.f32 %v2394, 0.0
        %v2427 = vmax.f32 %v2395, 0.0
        %v2428 = vmax.f32 %v2396, 0.0
        %2429 = vst [vmem:[%s381 + $0x1] sm:$0xff] %v2397
        %2430 = vst [vmem:[%s381 + $0x9] sm:$0xff] %v2398
        %2431 = vst [vmem:[%s381 + $0x19] sm:$0xff] %v2399
        %2432 = vst [vmem:[%s381 + $0x21] sm:$0xff] %v2400
        %2433 = vst [vmem:[%s381 + $0x31] sm:$0xff] %v2401
        %2434 = vst [vmem:[%s381 + $0x39] sm:$0xff] %v2402
        %2435 = vst [vmem:[%s381 + $0x49] sm:$0xff] %v2403
        %2436 = vst [vmem:[%s381 + $0x51] sm:$0xff] %v2404
        %2437 = vst [vmem:[%s381 + $0x61] sm:$0xff] %v2405
        %2438 = vst [vmem:[%s381 + $0x69] sm:$0xff] %v2406
        %2439 = vst [vmem:[%s381 + $0x79] sm:$0xff] %v2407
        %2440 = vst [vmem:[%s381 + $0x81] sm:$0xff] %v2408
        %2441 = vst [vmem:[%s381 + $0x91] sm:$0xff] %v2409
        %2442 = vst [vmem:[%s381 + $0x99] sm:$0xff] %v2410
        %2443 = vst [vmem:[%s381 + $0xa9] sm:$0xff] %v2411
        %2444 = vst [vmem:[%s381 + $0xb1] sm:$0xff] %v2412
        %2445 = vst [vmem:[%s381 + $0xc1] sm:$0xff] %v2413
        %2446 = vst [vmem:[%s381 + $0xc9] sm:$0xff] %v2414
        %2447 = vst [vmem:[%s381 + $0xd9] sm:$0xff] %v2415
        %2448 = vst [vmem:[%s381 + $0xe1] sm:$0xff] %v2416
        %2449 = vst [vmem:[%s381 + $0xf1] sm:$0xff] %v2417
        %2450 = vst [vmem:[%s381 + $0xf9] sm:$0xff] %v2418
        %2451 = vst [vmem:[%s381 + $0x109] sm:$0xff] %v2419
        %2452 = vst [vmem:[%s381 + $0x111] sm:$0xff] %v2420
        %2453 = vst [vmem:[%s381 + $0x121] sm:$0xff] %v2421
        %2454 = vst [vmem:[%s381 + $0x129] sm:$0xff] %v2422
        %2455 = vst [vmem:[%s381 + $0x139] sm:$0xff] %v2423
        %2456 = vst [vmem:[%s381 + $0x141] sm:$0xff] %v2424
        %2457 = vst [vmem:[%s381 + $0x151] sm:$0xff] %v2425
        %2458 = vst [vmem:[%s381 + $0x159] sm:$0xff] %v2426
        %2459 = vst [vmem:[%s381 + $0x169] sm:$0xff] %v2427
        %2460 = vst [vmem:[%s381 + $0x171] sm:$0xff] %v2428
        %v2461 = vld [vmem:[#allocation2] sm:$0xff]
        %v2462 = vld [vmem:[#allocation2 + $0x8] sm:$0xff]
        %v2463 = vld [vmem:[#allocation2 + $0x18] sm:$0xff]
        %v2464 = vld [vmem:[#allocation2 + $0x20] sm:$0xff]
        %v2465 = vld [vmem:[#allocation2 + $0x30] sm:$0xff]
        %v2466 = vld [vmem:[#allocation2 + $0x38] sm:$0xff]
        %v2467 = vld [vmem:[#allocation2 + $0x48] sm:$0xff]
        %v2468 = vld [vmem:[#allocation2 + $0x50] sm:$0xff]
        %v2469 = vld [vmem:[#allocation2 + $0x60] sm:$0xff]
        %v2470 = vld [vmem:[#allocation2 + $0x68] sm:$0xff]
        %v2471 = vld [vmem:[#allocation2 + $0x78] sm:$0xff]
        %v2472 = vld [vmem:[#allocation2 + $0x80] sm:$0xff]
        %v2473 = vld [vmem:[#allocation2 + $0x90] sm:$0xff]
        %v2474 = vld [vmem:[#allocation2 + $0x98] sm:$0xff]
        %v2475 = vld [vmem:[#allocation2 + $0xa8] sm:$0xff]
        %v2476 = vld [vmem:[#allocation2 + $0xb0] sm:$0xff]
        %v2477 = vld [vmem:[#allocation2 + $0xc0] sm:$0xff]
        %v2478 = vld [vmem:[#allocation2 + $0xc8] sm:$0xff]
        %v2479 = vld [vmem:[#allocation2 + $0xd8] sm:$0xff]
        %v2480 = vld [vmem:[#allocation2 + $0xe0] sm:$0xff]
        %v2481 = vld [vmem:[#allocation2 + $0xf0] sm:$0xff]
        %v2482 = vld [vmem:[#allocation2 + $0xf8] sm:$0xff]
        %v2483 = vld [vmem:[#allocation2 + $0x108] sm:$0xff]
        %v2484 = vld [vmem:[#allocation2 + $0x110] sm:$0xff]
        %v2485 = vld [vmem:[#allocation2 + $0x120] sm:$0xff]
        %v2486 = vld [vmem:[#allocation2 + $0x128] sm:$0xff]
        %v2487 = vld [vmem:[#allocation2 + $0x138] sm:$0xff]
        %v2488 = vld [vmem:[#allocation2 + $0x140] sm:$0xff]
        %v2489 = vld [vmem:[#allocation2 + $0x150] sm:$0xff]
        %v2490 = vld [vmem:[#allocation2 + $0x158] sm:$0xff]
        %v2491 = vld [vmem:[#allocation2 + $0x168] sm:$0xff]
        %v2492 = vld [vmem:[#allocation2 + $0x170] sm:$0xff]
        %v2493 = vpack.c.bf16 %v2462, %v2461
        %v2494 = vpack.c.bf16 %v2464, %v2463
        %v2495 = vpack.c.bf16 %v2466, %v2465
        %v2496 = vpack.c.bf16 %v2468, %v2467
        %v2497 = vpack.c.bf16 %v2470, %v2469
        %v2498 = vpack.c.bf16 %v2472, %v2471
        %v2499 = vpack.c.bf16 %v2474, %v2473
        %v2500 = vpack.c.bf16 %v2476, %v2475
        %v2501 = vpack.c.bf16 %v2478, %v2477
        %v2502 = vpack.c.bf16 %v2480, %v2479
        %v2503 = vpack.c.bf16 %v2482, %v2481
        %v2504 = vpack.c.bf16 %v2484, %v2483
        %v2505 = vpack.c.bf16 %v2486, %v2485
        %v2506 = vpack.c.bf16 %v2488, %v2487
        %v2507 = vpack.c.bf16 %v2490, %v2489
        %v2508 = vpack.c.bf16 %v2492, %v2491
        %v2509 = vld [vmem:[#allocation2 + $0x1] sm:$0xff]
        %v2510 = vld [vmem:[#allocation2 + $0x9] sm:$0xff]
        %v2511 = vld [vmem:[#allocation2 + $0x19] sm:$0xff]
        %v2512 = vld [vmem:[#allocation2 + $0x21] sm:$0xff]
        %v2513 = vld [vmem:[#allocation2 + $0x31] sm:$0xff]
        %v2514 = vld [vmem:[#allocation2 + $0x39] sm:$0xff]
        %v2515 = vld [vmem:[#allocation2 + $0x49] sm:$0xff]
        %v2516 = vld [vmem:[#allocation2 + $0x51] sm:$0xff]
        %v2517 = vld [vmem:[#allocation2 + $0x61] sm:$0xff]
        %v2518 = vld [vmem:[#allocation2 + $0x69] sm:$0xff]
        %v2519 = vld [vmem:[#allocation2 + $0x79] sm:$0xff]
        %v2520 = vld [vmem:[#allocation2 + $0x81] sm:$0xff]
        %v2521 = vld [vmem:[#allocation2 + $0x91] sm:$0xff]
        %v2522 = vld [vmem:[#allocation2 + $0x99] sm:$0xff]
        %v2523 = vld [vmem:[#allocation2 + $0xa9] sm:$0xff]
        %v2524 = vld [vmem:[#allocation2 + $0xb1] sm:$0xff]
        %v2525 = vld [vmem:[#allocation2 + $0xc1] sm:$0xff]
        %v2526 = vld [vmem:[#allocation2 + $0xc9] sm:$0xff]
        %v2527 = vld [vmem:[#allocation2 + $0xd9] sm:$0xff]
        %v2528 = vld [vmem:[#allocation2 + $0xe1] sm:$0xff]
        %v2529 = vld [vmem:[#allocation2 + $0xf1] sm:$0xff]
        %v2530 = vld [vmem:[#allocation2 + $0xf9] sm:$0xff]
        %v2531 = vld [vmem:[#allocation2 + $0x109] sm:$0xff]
        %v2532 = vld [vmem:[#allocation2 + $0x111] sm:$0xff]
        %v2533 = vld [vmem:[#allocation2 + $0x121] sm:$0xff]
        %v2534 = vld [vmem:[#allocation2 + $0x129] sm:$0xff]
        %v2535 = vld [vmem:[#allocation2 + $0x139] sm:$0xff]
        %v2536 = vld [vmem:[#allocation2 + $0x141] sm:$0xff]
        %v2537 = vld [vmem:[#allocation2 + $0x151] sm:$0xff]
        %v2538 = vld [vmem:[#allocation2 + $0x159] sm:$0xff]
        %v2539 = vld [vmem:[#allocation2 + $0x169] sm:$0xff]
        %v2540 = vld [vmem:[#allocation2 + $0x171] sm:$0xff]
        %v2541 = vpack.c.bf16 %v2510, %v2509
        %v2542 = vpack.c.bf16 %v2512, %v2511
        %v2543 = vpack.c.bf16 %v2514, %v2513
        %v2544 = vpack.c.bf16 %v2516, %v2515
        %v2545 = vpack.c.bf16 %v2518, %v2517
        %v2546 = vpack.c.bf16 %v2520, %v2519
        %v2547 = vpack.c.bf16 %v2522, %v2521
        %v2548 = vpack.c.bf16 %v2524, %v2523
        %v2549 = vpack.c.bf16 %v2526, %v2525
        %v2550 = vpack.c.bf16 %v2528, %v2527
        %v2551 = vpack.c.bf16 %v2530, %v2529
        %v2552 = vpack.c.bf16 %v2532, %v2531
        %v2553 = vpack.c.bf16 %v2534, %v2533
        %v2554 = vpack.c.bf16 %v2536, %v2535
        %v2555 = vpack.c.bf16 %v2538, %v2537
        %v2556 = vpack.c.bf16 %v2540, %v2539
        %v2557 = vld [vmem:[#allocation2 + $0x2] sm:$0xff]
        %v2558 = vld [vmem:[#allocation2 + $0xa] sm:$0xff]
        %v2559 = vld [vmem:[#allocation2 + $0x1a] sm:$0xff]
        %v2560 = vld [vmem:[#allocation2 + $0x22] sm:$0xff]
        %v2561 = vld [vmem:[#allocation2 + $0x32] sm:$0xff]
        %v2562 = vld [vmem:[#allocation2 + $0x3a] sm:$0xff]
        %v2563 = vld [vmem:[#allocation2 + $0x4a] sm:$0xff]
        %v2564 = vld [vmem:[#allocation2 + $0x52] sm:$0xff]
        %v2565 = vld [vmem:[#allocation2 + $0x62] sm:$0xff]
        %v2566 = vld [vmem:[#allocation2 + $0x6a] sm:$0xff]
        %v2567 = vld [vmem:[#allocation2 + $0x7a] sm:$0xff]
        %v2568 = vld [vmem:[#allocation2 + $0x82] sm:$0xff]
        %v2569 = vld [vmem:[#allocation2 + $0x92] sm:$0xff]
        %v2570 = vld [vmem:[#allocation2 + $0x9a] sm:$0xff]
        %v2571 = vld [vmem:[#allocation2 + $0xaa] sm:$0xff]
        %v2572 = vld [vmem:[#allocation2 + $0xb2] sm:$0xff]
        %v2573 = vld [vmem:[#allocation2 + $0xc2] sm:$0xff]
        %v2574 = vld [vmem:[#allocation2 + $0xca] sm:$0xff]
        %v2575 = vld [vmem:[#allocation2 + $0xda] sm:$0xff]
        %v2576 = vld [vmem:[#allocation2 + $0xe2] sm:$0xff]
        %v2577 = vld [vmem:[#allocation2 + $0xf2] sm:$0xff]
        %v2578 = vld [vmem:[#allocation2 + $0xfa] sm:$0xff]
        %v2579 = vld [vmem:[#allocation2 + $0x10a] sm:$0xff]
        %v2580 = vld [vmem:[#allocation2 + $0x112] sm:$0xff]
        %v2581 = vld [vmem:[#allocation2 + $0x122] sm:$0xff]
        %v2582 = vld [vmem:[#allocation2 + $0x12a] sm:$0xff]
        %v2583 = vld [vmem:[#allocation2 + $0x13a] sm:$0xff]
        %v2584 = vld [vmem:[#allocation2 + $0x142] sm:$0xff]
        %v2585 = vld [vmem:[#allocation2 + $0x152] sm:$0xff]
        %v2586 = vld [vmem:[#allocation2 + $0x15a] sm:$0xff]
        %v2587 = vld [vmem:[#allocation2 + $0x16a] sm:$0xff]
        %v2588 = vld [vmem:[#allocation2 + $0x172] sm:$0xff]
        %v2589 = vpack.c.bf16 %v2558, %v2557
        %v2590 = vpack.c.bf16 %v2560, %v2559
        %v2591 = vpack.c.bf16 %v2562, %v2561
        %v2592 = vpack.c.bf16 %v2564, %v2563
        %v2593 = vpack.c.bf16 %v2566, %v2565
        %v2594 = vpack.c.bf16 %v2568, %v2567
        %v2595 = vpack.c.bf16 %v2570, %v2569
        %v2596 = vpack.c.bf16 %v2572, %v2571
        %v2597 = vpack.c.bf16 %v2574, %v2573
        %v2598 = vpack.c.bf16 %v2576, %v2575
        %v2599 = vpack.c.bf16 %v2578, %v2577
        %v2600 = vpack.c.bf16 %v2580, %v2579
        %v2601 = vpack.c.bf16 %v2582, %v2581
        %v2602 = vpack.c.bf16 %v2584, %v2583
        %v2603 = vpack.c.bf16 %v2586, %v2585
        %v2604 = vpack.c.bf16 %v2588, %v2587
        %v2605 = vld [vmem:[%s381] sm:$0xff]
        %v2606 = vld [vmem:[%s381 + $0x8] sm:$0xff]
        %v2607 = vld [vmem:[%s381 + $0x18] sm:$0xff]
        %v2608 = vld [vmem:[%s381 + $0x20] sm:$0xff]
        %v2609 = vld [vmem:[%s381 + $0x30] sm:$0xff]
        %v2610 = vld [vmem:[%s381 + $0x38] sm:$0xff]
        %v2611 = vld [vmem:[%s381 + $0x48] sm:$0xff]
        %v2612 = vld [vmem:[%s381 + $0x50] sm:$0xff]
        %v2613 = vld [vmem:[%s381 + $0x60] sm:$0xff]
        %v2614 = vld [vmem:[%s381 + $0x68] sm:$0xff]
        %v2615 = vld [vmem:[%s381 + $0x78] sm:$0xff]
        %v2616 = vld [vmem:[%s381 + $0x80] sm:$0xff]
        %v2617 = vld [vmem:[%s381 + $0x90] sm:$0xff]
        %v2618 = vld [vmem:[%s381 + $0x98] sm:$0xff]
        %v2619 = vld [vmem:[%s381 + $0xa8] sm:$0xff]
        %v2620 = vld [vmem:[%s381 + $0xb0] sm:$0xff]
        %v2621 = vld [vmem:[%s381 + $0xc0] sm:$0xff]
        %v2622 = vld [vmem:[%s381 + $0xc8] sm:$0xff]
        %v2623 = vld [vmem:[%s381 + $0xd8] sm:$0xff]
        %v2624 = vld [vmem:[%s381 + $0xe0] sm:$0xff]
        %v2625 = vld [vmem:[%s381 + $0xf0] sm:$0xff]
        %v2626 = vld [vmem:[%s381 + $0xf8] sm:$0xff]
        %v2627 = vld [vmem:[%s381 + $0x108] sm:$0xff]
        %v2628 = vld [vmem:[%s381 + $0x110] sm:$0xff]
        %v2629 = vld [vmem:[%s381 + $0x120] sm:$0xff]
        %v2630 = vld [vmem:[%s381 + $0x128] sm:$0xff]
        %v2631 = vld [vmem:[%s381 + $0x138] sm:$0xff]
        %v2632 = vld [vmem:[%s381 + $0x140] sm:$0xff]
        %v2633 = vld [vmem:[%s381 + $0x150] sm:$0xff]
        %v2634 = vld [vmem:[%s381 + $0x158] sm:$0xff]
        %v2635 = vld [vmem:[%s381 + $0x168] sm:$0xff]
        %v2636 = vld [vmem:[%s381 + $0x170] sm:$0xff]
        %v2637 = vpack.c.bf16 %v2606, %v2605
        %v2638 = vpack.c.bf16 %v2608, %v2607
        %v2639 = vpack.c.bf16 %v2610, %v2609
        %v2640 = vpack.c.bf16 %v2612, %v2611
        %v2641 = vpack.c.bf16 %v2614, %v2613
        %v2642 = vpack.c.bf16 %v2616, %v2615
        %v2643 = vpack.c.bf16 %v2618, %v2617
        %v2644 = vpack.c.bf16 %v2620, %v2619
        %v2645 = vpack.c.bf16 %v2622, %v2621
        %v2646 = vpack.c.bf16 %v2624, %v2623
        %v2647 = vpack.c.bf16 %v2626, %v2625
        %v2648 = vpack.c.bf16 %v2628, %v2627
        %v2649 = vpack.c.bf16 %v2630, %v2629
        %v2650 = vpack.c.bf16 %v2632, %v2631
        %v2651 = vpack.c.bf16 %v2634, %v2633
        %v2652 = vpack.c.bf16 %v2636, %v2635
        %v2653 = vld [vmem:[%s381 + $0x1] sm:$0xff]
        %v2654 = vld [vmem:[%s381 + $0x9] sm:$0xff]
        %v2655 = vld [vmem:[%s381 + $0x19] sm:$0xff]
        %v2656 = vld [vmem:[%s381 + $0x21] sm:$0xff]
        %v2657 = vld [vmem:[%s381 + $0x31] sm:$0xff]
        %v2658 = vld [vmem:[%s381 + $0x39] sm:$0xff]
        %v2659 = vld [vmem:[%s381 + $0x49] sm:$0xff]
        %v2660 = vld [vmem:[%s381 + $0x51] sm:$0xff]
        %v2661 = vld [vmem:[%s381 + $0x61] sm:$0xff]
        %v2662 = vld [vmem:[%s381 + $0x69] sm:$0xff]
        %v2663 = vld [vmem:[%s381 + $0x79] sm:$0xff]
        %v2664 = vld [vmem:[%s381 + $0x81] sm:$0xff]
        %v2665 = vld [vmem:[%s381 + $0x91] sm:$0xff]
        %v2666 = vld [vmem:[%s381 + $0x99] sm:$0xff]
        %v2667 = vld [vmem:[%s381 + $0xa9] sm:$0xff]
        %v2668 = vld [vmem:[%s381 + $0xb1] sm:$0xff]
        %v2669 = vld [vmem:[%s381 + $0xc1] sm:$0xff]
        %v2670 = vld [vmem:[%s381 + $0xc9] sm:$0xff]
        %v2671 = vld [vmem:[%s381 + $0xd9] sm:$0xff]
        %v2672 = vld [vmem:[%s381 + $0xe1] sm:$0xff]
        %v2673 = vld [vmem:[%s381 + $0xf1] sm:$0xff]
        %v2674 = vld [vmem:[%s381 + $0xf9] sm:$0xff]
        %v2675 = vld [vmem:[%s381 + $0x109] sm:$0xff]
        %v2676 = vld [vmem:[%s381 + $0x111] sm:$0xff]
        %v2677 = vld [vmem:[%s381 + $0x121] sm:$0xff]
        %v2678 = vld [vmem:[%s381 + $0x129] sm:$0xff]
        %v2679 = vld [vmem:[%s381 + $0x139] sm:$0xff]
        %v2680 = vld [vmem:[%s381 + $0x141] sm:$0xff]
        %v2681 = vld [vmem:[%s381 + $0x151] sm:$0xff]
        %v2682 = vld [vmem:[%s381 + $0x159] sm:$0xff]
        %v2683 = vld [vmem:[%s381 + $0x169] sm:$0xff]
        %v2684 = vld [vmem:[%s381 + $0x171] sm:$0xff]
        %v2685 = vpack.c.bf16 %v2654, %v2653
        %v2686 = vpack.c.bf16 %v2656, %v2655
        %v2687 = vpack.c.bf16 %v2658, %v2657
        %v2688 = vpack.c.bf16 %v2660, %v2659
        %v2689 = vpack.c.bf16 %v2662, %v2661
        %v2690 = vpack.c.bf16 %v2664, %v2663
        %v2691 = vpack.c.bf16 %v2666, %v2665
        %v2692 = vpack.c.bf16 %v2668, %v2667
        %v2693 = vpack.c.bf16 %v2670, %v2669
        %v2694 = vpack.c.bf16 %v2672, %v2671
        %v2695 = vpack.c.bf16 %v2674, %v2673
        %v2696 = vpack.c.bf16 %v2676, %v2675
        %v2697 = vpack.c.bf16 %v2678, %v2677
        %v2698 = vpack.c.bf16 %v2680, %v2679
        %v2699 = vpack.c.bf16 %v2682, %v2681
        %v2700 = vpack.c.bf16 %v2684, %v2683
        %v2701 = vld [vmem:[%s381 + $0x2] sm:$0xff]
        %v2702 = vld [vmem:[%s381 + $0xa] sm:$0xff]
        %v2703 = vld [vmem:[%s381 + $0x1a] sm:$0xff]
        %v2704 = vld [vmem:[%s381 + $0x22] sm:$0xff]
        %v2705 = vld [vmem:[%s381 + $0x32] sm:$0xff]
        %v2706 = vld [vmem:[%s381 + $0x3a] sm:$0xff]
        %v2707 = vld [vmem:[%s381 + $0x4a] sm:$0xff]
        %v2708 = vld [vmem:[%s381 + $0x52] sm:$0xff]
        %v2709 = vld [vmem:[%s381 + $0x62] sm:$0xff]
        %v2710 = vld [vmem:[%s381 + $0x6a] sm:$0xff]
        %v2711 = vld [vmem:[%s381 + $0x7a] sm:$0xff]
        %v2712 = vld [vmem:[%s381 + $0x82] sm:$0xff]
        %v2713 = vld [vmem:[%s381 + $0x92] sm:$0xff]
        %v2714 = vld [vmem:[%s381 + $0x9a] sm:$0xff]
        %v2715 = vld [vmem:[%s381 + $0xaa] sm:$0xff]
        %v2716 = vld [vmem:[%s381 + $0xb2] sm:$0xff]
        %v2717 = vld [vmem:[%s381 + $0xc2] sm:$0xff]
        %v2718 = vld [vmem:[%s381 + $0xca] sm:$0xff]
        %v2719 = vld [vmem:[%s381 + $0xda] sm:$0xff]
        %v2720 = vld [vmem:[%s381 + $0xe2] sm:$0xff]
        %v2721 = vld [vmem:[%s381 + $0xf2] sm:$0xff]
        %v2722 = vld [vmem:[%s381 + $0xfa] sm:$0xff]
        %v2723 = vld [vmem:[%s381 + $0x10a] sm:$0xff]
        %v2724 = vld [vmem:[%s381 + $0x112] sm:$0xff]
        %v2725 = vld [vmem:[%s381 + $0x122] sm:$0xff]
        %v2726 = vld [vmem:[%s381 + $0x12a] sm:$0xff]
        %v2727 = vld [vmem:[%s381 + $0x13a] sm:$0xff]
        %v2728 = vld [vmem:[%s381 + $0x142] sm:$0xff]
        %v2729 = vld [vmem:[%s381 + $0x152] sm:$0xff]
        %v2730 = vld [vmem:[%s381 + $0x15a] sm:$0xff]
        %v2731 = vld [vmem:[%s381 + $0x16a] sm:$0xff]
        %v2732 = vld [vmem:[%s381 + $0x172] sm:$0xff]
        %v2733 = vpack.c.bf16 %v2702, %v2701
        %v2734 = vpack.c.bf16 %v2704, %v2703
        %v2735 = vpack.c.bf16 %v2706, %v2705
        %v2736 = vpack.c.bf16 %v2708, %v2707
        %v2737 = vpack.c.bf16 %v2710, %v2709
        %v2738 = vpack.c.bf16 %v2712, %v2711
        %v2739 = vpack.c.bf16 %v2714, %v2713
        %v2740 = vpack.c.bf16 %v2716, %v2715
        %v2741 = vpack.c.bf16 %v2718, %v2717
        %v2742 = vpack.c.bf16 %v2720, %v2719
        %v2743 = vpack.c.bf16 %v2722, %v2721
        %v2744 = vpack.c.bf16 %v2724, %v2723
        %v2745 = vpack.c.bf16 %v2726, %v2725
        %v2746 = vpack.c.bf16 %v2728, %v2727
        %v2747 = vpack.c.bf16 %v2730, %v2729
        %v2748 = vpack.c.bf16 %v2732, %v2731
        %s2749 = scalar_lea.vmem [#allocation2], 48
        %v2750 = vld [vmem:[%s2749] sm:$0xff]
        %v2751 = vld [vmem:[%s2749 + $0x8] sm:$0xff]
        %v2752 = vld [vmem:[%s2749 + $0x18] sm:$0xff]
        %v2753 = vld [vmem:[%s2749 + $0x20] sm:$0xff]
        %v2754 = vld [vmem:[%s2749 + $0x30] sm:$0xff]
        %v2755 = vld [vmem:[%s2749 + $0x38] sm:$0xff]
        %v2756 = vld [vmem:[%s2749 + $0x48] sm:$0xff]
        %v2757 = vld [vmem:[%s2749 + $0x50] sm:$0xff]
        %v2758 = vld [vmem:[%s2749 + $0x60] sm:$0xff]
        %v2759 = vld [vmem:[%s2749 + $0x68] sm:$0xff]
        %v2760 = vld [vmem:[%s2749 + $0x78] sm:$0xff]
        %v2761 = vld [vmem:[%s2749 + $0x80] sm:$0xff]
        %v2762 = vld [vmem:[%s2749 + $0x90] sm:$0xff]
        %v2763 = vld [vmem:[%s2749 + $0x98] sm:$0xff]
        %v2764 = vld [vmem:[%s2749 + $0xa8] sm:$0xff]
        %v2765 = vld [vmem:[%s2749 + $0xb0] sm:$0xff]
        %v2766 = vld [vmem:[%s2749 + $0xc0] sm:$0xff]
        %v2767 = vld [vmem:[%s2749 + $0xc8] sm:$0xff]
        %v2768 = vld [vmem:[%s2749 + $0xd8] sm:$0xff]
        %v2769 = vld [vmem:[%s2749 + $0xe0] sm:$0xff]
        %v2770 = vld [vmem:[%s2749 + $0xf0] sm:$0xff]
        %v2771 = vld [vmem:[%s2749 + $0xf8] sm:$0xff]
        %v2772 = vld [vmem:[%s2749 + $0x108] sm:$0xff]
        %v2773 = vld [vmem:[%s2749 + $0x110] sm:$0xff]
        %v2774 = vld [vmem:[%s2749 + $0x120] sm:$0xff]
        %v2775 = vld [vmem:[%s2749 + $0x128] sm:$0xff]
        %v2776 = vld [vmem:[%s2749 + $0x138] sm:$0xff]
        %v2777 = vld [vmem:[%s2749 + $0x140] sm:$0xff]
        %v2778 = vld [vmem:[%s2749 + $0x150] sm:$0xff]
        %v2779 = vld [vmem:[%s2749 + $0x158] sm:$0xff]
        %v2780 = vld [vmem:[%s2749 + $0x168] sm:$0xff]
        %v2781 = vld [vmem:[%s2749 + $0x170] sm:$0xff]
        %v2782 = vpack.c.bf16 %v2751, %v2750
        %v2783 = vpack.c.bf16 %v2753, %v2752
        %v2784 = vpack.c.bf16 %v2755, %v2754
        %v2785 = vpack.c.bf16 %v2757, %v2756
        %v2786 = vpack.c.bf16 %v2759, %v2758
        %v2787 = vpack.c.bf16 %v2761, %v2760
        %v2788 = vpack.c.bf16 %v2763, %v2762
        %v2789 = vpack.c.bf16 %v2765, %v2764
        %v2790 = vpack.c.bf16 %v2767, %v2766
        %v2791 = vpack.c.bf16 %v2769, %v2768
        %v2792 = vpack.c.bf16 %v2771, %v2770
        %v2793 = vpack.c.bf16 %v2773, %v2772
        %v2794 = vpack.c.bf16 %v2775, %v2774
        %v2795 = vpack.c.bf16 %v2777, %v2776
        %v2796 = vpack.c.bf16 %v2779, %v2778
        %v2797 = vpack.c.bf16 %v2781, %v2780
        %v2798 = vld [vmem:[%s2749 + $0x1] sm:$0xff]
        %v2799 = vld [vmem:[%s2749 + $0x9] sm:$0xff]
        %v2800 = vld [vmem:[%s2749 + $0x19] sm:$0xff]
        %v2801 = vld [vmem:[%s2749 + $0x21] sm:$0xff]
        %v2802 = vld [vmem:[%s2749 + $0x31] sm:$0xff]
        %v2803 = vld [vmem:[%s2749 + $0x39] sm:$0xff]
        %v2804 = vld [vmem:[%s2749 + $0x49] sm:$0xff]
        %v2805 = vld [vmem:[%s2749 + $0x51] sm:$0xff]
        %v2806 = vld [vmem:[%s2749 + $0x61] sm:$0xff]
        %v2807 = vld [vmem:[%s2749 + $0x69] sm:$0xff]
        %v2808 = vld [vmem:[%s2749 + $0x79] sm:$0xff]
        %v2809 = vld [vmem:[%s2749 + $0x81] sm:$0xff]
        %v2810 = vld [vmem:[%s2749 + $0x91] sm:$0xff]
        %v2811 = vld [vmem:[%s2749 + $0x99] sm:$0xff]
        %v2812 = vld [vmem:[%s2749 + $0xa9] sm:$0xff]
        %v2813 = vld [vmem:[%s2749 + $0xb1] sm:$0xff]
        %v2814 = vld [vmem:[%s2749 + $0xc1] sm:$0xff]
        %v2815 = vld [vmem:[%s2749 + $0xc9] sm:$0xff]
        %v2816 = vld [vmem:[%s2749 + $0xd9] sm:$0xff]
        %v2817 = vld [vmem:[%s2749 + $0xe1] sm:$0xff]
        %v2818 = vld [vmem:[%s2749 + $0xf1] sm:$0xff]
        %v2819 = vld [vmem:[%s2749 + $0xf9] sm:$0xff]
        %v2820 = vld [vmem:[%s2749 + $0x109] sm:$0xff]
        %v2821 = vld [vmem:[%s2749 + $0x111] sm:$0xff]
        %v2822 = vld [vmem:[%s2749 + $0x121] sm:$0xff]
        %v2823 = vld [vmem:[%s2749 + $0x129] sm:$0xff]
        %v2824 = vld [vmem:[%s2749 + $0x139] sm:$0xff]
        %v2825 = vld [vmem:[%s2749 + $0x141] sm:$0xff]
        %v2826 = vld [vmem:[%s2749 + $0x151] sm:$0xff]
        %v2827 = vld [vmem:[%s2749 + $0x159] sm:$0xff]
        %v2828 = vld [vmem:[%s2749 + $0x169] sm:$0xff]
        %v2829 = vld [vmem:[%s2749 + $0x171] sm:$0xff]
        %v2830 = vpack.c.bf16 %v2799, %v2798
        %v2831 = vpack.c.bf16 %v2801, %v2800
        %v2832 = vpack.c.bf16 %v2803, %v2802
        %v2833 = vpack.c.bf16 %v2805, %v2804
        %v2834 = vpack.c.bf16 %v2807, %v2806
        %v2835 = vpack.c.bf16 %v2809, %v2808
        %v2836 = vpack.c.bf16 %v2811, %v2810
        %v2837 = vpack.c.bf16 %v2813, %v2812
        %v2838 = vpack.c.bf16 %v2815, %v2814
        %v2839 = vpack.c.bf16 %v2817, %v2816
        %v2840 = vpack.c.bf16 %v2819, %v2818
        %v2841 = vpack.c.bf16 %v2821, %v2820
        %v2842 = vpack.c.bf16 %v2823, %v2822
        %v2843 = vpack.c.bf16 %v2825, %v2824
        %v2844 = vpack.c.bf16 %v2827, %v2826
        %v2845 = vpack.c.bf16 %v2829, %v2828
        %v2846 = vld [vmem:[%s2749 + $0x2] sm:$0xff]
        %v2847 = vld [vmem:[%s2749 + $0xa] sm:$0xff]
        %v2848 = vld [vmem:[%s2749 + $0x1a] sm:$0xff]
        %v2849 = vld [vmem:[%s2749 + $0x22] sm:$0xff]
        %v2850 = vld [vmem:[%s2749 + $0x32] sm:$0xff]
        %v2851 = vld [vmem:[%s2749 + $0x3a] sm:$0xff]
        %v2852 = vld [vmem:[%s2749 + $0x4a] sm:$0xff]
        %v2853 = vld [vmem:[%s2749 + $0x52] sm:$0xff]
        %v2854 = vld [vmem:[%s2749 + $0x62] sm:$0xff]
        %v2855 = vld [vmem:[%s2749 + $0x6a] sm:$0xff]
        %v2856 = vld [vmem:[%s2749 + $0x7a] sm:$0xff]
        %v2857 = vld [vmem:[%s2749 + $0x82] sm:$0xff]
        %v2858 = vld [vmem:[%s2749 + $0x92] sm:$0xff]
        %v2859 = vld [vmem:[%s2749 + $0x9a] sm:$0xff]
        %v2860 = vld [vmem:[%s2749 + $0xaa] sm:$0xff]
        %v2861 = vld [vmem:[%s2749 + $0xb2] sm:$0xff]
        %v2862 = vld [vmem:[%s2749 + $0xc2] sm:$0xff]
        %v2863 = vld [vmem:[%s2749 + $0xca] sm:$0xff]
        %v2864 = vld [vmem:[%s2749 + $0xda] sm:$0xff]
        %v2865 = vld [vmem:[%s2749 + $0xe2] sm:$0xff]
        %v2866 = vld [vmem:[%s2749 + $0xf2] sm:$0xff]
        %v2867 = vld [vmem:[%s2749 + $0xfa] sm:$0xff]
        %v2868 = vld [vmem:[%s2749 + $0x10a] sm:$0xff]
        %v2869 = vld [vmem:[%s2749 + $0x112] sm:$0xff]
        %v2870 = vld [vmem:[%s2749 + $0x122] sm:$0xff]
        %v2871 = vld [vmem:[%s2749 + $0x12a] sm:$0xff]
        %v2872 = vld [vmem:[%s2749 + $0x13a] sm:$0xff]
        %v2873 = vld [vmem:[%s2749 + $0x142] sm:$0xff]
        %v2874 = vld [vmem:[%s2749 + $0x152] sm:$0xff]
        %v2875 = vld [vmem:[%s2749 + $0x15a] sm:$0xff]
        %v2876 = vld [vmem:[%s2749 + $0x16a] sm:$0xff]
        %v2877 = vld [vmem:[%s2749 + $0x172] sm:$0xff]
        %v2878 = vpack.c.bf16 %v2847, %v2846
        %v2879 = vpack.c.bf16 %v2849, %v2848
        %v2880 = vpack.c.bf16 %v2851, %v2850
        %v2881 = vpack.c.bf16 %v2853, %v2852
        %v2882 = vpack.c.bf16 %v2855, %v2854
        %v2883 = vpack.c.bf16 %v2857, %v2856
        %v2884 = vpack.c.bf16 %v2859, %v2858
        %v2885 = vpack.c.bf16 %v2861, %v2860
        %v2886 = vpack.c.bf16 %v2863, %v2862
        %v2887 = vpack.c.bf16 %v2865, %v2864
        %v2888 = vpack.c.bf16 %v2867, %v2866
        %v2889 = vpack.c.bf16 %v2869, %v2868
        %v2890 = vpack.c.bf16 %v2871, %v2870
        %v2891 = vpack.c.bf16 %v2873, %v2872
        %v2892 = vpack.c.bf16 %v2875, %v2874
        %v2893 = vpack.c.bf16 %v2877, %v2876
        %v2894 = vld [vmem:[#allocation3] sm:$0xf]
        %v2895 = vld [vmem:[#allocation3 + $0x4] sm:$0xf]
        %v2896 = vld [vmem:[#allocation3 + $0x8] sm:$0xf]
        %v2897 = vld [vmem:[#allocation3 + $0xc] sm:$0xf]
        %v2898 = vld [vmem:[#allocation3 + $0x10] sm:$0xf]
        %v2899 = vld [vmem:[#allocation3 + $0x14] sm:$0xf]
        %v2900 = vld [vmem:[#allocation3 + $0x18] sm:$0xf]
        %v2901 = vld [vmem:[#allocation3 + $0x1c] sm:$0xf]
        %v2902 = vld [vmem:[#allocation3 + $0x20] sm:$0xf]
        %v2903 = vld [vmem:[#allocation3 + $0x24] sm:$0xf]
        %v2904 = vld [vmem:[#allocation3 + $0x28] sm:$0xf]
        %v2905 = vld [vmem:[#allocation3 + $0x2c] sm:$0xf]
        %v2906 = vld [vmem:[#allocation3 + $0x30] sm:$0xf]
        %v2907 = vld [vmem:[#allocation3 + $0x34] sm:$0xf]
        %v2908 = vld [vmem:[#allocation3 + $0x38] sm:$0xf]
        %v2909 = vld [vmem:[#allocation3 + $0x3c] sm:$0xf]
        %v2910 = vld [vmem:[#allocation3 + $0x40] sm:$0xf]
        %v2911 = vld [vmem:[#allocation3 + $0x44] sm:$0xf]
        %v2912 = vld [vmem:[#allocation3 + $0x48] sm:$0xf]
        %v2913 = vld [vmem:[#allocation3 + $0x4c] sm:$0xf]
        %v2914 = vld [vmem:[#allocation3 + $0x50] sm:$0xf]
        %v2915 = vld [vmem:[#allocation3 + $0x54] sm:$0xf]
        %v2916 = vld [vmem:[#allocation3 + $0x58] sm:$0xf]
        %v2917 = vld [vmem:[#allocation3 + $0x5c] sm:$0xf]
        %v2918 = vld [vmem:[#allocation3 + $0x60] sm:$0xf]
        %v2919 = vld [vmem:[#allocation3 + $0x64] sm:$0xf]
        %v2920 = vld [vmem:[#allocation3 + $0x68] sm:$0xf]
        %v2921 = vld [vmem:[#allocation3 + $0x6c] sm:$0xf]
        %v2922 = vld [vmem:[#allocation3 + $0x70] sm:$0xf]
        %v2923 = vld [vmem:[#allocation3 + $0x74] sm:$0xf]
        %v2924 = vld [vmem:[#allocation3 + $0x78] sm:$0xf]
        %v2925 = vld [vmem:[#allocation3 + $0x7c] sm:$0xf]
        %v2926 = vld [vmem:[#allocation3 + $0x80] sm:$0xf]
        %v2927 = vld [vmem:[#allocation3 + $0x84] sm:$0xf]
        %v2928 = vld [vmem:[#allocation3 + $0x88] sm:$0xf]
        %v2929 = vld [vmem:[#allocation3 + $0x8c] sm:$0xf]
        %v2930 = vld [vmem:[#allocation3 + $0x90] sm:$0xf]
        %v2931 = vld [vmem:[#allocation3 + $0x94] sm:$0xf]
        %v2932 = vld [vmem:[#allocation3 + $0x98] sm:$0xf]
        %v2933 = vld [vmem:[#allocation3 + $0x9c] sm:$0xf]
        %v2934 = vld [vmem:[#allocation3 + $0xa0] sm:$0xf]
        %v2935 = vld [vmem:[#allocation3 + $0xa4] sm:$0xf]
        %v2936 = vld [vmem:[#allocation3 + $0xa8] sm:$0xf]
        %v2937 = vld [vmem:[#allocation3 + $0xac] sm:$0xf]
        %v2938 = vld [vmem:[#allocation3 + $0xb0] sm:$0xf]
        %v2939 = vld [vmem:[#allocation3 + $0xb4] sm:$0xf]
        %v2940 = vld [vmem:[#allocation3 + $0xb8] sm:$0xf]
        %v2941 = vld [vmem:[#allocation3 + $0xbc] sm:$0xf]
        %v2942 = vld [vmem:[#allocation3 + $0xc0] sm:$0xf]
        %v2943 = vld [vmem:[#allocation3 + $0xc4] sm:$0xf]
        %v2944 = vld [vmem:[#allocation3 + $0xc8] sm:$0xf]
        %v2945 = vld [vmem:[#allocation3 + $0xcc] sm:$0xf]
        %v2946 = vld [vmem:[#allocation3 + $0xd0] sm:$0xf]
        %v2947 = vld [vmem:[#allocation3 + $0xd4] sm:$0xf]
        %v2948 = vld [vmem:[#allocation3 + $0xd8] sm:$0xf]
        %v2949 = vld [vmem:[#allocation3 + $0xdc] sm:$0xf]
        %v2950 = vld [vmem:[#allocation3 + $0xe0] sm:$0xf]
        %v2951 = vld [vmem:[#allocation3 + $0xe4] sm:$0xf]
        %v2952 = vld [vmem:[#allocation3 + $0xe8] sm:$0xf]
        %v2953 = vld [vmem:[#allocation3 + $0xec] sm:$0xf]
        %v2954 = vld [vmem:[#allocation3 + $0xf0] sm:$0xf]
        %v2955 = vld [vmem:[#allocation3 + $0xf4] sm:$0xf]
        %v2956 = vld [vmem:[#allocation3 + $0xf8] sm:$0xf]
        %v2957 = vld [vmem:[#allocation3 + $0xfc] sm:$0xf]
        %v2958 = vld [vmem:[#allocation3 + $0x100] sm:$0xf]
        %v2959 = vld [vmem:[#allocation3 + $0x104] sm:$0xf]
        %v2960 = vld [vmem:[#allocation3 + $0x108] sm:$0xf]
        %v2961 = vld [vmem:[#allocation3 + $0x10c] sm:$0xf]
        %v2962 = vld [vmem:[#allocation3 + $0x110] sm:$0xf]
        %v2963 = vld [vmem:[#allocation3 + $0x114] sm:$0xf]
        %v2964 = vld [vmem:[#allocation3 + $0x118] sm:$0xf]
        %v2965 = vld [vmem:[#allocation3 + $0x11c] sm:$0xf]
        %v2966 = vld [vmem:[#allocation3 + $0x120] sm:$0xf]
        %v2967 = vld [vmem:[#allocation3 + $0x124] sm:$0xf]
        %v2968 = vld [vmem:[#allocation3 + $0x128] sm:$0xf]
        %v2969 = vld [vmem:[#allocation3 + $0x12c] sm:$0xf]
        %v2970 = vld [vmem:[#allocation3 + $0x130] sm:$0xf]
        %v2971 = vld [vmem:[#allocation3 + $0x134] sm:$0xf]
        %v2972 = vld [vmem:[#allocation3 + $0x138] sm:$0xf]
        %v2973 = vld [vmem:[#allocation3 + $0x13c] sm:$0xf]
        %v2974 = vld [vmem:[#allocation3 + $0x140] sm:$0xf]
        %v2975 = vld [vmem:[#allocation3 + $0x144] sm:$0xf]
        %v2976 = vld [vmem:[#allocation3 + $0x148] sm:$0xf]
        %v2977 = vld [vmem:[#allocation3 + $0x14c] sm:$0xf]
        %v2978 = vld [vmem:[#allocation3 + $0x150] sm:$0xf]
        %v2979 = vld [vmem:[#allocation3 + $0x154] sm:$0xf]
        %v2980 = vld [vmem:[#allocation3 + $0x158] sm:$0xf]
        %v2981 = vld [vmem:[#allocation3 + $0x15c] sm:$0xf]
        %v2982 = vld [vmem:[#allocation3 + $0x160] sm:$0xf]
        %v2983 = vld [vmem:[#allocation3 + $0x164] sm:$0xf]
        %v2984 = vld [vmem:[#allocation3 + $0x168] sm:$0xf]
        %v2985 = vld [vmem:[#allocation3 + $0x16c] sm:$0xf]
        %v2986 = vld [vmem:[#allocation3 + $0x170] sm:$0xf]
        %v2987 = vld [vmem:[#allocation3 + $0x174] sm:$0xf]
        %v2988 = vld [vmem:[#allocation3 + $0x178] sm:$0xf]
        %v2989 = vld [vmem:[#allocation3 + $0x17c] sm:$0xf]
        %v2990 = vld [vmem:[#allocation3 + $0x180] sm:$0xf]
        %v2991 = vld [vmem:[#allocation3 + $0x184] sm:$0xf]
        %v2992 = vld [vmem:[#allocation3 + $0x188] sm:$0xf]
        %v2993 = vld [vmem:[#allocation3 + $0x18c] sm:$0xf]
        %v2994 = vld [vmem:[#allocation3 + $0x190] sm:$0xf]
        %v2995 = vld [vmem:[#allocation3 + $0x194] sm:$0xf]
        %v2996 = vld [vmem:[#allocation3 + $0x198] sm:$0xf]
        %v2997 = vld [vmem:[#allocation3 + $0x19c] sm:$0xf]
        %v2998 = vld [vmem:[#allocation3 + $0x1a0] sm:$0xf]
        %v2999 = vld [vmem:[#allocation3 + $0x1a4] sm:$0xf]
        %v3000 = vld [vmem:[#allocation3 + $0x1a8] sm:$0xf]
        %v3001 = vld [vmem:[#allocation3 + $0x1ac] sm:$0xf]
        %v3002 = vld [vmem:[#allocation3 + $0x1b0] sm:$0xf]
        %v3003 = vld [vmem:[#allocation3 + $0x1b4] sm:$0xf]
        %v3004 = vld [vmem:[#allocation3 + $0x1b8] sm:$0xf]
        %v3005 = vld [vmem:[#allocation3 + $0x1bc] sm:$0xf]
        %v3006 = vld [vmem:[#allocation3 + $0x1c0] sm:$0xf]
        %v3007 = vld [vmem:[#allocation3 + $0x1c4] sm:$0xf]
        %v3008 = vld [vmem:[#allocation3 + $0x1c8] sm:$0xf]
        %v3009 = vld [vmem:[#allocation3 + $0x1cc] sm:$0xf]
        %v3010 = vld [vmem:[#allocation3 + $0x1d0] sm:$0xf]
        %v3011 = vld [vmem:[#allocation3 + $0x1d4] sm:$0xf]
        %v3012 = vld [vmem:[#allocation3 + $0x1d8] sm:$0xf]
        %v3013 = vld [vmem:[#allocation3 + $0x1dc] sm:$0xf]
        %v3014 = vld [vmem:[#allocation3 + $0x1e0] sm:$0xf]
        %v3015 = vld [vmem:[#allocation3 + $0x1e4] sm:$0xf]
        %v3016 = vld [vmem:[#allocation3 + $0x1e8] sm:$0xf]
        %v3017 = vld [vmem:[#allocation3 + $0x1ec] sm:$0xf]
        %v3018 = vld [vmem:[#allocation3 + $0x1f0] sm:$0xf]
        %v3019 = vld [vmem:[#allocation3 + $0x1f4] sm:$0xf]
        %v3020 = vld [vmem:[#allocation3 + $0x1f8] sm:$0xf]
        %v3021 = vld [vmem:[#allocation3 + $0x1fc] sm:$0xf]
        %v3022 = vld [vmem:[#allocation3 + $0x200] sm:$0xf]
        %v3023 = vld [vmem:[#allocation3 + $0x204] sm:$0xf]
        %v3024 = vld [vmem:[#allocation3 + $0x208] sm:$0xf]
        %v3025 = vld [vmem:[#allocation3 + $0x20c] sm:$0xf]
        %v3026 = vld [vmem:[#allocation3 + $0x210] sm:$0xf]
        %v3027 = vld [vmem:[#allocation3 + $0x214] sm:$0xf]
        %v3028 = vld [vmem:[#allocation3 + $0x218] sm:$0xf]
        %v3029 = vld [vmem:[#allocation3 + $0x21c] sm:$0xf]
        %v3030 = vld [vmem:[#allocation3 + $0x220] sm:$0xf]
        %v3031 = vld [vmem:[#allocation3 + $0x224] sm:$0xf]
        %v3032 = vld [vmem:[#allocation3 + $0x228] sm:$0xf]
        %v3033 = vld [vmem:[#allocation3 + $0x22c] sm:$0xf]
        %v3034 = vld [vmem:[#allocation3 + $0x230] sm:$0xf]
        %v3035 = vld [vmem:[#allocation3 + $0x234] sm:$0xf]
        %v3036 = vld [vmem:[#allocation3 + $0x238] sm:$0xf]
        %v3037 = vld [vmem:[#allocation3 + $0x23c] sm:$0xf]
        %v3182 = vunpack.c.l.b16 %v2894
        %v3183 = vunpack.c.l.b16 %v2895
        %v3184 = vunpack.c.l.b16 %v2896
        %v3185 = vunpack.c.l.b16 %v2897
        %v3186 = vunpack.c.l.b16 %v2898
        %v3187 = vunpack.c.l.b16 %v2899
        %v3188 = vunpack.c.l.b16 %v2900
        %v3189 = vunpack.c.l.b16 %v2901
        %v3190 = vunpack.c.l.b16 %v2902
        %v3191 = vunpack.c.l.b16 %v2903
        %v3192 = vunpack.c.l.b16 %v2904
        %v3193 = vunpack.c.l.b16 %v2905
        %v3194 = vunpack.c.l.b16 %v2906
        %v3195 = vunpack.c.l.b16 %v2907
        %v3196 = vunpack.c.l.b16 %v2908
        %v3197 = vunpack.c.l.b16 %v2909
        %v3198 = vunpack.c.l.b16 %v2910
        %v3199 = vunpack.c.l.b16 %v2911
        %v3200 = vunpack.c.l.b16 %v2912
        %v3201 = vunpack.c.l.b16 %v2913
        %v3202 = vunpack.c.l.b16 %v2914
        %v3203 = vunpack.c.l.b16 %v2915
        %v3204 = vunpack.c.l.b16 %v2916
        %v3205 = vunpack.c.l.b16 %v2917
        %v3206 = vunpack.c.l.b16 %v2918
        %v3207 = vunpack.c.l.b16 %v2919
        %v3208 = vunpack.c.l.b16 %v2920
        %v3209 = vunpack.c.l.b16 %v2921
        %v3210 = vunpack.c.l.b16 %v2922
        %v3211 = vunpack.c.l.b16 %v2923
        %v3212 = vunpack.c.l.b16 %v2924
        %v3213 = vunpack.c.l.b16 %v2925
        %v3214 = vunpack.c.l.b16 %v2926
        %v3215 = vunpack.c.l.b16 %v2927
        %v3216 = vunpack.c.l.b16 %v2928
        %v3217 = vunpack.c.l.b16 %v2929
        %v3218 = vunpack.c.l.b16 %v2930
        %v3219 = vunpack.c.l.b16 %v2931
        %v3220 = vunpack.c.l.b16 %v2932
        %v3221 = vunpack.c.l.b16 %v2933
        %v3222 = vunpack.c.l.b16 %v2934
        %v3223 = vunpack.c.l.b16 %v2935
        %v3224 = vunpack.c.l.b16 %v2936
        %v3225 = vunpack.c.l.b16 %v2937
        %v3226 = vunpack.c.l.b16 %v2938
        %v3227 = vunpack.c.l.b16 %v2939
        %v3228 = vunpack.c.l.b16 %v2940
        %v3229 = vunpack.c.l.b16 %v2941
        %v3230 = vunpack.c.l.b16 %v2942
        %v3231 = vunpack.c.l.b16 %v2943
        %v3232 = vunpack.c.l.b16 %v2944
        %v3233 = vunpack.c.l.b16 %v2945
        %v3234 = vunpack.c.l.b16 %v2946
        %v3235 = vunpack.c.l.b16 %v2947
        %v3236 = vunpack.c.l.b16 %v2948
        %v3237 = vunpack.c.l.b16 %v2949
        %v3238 = vunpack.c.l.b16 %v2950
        %v3239 = vunpack.c.l.b16 %v2951
        %v3240 = vunpack.c.l.b16 %v2952
        %v3241 = vunpack.c.l.b16 %v2953
        %v3242 = vunpack.c.l.b16 %v2954
        %v3243 = vunpack.c.l.b16 %v2955
        %v3244 = vunpack.c.l.b16 %v2956
        %v3245 = vunpack.c.l.b16 %v2957
        %v3246 = vunpack.c.l.b16 %v2958
        %v3247 = vunpack.c.l.b16 %v2959
        %v3248 = vunpack.c.l.b16 %v2960
        %v3249 = vunpack.c.l.b16 %v2961
        %v3250 = vunpack.c.l.b16 %v2962
        %v3251 = vunpack.c.l.b16 %v2963
        %v3252 = vunpack.c.l.b16 %v2964
        %v3253 = vunpack.c.l.b16 %v2965
        %v3254 = vunpack.c.l.b16 %v2966
        %v3255 = vunpack.c.l.b16 %v2967
        %v3256 = vunpack.c.l.b16 %v2968
        %v3257 = vunpack.c.l.b16 %v2969
        %v3258 = vunpack.c.l.b16 %v2970
        %v3259 = vunpack.c.l.b16 %v2971
        %v3260 = vunpack.c.l.b16 %v2972
        %v3261 = vunpack.c.l.b16 %v2973
        %v3262 = vunpack.c.l.b16 %v2974
        %v3263 = vunpack.c.l.b16 %v2975
        %v3264 = vunpack.c.l.b16 %v2976
        %v3265 = vunpack.c.l.b16 %v2977
        %v3266 = vunpack.c.l.b16 %v2978
        %v3267 = vunpack.c.l.b16 %v2979
        %v3268 = vunpack.c.l.b16 %v2980
        %v3269 = vunpack.c.l.b16 %v2981
        %v3270 = vunpack.c.l.b16 %v2982
        %v3271 = vunpack.c.l.b16 %v2983
        %v3272 = vunpack.c.l.b16 %v2984
        %v3273 = vunpack.c.l.b16 %v2985
        %v3274 = vunpack.c.l.b16 %v2986
        %v3275 = vunpack.c.l.b16 %v2987
        %v3276 = vunpack.c.l.b16 %v2988
        %v3277 = vunpack.c.l.b16 %v2989
        %v3278 = vunpack.c.l.b16 %v2990
        %v3279 = vunpack.c.l.b16 %v2991
        %v3280 = vunpack.c.l.b16 %v2992
        %v3281 = vunpack.c.l.b16 %v2993
        %v3282 = vunpack.c.l.b16 %v2994
        %v3283 = vunpack.c.l.b16 %v2995
        %v3284 = vunpack.c.l.b16 %v2996
        %v3285 = vunpack.c.l.b16 %v2997
        %v3286 = vunpack.c.l.b16 %v2998
        %v3287 = vunpack.c.l.b16 %v2999
        %v3288 = vunpack.c.l.b16 %v3000
        %v3289 = vunpack.c.l.b16 %v3001
        %v3290 = vunpack.c.l.b16 %v3002
        %v3291 = vunpack.c.l.b16 %v3003
        %v3292 = vunpack.c.l.b16 %v3004
        %v3293 = vunpack.c.l.b16 %v3005
        %v3294 = vunpack.c.l.b16 %v3006
        %v3295 = vunpack.c.l.b16 %v3007
        %v3296 = vunpack.c.l.b16 %v3008
        %v3297 = vunpack.c.l.b16 %v3009
        %v3298 = vunpack.c.l.b16 %v3010
        %v3299 = vunpack.c.l.b16 %v3011
        %v3300 = vunpack.c.l.b16 %v3012
        %v3301 = vunpack.c.l.b16 %v3013
        %v3302 = vunpack.c.l.b16 %v3014
        %v3303 = vunpack.c.l.b16 %v3015
        %v3304 = vunpack.c.l.b16 %v3016
        %v3305 = vunpack.c.l.b16 %v3017
        %v3306 = vunpack.c.l.b16 %v3018
        %v3307 = vunpack.c.l.b16 %v3019
        %v3308 = vunpack.c.l.b16 %v3020
        %v3309 = vunpack.c.l.b16 %v3021
        %v3310 = vunpack.c.l.b16 %v3022
        %v3311 = vunpack.c.l.b16 %v3023
        %v3312 = vunpack.c.l.b16 %v3024
        %v3313 = vunpack.c.l.b16 %v3025
        %v3314 = vunpack.c.l.b16 %v3026
        %v3315 = vunpack.c.l.b16 %v3027
        %v3316 = vunpack.c.l.b16 %v3028
        %v3317 = vunpack.c.l.b16 %v3029
        %v3318 = vunpack.c.l.b16 %v3030
        %v3319 = vunpack.c.l.b16 %v3031
        %v3320 = vunpack.c.l.b16 %v3032
        %v3321 = vunpack.c.l.b16 %v3033
        %v3322 = vunpack.c.l.b16 %v3034
        %v3323 = vunpack.c.l.b16 %v3035
        %v3324 = vunpack.c.l.b16 %v3036
        %v3325 = vunpack.c.l.b16 %v3037
        %v3326 = vpack.c.b16 %v3183, %v3182
        %v3327 = vpack.c.b16 %v3185, %v3184
        %v3328 = vpack.c.b16 %v3187, %v3186
        %v3329 = vpack.c.b16 %v3189, %v3188
        %v3330 = vpack.c.b16 %v3191, %v3190
        %v3331 = vpack.c.b16 %v3193, %v3192
        %v3332 = vpack.c.b16 %v3195, %v3194
        %v3333 = vpack.c.b16 %v3197, %v3196
        %v3334 = vpack.c.b16 %v3199, %v3198
        %v3335 = vpack.c.b16 %v3201, %v3200
        %v3336 = vpack.c.b16 %v3203, %v3202
        %v3337 = vpack.c.b16 %v3205, %v3204
        %v3338 = vpack.c.b16 %v3207, %v3206
        %v3339 = vpack.c.b16 %v3209, %v3208
        %v3340 = vpack.c.b16 %v3211, %v3210
        %v3341 = vpack.c.b16 %v3213, %v3212
        %v3342 = vpack.c.b16 %v3215, %v3214
        %v3343 = vpack.c.b16 %v3217, %v3216
        %v3344 = vpack.c.b16 %v3219, %v3218
        %v3345 = vpack.c.b16 %v3221, %v3220
        %v3346 = vpack.c.b16 %v3223, %v3222
        %v3347 = vpack.c.b16 %v3225, %v3224
        %v3348 = vpack.c.b16 %v3227, %v3226
        %v3349 = vpack.c.b16 %v3229, %v3228
        %v3350 = vpack.c.b16 %v3231, %v3230
        %v3351 = vpack.c.b16 %v3233, %v3232
        %v3352 = vpack.c.b16 %v3235, %v3234
        %v3353 = vpack.c.b16 %v3237, %v3236
        %v3354 = vpack.c.b16 %v3239, %v3238
        %v3355 = vpack.c.b16 %v3241, %v3240
        %v3356 = vpack.c.b16 %v3243, %v3242
        %v3357 = vpack.c.b16 %v3245, %v3244
        %v3358 = vpack.c.b16 %v3247, %v3246
        %v3359 = vpack.c.b16 %v3249, %v3248
        %v3360 = vpack.c.b16 %v3251, %v3250
        %v3361 = vpack.c.b16 %v3253, %v3252
        %v3362 = vpack.c.b16 %v3255, %v3254
        %v3363 = vpack.c.b16 %v3257, %v3256
        %v3364 = vpack.c.b16 %v3259, %v3258
        %v3365 = vpack.c.b16 %v3261, %v3260
        %v3366 = vpack.c.b16 %v3263, %v3262
        %v3367 = vpack.c.b16 %v3265, %v3264
        %v3368 = vpack.c.b16 %v3267, %v3266
        %v3369 = vpack.c.b16 %v3269, %v3268
        %v3370 = vpack.c.b16 %v3271, %v3270
        %v3371 = vpack.c.b16 %v3273, %v3272
        %v3372 = vpack.c.b16 %v3275, %v3274
        %v3373 = vpack.c.b16 %v3277, %v3276
        %v3374 = vpack.c.b16 %v3279, %v3278
        %v3375 = vpack.c.b16 %v3281, %v3280
        %v3376 = vpack.c.b16 %v3283, %v3282
        %v3377 = vpack.c.b16 %v3285, %v3284
        %v3378 = vpack.c.b16 %v3287, %v3286
        %v3379 = vpack.c.b16 %v3289, %v3288
        %v3380 = vpack.c.b16 %v3291, %v3290
        %v3381 = vpack.c.b16 %v3293, %v3292
        %v3382 = vpack.c.b16 %v3295, %v3294
        %v3383 = vpack.c.b16 %v3297, %v3296
        %v3384 = vpack.c.b16 %v3299, %v3298
        %v3385 = vpack.c.b16 %v3301, %v3300
        %v3386 = vpack.c.b16 %v3303, %v3302
        %v3387 = vpack.c.b16 %v3305, %v3304
        %v3388 = vpack.c.b16 %v3307, %v3306
        %v3389 = vpack.c.b16 %v3309, %v3308
        %v3390 = vpack.c.b16 %v3311, %v3310
        %v3391 = vpack.c.b16 %v3313, %v3312
        %v3392 = vpack.c.b16 %v3315, %v3314
        %v3393 = vpack.c.b16 %v3317, %v3316
        %v3394 = vpack.c.b16 %v3319, %v3318
        %v3395 = vpack.c.b16 %v3321, %v3320
        %v3396 = vpack.c.b16 %v3323, %v3322
        %v3397 = vpack.c.b16 %v3325, %v3324
        %3470 = vmatprep.subr.bf16.mxu0 0
        %3471 = vmatpush1.bf16.msra.mxu0 %v3326
        %3472 = vmatprep.subr.bf16.mxu0 0
        %3473 = vmatpush1.bf16.msra.mxu0 %v3327
        %3474 = vmatprep.subr.bf16.mxu0 0
        %3475 = vmatpush1.bf16.msra.mxu0 %v3328
        %3476 = vmatprep.subr.bf16.mxu0 0
        %3477 = vmatpush1.bf16.msra.mxu0 %v3329
        %3478 = vmatprep.subr.bf16.mxu0 0
        %3479 = vmatpush1.bf16.msra.mxu0 %v3330
        %3480 = vmatprep.subr.bf16.mxu0 0
        %3481 = vmatpush1.bf16.msra.mxu0 %v3331
        %3482 = vmatprep.subr.bf16.mxu0 0
        %3483 = vmatpush1.bf16.msra.mxu0 %v3332
        %3484 = vmatprep.subr.bf16.mxu0 0
        %3485 = vmatpush1.bf16.msra.mxu0 %v3333
        %3486 = vmatprep.subr.bf16.mxu0 0
        %3487 = vmatpush1.bf16.msra.mxu0 %v3334
        %3488 = vmatprep.subr.bf16.mxu0 0
        %3489 = vmatpush1.bf16.msra.mxu0 %v3335
        %3490 = vmatprep.subr.bf16.mxu0 0
        %3491 = vmatpush1.bf16.msra.mxu0 %v3336
        %3492 = vmatprep.subr.bf16.mxu0 0
        %3493 = vmatpush1.bf16.msra.mxu0 %v3337
        %3494 = vmatprep.subr.bf16.mxu0 0
        %3495 = vmatpush1.bf16.msra.mxu0 %v3338
        %3496 = vmatprep.subr.bf16.mxu0 0
        %3497 = vmatpush1.bf16.msra.mxu0 %v3339
        %3498 = vmatprep.subr.bf16.mxu0 0
        %3499 = vmatpush1.bf16.msra.mxu0 %v3340
        %3500 = vmatprep.subr.bf16.mxu0 0
        %3501 = vmatpush1.bf16.msra.mxu0 %v3341
        %3502 = vmatprep.mubr.bf16.mxu0 %v2541
        %3503 = vmatmul.mubr.bf16.gmra.mrb[0].mxu0 %v2493
        %v3504 = vpop.f32.mrb[0].mxu0
        %v3505 = vadd.f32 0.0, %v3504
        %v3506 = vpop.f32.mrb[0].mxu0
        %v3507 = vpop.f32.mrb[0].mxu0
        %v3508 = vadd.f32 0.0, %v3507
        %v3509 = vpop.f32.mrb[0].mxu0
        %3510 = vmatprep.mubr.bf16.mxu0 %v2542
        %3511 = vmatmul.mubr.bf16.gmra.mrb[0].mxu0 %v2494
        %v3512 = vpop.f32.mrb[0].mxu0
        %v3513 = vadd.f32 0.0, %v3512
        %v3514 = vpop.f32.mrb[0].mxu0
        %v3515 = vpop.f32.mrb[0].mxu0
        %v3516 = vadd.f32 0.0, %v3515
        %v3517 = vpop.f32.mrb[0].mxu0
        %3518 = vmatprep.mubr.bf16.mxu0 %v2543
        %3519 = vmatmul.mubr.bf16.gmra.mrb[0].mxu0 %v2495
        %v3520 = vpop.f32.mrb[0].mxu0
        %v3521 = vadd.f32 0.0, %v3520
        %v3522 = vpop.f32.mrb[0].mxu0
        %v3523 = vpop.f32.mrb[0].mxu0
        %v3524 = vadd.f32 0.0, %v3523
        %v3525 = vpop.f32.mrb[0].mxu0
        %3526 = vmatprep.mubr.bf16.mxu0 %v2544
        %3527 = vmatmul.mubr.bf16.gmra.mrb[0].mxu0 %v2496
        %v3528 = vpop.f32.mrb[0].mxu0
        %v3529 = vadd.f32 0.0, %v3528
        %v3530 = vpop.f32.mrb[0].mxu0
        %v3531 = vpop.f32.mrb[0].mxu0
        %v3532 = vadd.f32 0.0, %v3531
        %v3533 = vpop.f32.mrb[0].mxu0
        %3534 = vmatprep.mubr.bf16.mxu0 %v2545
        %3535 = vmatmul.mubr.bf16.gmra.mrb[0].mxu0 %v2497
        %v3536 = vpop.f32.mrb[0].mxu0
        %v3537 = vadd.f32 0.0, %v3536
        %v3538 = vpop.f32.mrb[0].mxu0
        %v3539 = vpop.f32.mrb[0].mxu0
        %v3540 = vadd.f32 0.0, %v3539
        %v3541 = vpop.f32.mrb[0].mxu0
        %3542 = vmatprep.mubr.bf16.mxu0 %v2546
        %3543 = vmatmul.mubr.bf16.gmra.mrb[0].mxu0 %v2498
        %v3544 = vpop.f32.mrb[0].mxu0
        %v3545 = vadd.f32 0.0, %v3544
        %v3546 = vpop.f32.mrb[0].mxu0
        %v3547 = vpop.f32.mrb[0].mxu0
        %v3548 = vadd.f32 0.0, %v3547
        %v3549 = vpop.f32.mrb[0].mxu0
        %3550 = vmatprep.mubr.bf16.mxu0 %v2547
        %3551 = vmatmul.mubr.bf16.gmra.mrb[0].mxu0 %v2499
        %v3552 = vpop.f32.mrb[0].mxu0
        %v3553 = vadd.f32 0.0, %v3552
        %v3554 = vpop.f32.mrb[0].mxu0
        %v3555 = vpop.f32.mrb[0].mxu0
        %v3556 = vadd.f32 0.0, %v3555
        %v3557 = vpop.f32.mrb[0].mxu0
        %3558 = vmatprep.mubr.bf16.mxu0 %v2548
        %3559 = vmatmul.mubr.bf16.gmra.mrb[0].mxu0 %v2500
        %v3560 = vpop.f32.mrb[0].mxu0
        %v3561 = vadd.f32 0.0, %v3560
        %v3562 = vpop.f32.mrb[0].mxu0
        %v3563 = vpop.f32.mrb[0].mxu0
        %v3564 = vadd.f32 0.0, %v3563
        %v3565 = vpop.f32.mrb[0].mxu0
        %3566 = vmatprep.mubr.bf16.mxu0 %v2549
        %3567 = vmatmul.mubr.bf16.gmra.mrb[0].mxu0 %v2501
        %v3568 = vpop.f32.mrb[0].mxu0
        %v3569 = vadd.f32 0.0, %v3568
        %v3570 = vpop.f32.mrb[0].mxu0
        %v3571 = vpop.f32.mrb[0].mxu0
        %v3572 = vadd.f32 0.0, %v3571
        %v3573 = vpop.f32.mrb[0].mxu0
        %3574 = vmatprep.mubr.bf16.mxu0 %v2550
        %3575 = vmatmul.mubr.bf16.gmra.mrb[0].mxu0 %v2502
        %v3576 = vpop.f32.mrb[0].mxu0
        %v3577 = vadd.f32 0.0, %v3576
        %v3578 = vpop.f32.mrb[0].mxu0
        %v3579 = vpop.f32.mrb[0].mxu0
        %v3580 = vadd.f32 0.0, %v3579
        %v3581 = vpop.f32.mrb[0].mxu0
        %3582 = vmatprep.mubr.bf16.mxu0 %v2551
        %3583 = vmatmul.mubr.bf16.gmra.mrb[0].mxu0 %v2503
        %v3584 = vpop.f32.mrb[0].mxu0
        %v3585 = vadd.f32 0.0, %v3584
        %v3586 = vpop.f32.mrb[0].mxu0
        %v3587 = vpop.f32.mrb[0].mxu0
        %v3588 = vadd.f32 0.0, %v3587
        %v3589 = vpop.f32.mrb[0].mxu0
        %3590 = vmatprep.mubr.bf16.mxu0 %v2552
        %3591 = vmatmul.mubr.bf16.gmra.mrb[0].mxu0 %v2504
        %v3592 = vpop.f32.mrb[0].mxu0
        %v3593 = vadd.f32 0.0, %v3592
        %v3594 = vpop.f32.mrb[0].mxu0
        %v3595 = vpop.f32.mrb[0].mxu0
        %v3596 = vadd.f32 0.0, %v3595
        %v3597 = vpop.f32.mrb[0].mxu0
        %3598 = vmatprep.mubr.bf16.mxu0 %v2553
        %3599 = vmatmul.mubr.bf16.gmra.mrb[0].mxu0 %v2505
        %v3600 = vpop.f32.mrb[0].mxu0
        %v3601 = vadd.f32 0.0, %v3600
        %v3602 = vpop.f32.mrb[0].mxu0
        %v3603 = vpop.f32.mrb[0].mxu0
        %v3604 = vadd.f32 0.0, %v3603
        %v3605 = vpop.f32.mrb[0].mxu0
        %3606 = vmatprep.mubr.bf16.mxu0 %v2554
        %3607 = vmatmul.mubr.bf16.gmra.mrb[0].mxu0 %v2506
        %v3608 = vpop.f32.mrb[0].mxu0
        %v3609 = vadd.f32 0.0, %v3608
        %v3610 = vpop.f32.mrb[0].mxu0
        %v3611 = vpop.f32.mrb[0].mxu0
        %v3612 = vadd.f32 0.0, %v3611
        %v3613 = vpop.f32.mrb[0].mxu0
        %3614 = vmatprep.mubr.bf16.mxu0 %v2555
        %3615 = vmatmul.mubr.bf16.gmra.mrb[0].mxu0 %v2507
        %v3616 = vpop.f32.mrb[0].mxu0
        %v3617 = vadd.f32 0.0, %v3616
        %v3618 = vpop.f32.mrb[0].mxu0
        %v3619 = vpop.f32.mrb[0].mxu0
        %v3620 = vadd.f32 0.0, %v3619
        %v3621 = vpop.f32.mrb[0].mxu0
        %3622 = vmatprep.mubr.bf16.mxu0 %v2556
        %3623 = vmatmul.mubr.bf16.gmra.mrb[0].mxu0 %v2508
        %v3624 = vpop.f32.mrb[0].mxu0
        %v3625 = vadd.f32 0.0, %v3624
        %v3626 = vpop.f32.mrb[0].mxu0
        %v3627 = vpop.f32.mrb[0].mxu0
        %v3628 = vadd.f32 0.0, %v3627
        %v3629 = vpop.f32.mrb[0].mxu0
        %3630 = vdwg.mxu0
        %3631 = vmatprep.subr.bf16.mxu0 0
        %3632 = vmatpush1.bf16.msra.mxu0 %v3342
        %3633 = vmatprep.subr.bf16.mxu0 0
        %3634 = vmatpush1.bf16.msra.mxu0 %v3343
        %3635 = vmatprep.subr.bf16.mxu0 0
        %3636 = vmatpush1.bf16.msra.mxu0 %v3344
        %3637 = vmatprep.subr.bf16.mxu0 0
        %3638 = vmatpush1.bf16.msra.mxu0 %v3345
        %3639 = vmatprep.subr.bf16.mxu0 0
        %3640 = vmatpush1.bf16.msra.mxu0 %v3346
        %3641 = vmatprep.subr.bf16.mxu0 0
        %3642 = vmatpush1.bf16.msra.mxu0 %v3347
        %3643 = vmatprep.subr.bf16.mxu0 0
        %3644 = vmatpush1.bf16.msra.mxu0 %v3348
        %3645 = vmatprep.subr.bf16.mxu0 0
        %3646 = vmatpush1.bf16.msra.mxu0 %v3349
        %3647 = vmatprep.subr.bf16.mxu0 0
        %3648 = vmatpush1.bf16.msra.mxu0 %v3350
        %3649 = vmatprep.subr.bf16.mxu0 0
        %3650 = vmatpush1.bf16.msra.mxu0 %v3351
        %3651 = vmatprep.subr.bf16.mxu0 0
        %3652 = vmatpush1.bf16.msra.mxu0 %v3352
        %3653 = vmatprep.subr.bf16.mxu0 0
        %3654 = vmatpush1.bf16.msra.mxu0 %v3353
        %3655 = vmatprep.subr.bf16.mxu0 0
        %3656 = vmatpush1.bf16.msra.mxu0 %v3354
        %3657 = vmatprep.subr.bf16.mxu0 0
        %3658 = vmatpush1.bf16.msra.mxu0 %v3355
        %3659 = vmatprep.subr.bf16.mxu0 0
        %3660 = vmatpush1.bf16.msra.mxu0 %v3356
        %3661 = vmatprep.subr.bf16.mxu0 0
        %3662 = vmatpush1.bf16.msra.mxu0 %v3357
        %3663 = vmatprep.mubr.bf16.mxu0 %v2637
        %3664 = vmatmul.mubr.bf16.gmra.mrb[0].mxu0 %v2589
        %v3665 = vpop.f32.mrb[0].mxu0
        %v3666 = vadd.f32 %v3505, %v3665
        %v3667 = vpop.f32.mrb[0].mxu0
        %v3668 = vpop.f32.mrb[0].mxu0
        %v3669 = vadd.f32 %v3508, %v3668
        %v3670 = vpop.f32.mrb[0].mxu0
        %3671 = vmatprep.mubr.bf16.mxu0 %v2638
        %3672 = vmatmul.mubr.bf16.gmra.mrb[0].mxu0 %v2590
        %v3673 = vpop.f32.mrb[0].mxu0
        %v3674 = vadd.f32 %v3513, %v3673
        %v3675 = vpop.f32.mrb[0].mxu0
        %v3676 = vpop.f32.mrb[0].mxu0
        %v3677 = vadd.f32 %v3516, %v3676
        %v3678 = vpop.f32.mrb[0].mxu0
        %3679 = vmatprep.mubr.bf16.mxu0 %v2639
        %3680 = vmatmul.mubr.bf16.gmra.mrb[0].mxu0 %v2591
        %v3681 = vpop.f32.mrb[0].mxu0
        %v3682 = vadd.f32 %v3521, %v3681
        %v3683 = vpop.f32.mrb[0].mxu0
        %v3684 = vpop.f32.mrb[0].mxu0
        %v3685 = vadd.f32 %v3524, %v3684
        %v3686 = vpop.f32.mrb[0].mxu0
        %3687 = vmatprep.mubr.bf16.mxu0 %v2640
        %3688 = vmatmul.mubr.bf16.gmra.mrb[0].mxu0 %v2592
        %v3689 = vpop.f32.mrb[0].mxu0
        %v3690 = vadd.f32 %v3529, %v3689
        %v3691 = vpop.f32.mrb[0].mxu0
        %v3692 = vpop.f32.mrb[0].mxu0
        %v3693 = vadd.f32 %v3532, %v3692
        %v3694 = vpop.f32.mrb[0].mxu0
        %3695 = vmatprep.mubr.bf16.mxu0 %v2641
        %3696 = vmatmul.mubr.bf16.gmra.mrb[0].mxu0 %v2593
        %v3697 = vpop.f32.mrb[0].mxu0
        %v3698 = vadd.f32 %v3537, %v3697
        %v3699 = vpop.f32.mrb[0].mxu0
        %v3700 = vpop.f32.mrb[0].mxu0
        %v3701 = vadd.f32 %v3540, %v3700
        %v3702 = vpop.f32.mrb[0].mxu0
        %3703 = vmatprep.mubr.bf16.mxu0 %v2642
        %3704 = vmatmul.mubr.bf16.gmra.mrb[0].mxu0 %v2594
        %v3705 = vpop.f32.mrb[0].mxu0
        %v3706 = vadd.f32 %v3545, %v3705
        %v3707 = vpop.f32.mrb[0].mxu0
        %v3708 = vpop.f32.mrb[0].mxu0
        %v3709 = vadd.f32 %v3548, %v3708
        %v3710 = vpop.f32.mrb[0].mxu0
        %3711 = vmatprep.mubr.bf16.mxu0 %v2643
        %3712 = vmatmul.mubr.bf16.gmra.mrb[0].mxu0 %v2595
        %v3713 = vpop.f32.mrb[0].mxu0
        %v3714 = vadd.f32 %v3553, %v3713
        %v3715 = vpop.f32.mrb[0].mxu0
        %v3716 = vpop.f32.mrb[0].mxu0
        %v3717 = vadd.f32 %v3556, %v3716
        %v3718 = vpop.f32.mrb[0].mxu0
        %3719 = vmatprep.mubr.bf16.mxu0 %v2644
        %3720 = vmatmul.mubr.bf16.gmra.mrb[0].mxu0 %v2596
        %v3721 = vpop.f32.mrb[0].mxu0
        %v3722 = vadd.f32 %v3561, %v3721
        %v3723 = vpop.f32.mrb[0].mxu0
        %v3724 = vpop.f32.mrb[0].mxu0
        %v3725 = vadd.f32 %v3564, %v3724
        %v3726 = vpop.f32.mrb[0].mxu0
        %3727 = vmatprep.mubr.bf16.mxu0 %v2645
        %3728 = vmatmul.mubr.bf16.gmra.mrb[0].mxu0 %v2597
        %v3729 = vpop.f32.mrb[0].mxu0
        %v3730 = vadd.f32 %v3569, %v3729
        %v3731 = vpop.f32.mrb[0].mxu0
        %v3732 = vpop.f32.mrb[0].mxu0
        %v3733 = vadd.f32 %v3572, %v3732
        %v3734 = vpop.f32.mrb[0].mxu0
        %3735 = vmatprep.mubr.bf16.mxu0 %v2646
        %3736 = vmatmul.mubr.bf16.gmra.mrb[0].mxu0 %v2598
        %v3737 = vpop.f32.mrb[0].mxu0
        %v3738 = vadd.f32 %v3577, %v3737
        %v3739 = vpop.f32.mrb[0].mxu0
        %v3740 = vpop.f32.mrb[0].mxu0
        %v3741 = vadd.f32 %v3580, %v3740
        %v3742 = vpop.f32.mrb[0].mxu0
        %3743 = vmatprep.mubr.bf16.mxu0 %v2647
        %3744 = vmatmul.mubr.bf16.gmra.mrb[0].mxu0 %v2599
        %v3745 = vpop.f32.mrb[0].mxu0
        %v3746 = vadd.f32 %v3585, %v3745
        %v3747 = vpop.f32.mrb[0].mxu0
        %v3748 = vpop.f32.mrb[0].mxu0
        %v3749 = vadd.f32 %v3588, %v3748
        %v3750 = vpop.f32.mrb[0].mxu0
        %3751 = vmatprep.mubr.bf16.mxu0 %v2648
        %3752 = vmatmul.mubr.bf16.gmra.mrb[0].mxu0 %v2600
        %v3753 = vpop.f32.mrb[0].mxu0
        %v3754 = vadd.f32 %v3593, %v3753
        %v3755 = vpop.f32.mrb[0].mxu0
        %v3756 = vpop.f32.mrb[0].mxu0
        %v3757 = vadd.f32 %v3596, %v3756
        %v3758 = vpop.f32.mrb[0].mxu0
        %3759 = vmatprep.mubr.bf16.mxu0 %v2649
        %3760 = vmatmul.mubr.bf16.gmra.mrb[0].mxu0 %v2601
        %v3761 = vpop.f32.mrb[0].mxu0
        %v3762 = vadd.f32 %v3601, %v3761
        %v3763 = vpop.f32.mrb[0].mxu0
        %v3764 = vpop.f32.mrb[0].mxu0
        %v3765 = vadd.f32 %v3604, %v3764
        %v3766 = vpop.f32.mrb[0].mxu0
        %3767 = vmatprep.mubr.bf16.mxu0 %v2650
        %3768 = vmatmul.mubr.bf16.gmra.mrb[0].mxu0 %v2602
        %v3769 = vpop.f32.mrb[0].mxu0
        %v3770 = vadd.f32 %v3609, %v3769
        %v3771 = vpop.f32.mrb[0].mxu0
        %v3772 = vpop.f32.mrb[0].mxu0
        %v3773 = vadd.f32 %v3612, %v3772
        %v3774 = vpop.f32.mrb[0].mxu0
        %3775 = vmatprep.mubr.bf16.mxu0 %v2651
        %3776 = vmatmul.mubr.bf16.gmra.mrb[0].mxu0 %v2603
        %v3777 = vpop.f32.mrb[0].mxu0
        %v3778 = vadd.f32 %v3617, %v3777
        %v3779 = vpop.f32.mrb[0].mxu0
        %v3780 = vpop.f32.mrb[0].mxu0
        %v3781 = vadd.f32 %v3620, %v3780
        %v3782 = vpop.f32.mrb[0].mxu0
        %3783 = vmatprep.mubr.bf16.mxu0 %v2652
        %3784 = vmatmul.mubr.bf16.gmra.mrb[0].mxu0 %v2604
        %v3785 = vpop.f32.mrb[0].mxu0
        %v3786 = vadd.f32 %v3625, %v3785
        %v3787 = vpop.f32.mrb[0].mxu0
        %v3788 = vpop.f32.mrb[0].mxu0
        %v3789 = vadd.f32 %v3628, %v3788
        %v3790 = vpop.f32.mrb[0].mxu0
        %3791 = vdwg.mxu0
        %3792 = vmatprep.subr.bf16.mxu0 0
        %3793 = vmatpush1.bf16.msra.mxu0 %v3358
        %3794 = vmatprep.subr.bf16.mxu0 0
        %3795 = vmatpush1.bf16.msra.mxu0 %v3359
        %3796 = vmatprep.subr.bf16.mxu0 0
        %3797 = vmatpush1.bf16.msra.mxu0 %v3360
        %3798 = vmatprep.subr.bf16.mxu0 0
        %3799 = vmatpush1.bf16.msra.mxu0 %v3361
        %3800 = vmatprep.subr.bf16.mxu0 0
        %3801 = vmatpush1.bf16.msra.mxu0 %v3362
        %3802 = vmatprep.subr.bf16.mxu0 0
        %3803 = vmatpush1.bf16.msra.mxu0 %v3363
        %3804 = vmatprep.subr.bf16.mxu0 0
        %3805 = vmatpush1.bf16.msra.mxu0 %v3364
        %3806 = vmatprep.subr.bf16.mxu0 0
        %3807 = vmatpush1.bf16.msra.mxu0 %v3365
        %3808 = vmatprep.subr.bf16.mxu0 0
        %3809 = vmatpush1.bf16.msra.mxu0 %v3366
        %3810 = vmatprep.subr.bf16.mxu0 0
        %3811 = vmatpush1.bf16.msra.mxu0 %v3367
        %3812 = vmatprep.subr.bf16.mxu0 0
        %3813 = vmatpush1.bf16.msra.mxu0 %v3368
        %3814 = vmatprep.subr.bf16.mxu0 0
        %3815 = vmatpush1.bf16.msra.mxu0 %v3369
        %3816 = vmatprep.subr.bf16.mxu0 0
        %3817 = vmatpush1.bf16.msra.mxu0 %v3370
        %3818 = vmatprep.subr.bf16.mxu0 0
        %3819 = vmatpush1.bf16.msra.mxu0 %v3371
        %3820 = vmatprep.subr.bf16.mxu0 0
        %3821 = vmatpush1.bf16.msra.mxu0 %v3372
        %3822 = vmatprep.subr.bf16.mxu0 0
        %3823 = vmatpush1.bf16.msra.mxu0 %v3373
        %3824 = vmatprep.mubr.bf16.mxu0 %v2733
        %3825 = vmatmul.mubr.bf16.gmra.mrb[0].mxu0 %v2685
        %v3826 = vpop.f32.mrb[0].mxu0
        %v3827 = vadd.f32 %v3666, %v3826
        %v3828 = vpop.f32.mrb[0].mxu0
        %v3829 = vpop.f32.mrb[0].mxu0
        %v3830 = vadd.f32 %v3669, %v3829
        %v3831 = vpop.f32.mrb[0].mxu0
        %3832 = vmatprep.mubr.bf16.mxu0 %v2734
        %3833 = vmatmul.mubr.bf16.gmra.mrb[0].mxu0 %v2686
        %v3834 = vpop.f32.mrb[0].mxu0
        %v3835 = vadd.f32 %v3674, %v3834
        %v3836 = vpop.f32.mrb[0].mxu0
        %v3837 = vpop.f32.mrb[0].mxu0
        %v3838 = vadd.f32 %v3677, %v3837
        %v3839 = vpop.f32.mrb[0].mxu0
        %3840 = vmatprep.mubr.bf16.mxu0 %v2735
        %3841 = vmatmul.mubr.bf16.gmra.mrb[0].mxu0 %v2687
        %v3842 = vpop.f32.mrb[0].mxu0
        %v3843 = vadd.f32 %v3682, %v3842
        %v3844 = vpop.f32.mrb[0].mxu0
        %v3845 = vpop.f32.mrb[0].mxu0
        %v3846 = vadd.f32 %v3685, %v3845
        %v3847 = vpop.f32.mrb[0].mxu0
        %3848 = vmatprep.mubr.bf16.mxu0 %v2736
        %3849 = vmatmul.mubr.bf16.gmra.mrb[0].mxu0 %v2688
        %v3850 = vpop.f32.mrb[0].mxu0
        %v3851 = vadd.f32 %v3690, %v3850
        %v3852 = vpop.f32.mrb[0].mxu0
        %v3853 = vpop.f32.mrb[0].mxu0
        %v3854 = vadd.f32 %v3693, %v3853
        %v3855 = vpop.f32.mrb[0].mxu0
        %3856 = vmatprep.mubr.bf16.mxu0 %v2737
        %3857 = vmatmul.mubr.bf16.gmra.mrb[0].mxu0 %v2689
        %v3858 = vpop.f32.mrb[0].mxu0
        %v3859 = vadd.f32 %v3698, %v3858
        %v3860 = vpop.f32.mrb[0].mxu0
        %v3861 = vpop.f32.mrb[0].mxu0
        %v3862 = vadd.f32 %v3701, %v3861
        %v3863 = vpop.f32.mrb[0].mxu0
        %3864 = vmatprep.mubr.bf16.mxu0 %v2738
        %3865 = vmatmul.mubr.bf16.gmra.mrb[0].mxu0 %v2690
        %v3866 = vpop.f32.mrb[0].mxu0
        %v3867 = vadd.f32 %v3706, %v3866
        %v3868 = vpop.f32.mrb[0].mxu0
        %v3869 = vpop.f32.mrb[0].mxu0
        %v3870 = vadd.f32 %v3709, %v3869
        %v3871 = vpop.f32.mrb[0].mxu0
        %3872 = vmatprep.mubr.bf16.mxu0 %v2739
        %3873 = vmatmul.mubr.bf16.gmra.mrb[0].mxu0 %v2691
        %v3874 = vpop.f32.mrb[0].mxu0
        %v3875 = vadd.f32 %v3714, %v3874
        %v3876 = vpop.f32.mrb[0].mxu0
        %v3877 = vpop.f32.mrb[0].mxu0
        %v3878 = vadd.f32 %v3717, %v3877
        %v3879 = vpop.f32.mrb[0].mxu0
        %3880 = vmatprep.mubr.bf16.mxu0 %v2740
        %3881 = vmatmul.mubr.bf16.gmra.mrb[0].mxu0 %v2692
        %v3882 = vpop.f32.mrb[0].mxu0
        %v3883 = vadd.f32 %v3722, %v3882
        %v3884 = vpop.f32.mrb[0].mxu0
        %v3885 = vpop.f32.mrb[0].mxu0
        %v3886 = vadd.f32 %v3725, %v3885
        %v3887 = vpop.f32.mrb[0].mxu0
        %3888 = vmatprep.mubr.bf16.mxu0 %v2741
        %3889 = vmatmul.mubr.bf16.gmra.mrb[0].mxu0 %v2693
        %v3890 = vpop.f32.mrb[0].mxu0
        %v3891 = vadd.f32 %v3730, %v3890
        %v3892 = vpop.f32.mrb[0].mxu0
        %v3893 = vpop.f32.mrb[0].mxu0
        %v3894 = vadd.f32 %v3733, %v3893
        %v3895 = vpop.f32.mrb[0].mxu0
        %3896 = vmatprep.mubr.bf16.mxu0 %v2742
        %3897 = vmatmul.mubr.bf16.gmra.mrb[0].mxu0 %v2694
        %v3898 = vpop.f32.mrb[0].mxu0
        %v3899 = vadd.f32 %v3738, %v3898
        %v3900 = vpop.f32.mrb[0].mxu0
        %v3901 = vpop.f32.mrb[0].mxu0
        %v3902 = vadd.f32 %v3741, %v3901
        %v3903 = vpop.f32.mrb[0].mxu0
        %3904 = vmatprep.mubr.bf16.mxu0 %v2743
        %3905 = vmatmul.mubr.bf16.gmra.mrb[0].mxu0 %v2695
        %v3906 = vpop.f32.mrb[0].mxu0
        %v3907 = vadd.f32 %v3746, %v3906
        %v3908 = vpop.f32.mrb[0].mxu0
        %v3909 = vpop.f32.mrb[0].mxu0
        %v3910 = vadd.f32 %v3749, %v3909
        %v3911 = vpop.f32.mrb[0].mxu0
        %3912 = vmatprep.mubr.bf16.mxu0 %v2744
        %3913 = vmatmul.mubr.bf16.gmra.mrb[0].mxu0 %v2696
        %v3914 = vpop.f32.mrb[0].mxu0
        %v3915 = vadd.f32 %v3754, %v3914
        %v3916 = vpop.f32.mrb[0].mxu0
        %v3917 = vpop.f32.mrb[0].mxu0
        %v3918 = vadd.f32 %v3757, %v3917
        %v3919 = vpop.f32.mrb[0].mxu0
        %3920 = vmatprep.mubr.bf16.mxu0 %v2745
        %3921 = vmatmul.mubr.bf16.gmra.mrb[0].mxu0 %v2697
        %v3922 = vpop.f32.mrb[0].mxu0
        %v3923 = vadd.f32 %v3762, %v3922
        %v3924 = vpop.f32.mrb[0].mxu0
        %v3925 = vpop.f32.mrb[0].mxu0
        %v3926 = vadd.f32 %v3765, %v3925
        %v3927 = vpop.f32.mrb[0].mxu0
        %3928 = vmatprep.mubr.bf16.mxu0 %v2746
        %3929 = vmatmul.mubr.bf16.gmra.mrb[0].mxu0 %v2698
        %v3930 = vpop.f32.mrb[0].mxu0
        %v3931 = vadd.f32 %v3770, %v3930
        %v3932 = vpop.f32.mrb[0].mxu0
        %v3933 = vpop.f32.mrb[0].mxu0
        %v3934 = vadd.f32 %v3773, %v3933
        %v3935 = vpop.f32.mrb[0].mxu0
        %3936 = vmatprep.mubr.bf16.mxu0 %v2747
        %3937 = vmatmul.mubr.bf16.gmra.mrb[0].mxu0 %v2699
        %v3938 = vpop.f32.mrb[0].mxu0
        %v3939 = vadd.f32 %v3778, %v3938
        %v3940 = vpop.f32.mrb[0].mxu0
        %v3941 = vpop.f32.mrb[0].mxu0
        %v3942 = vadd.f32 %v3781, %v3941
        %v3943 = vpop.f32.mrb[0].mxu0
        %3944 = vmatprep.mubr.bf16.mxu0 %v2748
        %3945 = vmatmul.mubr.bf16.gmra.mrb[0].mxu0 %v2700
        %v3946 = vpop.f32.mrb[0].mxu0
        %v3947 = vadd.f32 %v3786, %v3946
        %v3948 = vpop.f32.mrb[0].mxu0
        %v3949 = vpop.f32.mrb[0].mxu0
        %v3950 = vadd.f32 %v3789, %v3949
        %v3951 = vpop.f32.mrb[0].mxu0
        %3952 = vdwg.mxu0
        %3953 = vmatprep.subr.bf16.mxu0 0
        %3954 = vmatpush1.bf16.msra.mxu0 %v3374
        %3955 = vmatprep.subr.bf16.mxu0 0
        %3956 = vmatpush1.bf16.msra.mxu0 %v3375
        %3957 = vmatprep.subr.bf16.mxu0 0
        %3958 = vmatpush1.bf16.msra.mxu0 %v3376
        %3959 = vmatprep.subr.bf16.mxu0 0
        %3960 = vmatpush1.bf16.msra.mxu0 %v3377
        %3961 = vmatprep.subr.bf16.mxu0 0
        %3962 = vmatpush1.bf16.msra.mxu0 %v3378
        %3963 = vmatprep.subr.bf16.mxu0 0
        %3964 = vmatpush1.bf16.msra.mxu0 %v3379
        %3965 = vmatprep.subr.bf16.mxu0 0
        %3966 = vmatpush1.bf16.msra.mxu0 %v3380
        %3967 = vmatprep.subr.bf16.mxu0 0
        %3968 = vmatpush1.bf16.msra.mxu0 %v3381
        %3969 = vmatprep.subr.bf16.mxu0 0
        %3970 = vmatpush1.bf16.msra.mxu0 %v3382
        %3971 = vmatprep.subr.bf16.mxu0 0
        %3972 = vmatpush1.bf16.msra.mxu0 %v3383
        %3973 = vmatprep.subr.bf16.mxu0 0
        %3974 = vmatpush1.bf16.msra.mxu0 %v3384
        %3975 = vmatprep.subr.bf16.mxu0 0
        %3976 = vmatpush1.bf16.msra.mxu0 %v3385
        %3977 = vmatprep.subr.bf16.mxu0 0
        %3978 = vmatpush1.bf16.msra.mxu0 %v3386
        %3979 = vmatprep.subr.bf16.mxu0 0
        %3980 = vmatpush1.bf16.msra.mxu0 %v3387
        %3981 = vmatprep.subr.bf16.mxu0 0
        %3982 = vmatpush1.bf16.msra.mxu0 %v3388
        %3983 = vmatprep.subr.bf16.mxu0 0
        %3984 = vmatpush1.bf16.msra.mxu0 %v3389
        %3985 = vmatprep.mubr.bf16.mxu0 %v2830
        %3986 = vmatmul.mubr.bf16.gmra.mrb[0].mxu0 %v2782
        %v3987 = vpop.f32.mrb[0].mxu0
        %v3988 = vadd.f32 %v3827, %v3987
        %v3989 = vpop.f32.mrb[0].mxu0
        %v3990 = vpop.f32.mrb[0].mxu0
        %v3991 = vadd.f32 %v3830, %v3990
        %v3992 = vpop.f32.mrb[0].mxu0
        %3993 = vmatprep.mubr.bf16.mxu0 %v2831
        %3994 = vmatmul.mubr.bf16.gmra.mrb[0].mxu0 %v2783
        %v3995 = vpop.f32.mrb[0].mxu0
        %v3996 = vadd.f32 %v3835, %v3995
        %v3997 = vpop.f32.mrb[0].mxu0
        %v3998 = vpop.f32.mrb[0].mxu0
        %v3999 = vadd.f32 %v3838, %v3998
        %v4000 = vpop.f32.mrb[0].mxu0
        %4001 = vmatprep.mubr.bf16.mxu0 %v2832
        %4002 = vmatmul.mubr.bf16.gmra.mrb[0].mxu0 %v2784
        %v4003 = vpop.f32.mrb[0].mxu0
        %v4004 = vadd.f32 %v3843, %v4003
        %v4005 = vpop.f32.mrb[0].mxu0
        %v4006 = vpop.f32.mrb[0].mxu0
        %v4007 = vadd.f32 %v3846, %v4006
        %v4008 = vpop.f32.mrb[0].mxu0
        %4009 = vmatprep.mubr.bf16.mxu0 %v2833
        %4010 = vmatmul.mubr.bf16.gmra.mrb[0].mxu0 %v2785
        %v4011 = vpop.f32.mrb[0].mxu0
        %v4012 = vadd.f32 %v3851, %v4011
        %v4013 = vpop.f32.mrb[0].mxu0
        %v4014 = vpop.f32.mrb[0].mxu0
        %v4015 = vadd.f32 %v3854, %v4014
        %v4016 = vpop.f32.mrb[0].mxu0
        %4017 = vmatprep.mubr.bf16.mxu0 %v2834
        %4018 = vmatmul.mubr.bf16.gmra.mrb[0].mxu0 %v2786
        %v4019 = vpop.f32.mrb[0].mxu0
        %v4020 = vadd.f32 %v3859, %v4019
        %v4021 = vpop.f32.mrb[0].mxu0
        %v4022 = vpop.f32.mrb[0].mxu0
        %v4023 = vadd.f32 %v3862, %v4022
        %v4024 = vpop.f32.mrb[0].mxu0
        %4025 = vmatprep.mubr.bf16.mxu0 %v2835
        %4026 = vmatmul.mubr.bf16.gmra.mrb[0].mxu0 %v2787
        %v4027 = vpop.f32.mrb[0].mxu0
        %v4028 = vadd.f32 %v3867, %v4027
        %v4029 = vpop.f32.mrb[0].mxu0
        %v4030 = vpop.f32.mrb[0].mxu0
        %v4031 = vadd.f32 %v3870, %v4030
        %v4032 = vpop.f32.mrb[0].mxu0
        %4033 = vmatprep.mubr.bf16.mxu0 %v2836
        %4034 = vmatmul.mubr.bf16.gmra.mrb[0].mxu0 %v2788
        %v4035 = vpop.f32.mrb[0].mxu0
        %v4036 = vadd.f32 %v3875, %v4035
        %v4037 = vpop.f32.mrb[0].mxu0
        %v4038 = vpop.f32.mrb[0].mxu0
        %v4039 = vadd.f32 %v3878, %v4038
        %v4040 = vpop.f32.mrb[0].mxu0
        %4041 = vmatprep.mubr.bf16.mxu0 %v2837
        %4042 = vmatmul.mubr.bf16.gmra.mrb[0].mxu0 %v2789
        %v4043 = vpop.f32.mrb[0].mxu0
        %v4044 = vadd.f32 %v3883, %v4043
        %v4045 = vpop.f32.mrb[0].mxu0
        %v4046 = vpop.f32.mrb[0].mxu0
        %v4047 = vadd.f32 %v3886, %v4046
        %v4048 = vpop.f32.mrb[0].mxu0
        %4049 = vmatprep.mubr.bf16.mxu0 %v2838
        %4050 = vmatmul.mubr.bf16.gmra.mrb[0].mxu0 %v2790
        %v4051 = vpop.f32.mrb[0].mxu0
        %v4052 = vadd.f32 %v3891, %v4051
        %v4053 = vpop.f32.mrb[0].mxu0
        %v4054 = vpop.f32.mrb[0].mxu0
        %v4055 = vadd.f32 %v3894, %v4054
        %v4056 = vpop.f32.mrb[0].mxu0
        %4057 = vmatprep.mubr.bf16.mxu0 %v2839
        %4058 = vmatmul.mubr.bf16.gmra.mrb[0].mxu0 %v2791
        %v4059 = vpop.f32.mrb[0].mxu0
        %v4060 = vadd.f32 %v3899, %v4059
        %v4061 = vpop.f32.mrb[0].mxu0
        %v4062 = vpop.f32.mrb[0].mxu0
        %v4063 = vadd.f32 %v3902, %v4062
        %v4064 = vpop.f32.mrb[0].mxu0
        %4065 = vmatprep.mubr.bf16.mxu0 %v2840
        %4066 = vmatmul.mubr.bf16.gmra.mrb[0].mxu0 %v2792
        %v4067 = vpop.f32.mrb[0].mxu0
        %v4068 = vadd.f32 %v3907, %v4067
        %v4069 = vpop.f32.mrb[0].mxu0
        %v4070 = vpop.f32.mrb[0].mxu0
        %v4071 = vadd.f32 %v3910, %v4070
        %v4072 = vpop.f32.mrb[0].mxu0
        %4073 = vmatprep.mubr.bf16.mxu0 %v2841
        %4074 = vmatmul.mubr.bf16.gmra.mrb[0].mxu0 %v2793
        %v4075 = vpop.f32.mrb[0].mxu0
        %v4076 = vadd.f32 %v3915, %v4075
        %v4077 = vpop.f32.mrb[0].mxu0
        %v4078 = vpop.f32.mrb[0].mxu0
        %v4079 = vadd.f32 %v3918, %v4078
        %v4080 = vpop.f32.mrb[0].mxu0
        %4081 = vmatprep.mubr.bf16.mxu0 %v2842
        %4082 = vmatmul.mubr.bf16.gmra.mrb[0].mxu0 %v2794
        %v4083 = vpop.f32.mrb[0].mxu0
        %v4084 = vadd.f32 %v3923, %v4083
        %v4085 = vpop.f32.mrb[0].mxu0
        %v4086 = vpop.f32.mrb[0].mxu0
        %v4087 = vadd.f32 %v3926, %v4086
        %v4088 = vpop.f32.mrb[0].mxu0
        %4089 = vmatprep.mubr.bf16.mxu0 %v2843
        %4090 = vmatmul.mubr.bf16.gmra.mrb[0].mxu0 %v2795
        %v4091 = vpop.f32.mrb[0].mxu0
        %v4092 = vadd.f32 %v3931, %v4091
        %v4093 = vpop.f32.mrb[0].mxu0
        %v4094 = vpop.f32.mrb[0].mxu0
        %v4095 = vadd.f32 %v3934, %v4094
        %v4096 = vpop.f32.mrb[0].mxu0
        %4097 = vmatprep.mubr.bf16.mxu0 %v2844
        %4098 = vmatmul.mubr.bf16.gmra.mrb[0].mxu0 %v2796
        %v4099 = vpop.f32.mrb[0].mxu0
        %v4100 = vadd.f32 %v3939, %v4099
        %v4101 = vpop.f32.mrb[0].mxu0
        %v4102 = vpop.f32.mrb[0].mxu0
        %v4103 = vadd.f32 %v3942, %v4102
        %v4104 = vpop.f32.mrb[0].mxu0
        %4105 = vmatprep.mubr.bf16.mxu0 %v2845
        %4106 = vmatmul.mubr.bf16.gmra.mrb[0].mxu0 %v2797
        %v4107 = vpop.f32.mrb[0].mxu0
        %v4108 = vadd.f32 %v3947, %v4107
        %v4109 = vpop.f32.mrb[0].mxu0
        %v4110 = vpop.f32.mrb[0].mxu0
        %v4111 = vadd.f32 %v3950, %v4110
        %v4112 = vpop.f32.mrb[0].mxu0
        %4113 = vdwg.mxu0
        %4114 = vmatprep.subr.bf16.mxu0 0
        %4115 = vmatpush1.bf16.msra.mxu0 %v3390
        %4116 = vmatprep.subr.bf16.mxu0 0
        %4117 = vmatpush1.bf16.msra.mxu0 %v3391
        %4118 = vmatprep.subr.bf16.mxu0 0
        %4119 = vmatpush1.bf16.msra.mxu0 %v3392
        %4120 = vmatprep.subr.bf16.mxu0 0
        %4121 = vmatpush1.bf16.msra.mxu0 %v3393
        %4122 = vmatprep.subr.bf16.mxu0 0
        %4123 = vmatpush1.bf16.msra.mxu0 %v3394
        %4124 = vmatprep.subr.bf16.mxu0 0
        %4125 = vmatpush1.bf16.msra.mxu0 %v3395
        %4126 = vmatprep.subr.bf16.mxu0 0
        %4127 = vmatpush1.bf16.msra.mxu0 %v3396
        %4128 = vmatprep.subr.bf16.mxu0 0
        %4129 = vmatpush1.bf16.msra.mxu0 %v3397
        %4130 = vmatprep.subr.bf16.mxu0 0
        %4131 = vmatpush1.bf16.msra.mxu0 0
        %4132 = vmatprep.subr.bf16.mxu0 0
        %4133 = vmatpush1.bf16.msra.mxu0 0
        %4134 = vmatprep.subr.bf16.mxu0 0
        %4135 = vmatpush1.bf16.msra.mxu0 0
        %4136 = vmatprep.subr.bf16.mxu0 0
        %4137 = vmatpush1.bf16.msra.mxu0 0
        %4138 = vmatprep.subr.bf16.mxu0 0
        %4139 = vmatpush1.bf16.msra.mxu0 0
        %4140 = vmatprep.subr.bf16.mxu0 0
        %4141 = vmatpush1.bf16.msra.mxu0 0
        %4142 = vmatprep.subr.bf16.mxu0 0
        %4143 = vmatpush1.bf16.msra.mxu0 0
        %4144 = vmatprep.subr.bf16.mxu0 0
        %4145 = vmatpush1.bf16.msra.mxu0 0
        %4146 = vmatprep.mubr.bf16.mxu0 0
        %4147 = vmatmul.mubr.bf16.gmra.mrb[0].mxu0 %v2878
        %v4148 = vpop.f32.mrb[0].mxu0
        %v4149 = vadd.f32 %v3988, %v4148
        %v4150 = vpop.f32.mrb[0].mxu0
        %v4151 = vpop.f32.mrb[0].mxu0
        %v4152 = vadd.f32 %v3991, %v4151
        %v4153 = vpop.f32.mrb[0].mxu0
        %4154 = vmatprep.mubr.bf16.mxu0 0
        %4155 = vmatmul.mubr.bf16.gmra.mrb[0].mxu0 %v2879
        %v4156 = vpop.f32.mrb[0].mxu0
        %v4157 = vadd.f32 %v3996, %v4156
        %v4158 = vpop.f32.mrb[0].mxu0
        %v4159 = vpop.f32.mrb[0].mxu0
        %v4160 = vadd.f32 %v3999, %v4159
        %v4161 = vpop.f32.mrb[0].mxu0
        %4162 = vmatprep.mubr.bf16.mxu0 0
        %4163 = vmatmul.mubr.bf16.gmra.mrb[0].mxu0 %v2880
        %v4164 = vpop.f32.mrb[0].mxu0
        %v4165 = vadd.f32 %v4004, %v4164
        %v4166 = vpop.f32.mrb[0].mxu0
        %v4167 = vpop.f32.mrb[0].mxu0
        %v4168 = vadd.f32 %v4007, %v4167
        %v4169 = vpop.f32.mrb[0].mxu0
        %4170 = vmatprep.mubr.bf16.mxu0 0
        %4171 = vmatmul.mubr.bf16.gmra.mrb[0].mxu0 %v2881
        %v4172 = vpop.f32.mrb[0].mxu0
        %v4173 = vadd.f32 %v4012, %v4172
        %v4174 = vpop.f32.mrb[0].mxu0
        %v4175 = vpop.f32.mrb[0].mxu0
        %v4176 = vadd.f32 %v4015, %v4175
        %v4177 = vpop.f32.mrb[0].mxu0
        %4178 = vmatprep.mubr.bf16.mxu0 0
        %4179 = vmatmul.mubr.bf16.gmra.mrb[0].mxu0 %v2882
        %v4180 = vpop.f32.mrb[0].mxu0
        %v4181 = vadd.f32 %v4020, %v4180
        %v4182 = vpop.f32.mrb[0].mxu0
        %v4183 = vpop.f32.mrb[0].mxu0
        %v4184 = vadd.f32 %v4023, %v4183
        %v4185 = vpop.f32.mrb[0].mxu0
        %4186 = vmatprep.mubr.bf16.mxu0 0
        %4187 = vmatmul.mubr.bf16.gmra.mrb[0].mxu0 %v2883
        %v4188 = vpop.f32.mrb[0].mxu0
        %v4189 = vadd.f32 %v4028, %v4188
        %v4190 = vpop.f32.mrb[0].mxu0
        %v4191 = vpop.f32.mrb[0].mxu0
        %v4192 = vadd.f32 %v4031, %v4191
        %v4193 = vpop.f32.mrb[0].mxu0
        %4194 = vmatprep.mubr.bf16.mxu0 0
        %4195 = vmatmul.mubr.bf16.gmra.mrb[0].mxu0 %v2884
        %v4196 = vpop.f32.mrb[0].mxu0
        %v4197 = vadd.f32 %v4036, %v4196
        %v4198 = vpop.f32.mrb[0].mxu0
        %v4199 = vpop.f32.mrb[0].mxu0
        %v4200 = vadd.f32 %v4039, %v4199
        %v4201 = vpop.f32.mrb[0].mxu0
        %4202 = vmatprep.mubr.bf16.mxu0 0
        %4203 = vmatmul.mubr.bf16.gmra.mrb[0].mxu0 %v2885
        %v4204 = vpop.f32.mrb[0].mxu0
        %v4205 = vadd.f32 %v4044, %v4204
        %v4206 = vpop.f32.mrb[0].mxu0
        %v4207 = vpop.f32.mrb[0].mxu0
        %v4208 = vadd.f32 %v4047, %v4207
        %v4209 = vpop.f32.mrb[0].mxu0
        %4210 = vmatprep.mubr.bf16.mxu0 0
        %4211 = vmatmul.mubr.bf16.gmra.mrb[0].mxu0 %v2886
        %v4212 = vpop.f32.mrb[0].mxu0
        %v4213 = vadd.f32 %v4052, %v4212
        %v4214 = vpop.f32.mrb[0].mxu0
        %v4215 = vpop.f32.mrb[0].mxu0
        %v4216 = vadd.f32 %v4055, %v4215
        %v4217 = vpop.f32.mrb[0].mxu0
        %4218 = vmatprep.mubr.bf16.mxu0 0
        %4219 = vmatmul.mubr.bf16.gmra.mrb[0].mxu0 %v2887
        %v4220 = vpop.f32.mrb[0].mxu0
        %v4221 = vadd.f32 %v4060, %v4220
        %v4222 = vpop.f32.mrb[0].mxu0
        %v4223 = vpop.f32.mrb[0].mxu0
        %v4224 = vadd.f32 %v4063, %v4223
        %v4225 = vpop.f32.mrb[0].mxu0
        %4226 = vmatprep.mubr.bf16.mxu0 0
        %4227 = vmatmul.mubr.bf16.gmra.mrb[0].mxu0 %v2888
        %v4228 = vpop.f32.mrb[0].mxu0
        %v4229 = vadd.f32 %v4068, %v4228
        %v4230 = vpop.f32.mrb[0].mxu0
        %v4231 = vpop.f32.mrb[0].mxu0
        %v4232 = vadd.f32 %v4071, %v4231
        %v4233 = vpop.f32.mrb[0].mxu0
        %4234 = vmatprep.mubr.bf16.mxu0 0
        %4235 = vmatmul.mubr.bf16.gmra.mrb[0].mxu0 %v2889
        %v4236 = vpop.f32.mrb[0].mxu0
        %v4237 = vadd.f32 %v4076, %v4236
        %v4238 = vpop.f32.mrb[0].mxu0
        %v4239 = vpop.f32.mrb[0].mxu0
        %v4240 = vadd.f32 %v4079, %v4239
        %v4241 = vpop.f32.mrb[0].mxu0
        %4242 = vmatprep.mubr.bf16.mxu0 0
        %4243 = vmatmul.mubr.bf16.gmra.mrb[0].mxu0 %v2890
        %v4244 = vpop.f32.mrb[0].mxu0
        %v4245 = vadd.f32 %v4084, %v4244
        %v4246 = vpop.f32.mrb[0].mxu0
        %v4247 = vpop.f32.mrb[0].mxu0
        %v4248 = vadd.f32 %v4087, %v4247
        %v4249 = vpop.f32.mrb[0].mxu0
        %4250 = vmatprep.mubr.bf16.mxu0 0
        %4251 = vmatmul.mubr.bf16.gmra.mrb[0].mxu0 %v2891
        %v4252 = vpop.f32.mrb[0].mxu0
        %v4253 = vadd.f32 %v4092, %v4252
        %v4254 = vpop.f32.mrb[0].mxu0
        %v4255 = vpop.f32.mrb[0].mxu0
        %v4256 = vadd.f32 %v4095, %v4255
        %v4257 = vpop.f32.mrb[0].mxu0
        %4258 = vmatprep.mubr.bf16.mxu0 0
        %4259 = vmatmul.mubr.bf16.gmra.mrb[0].mxu0 %v2892
        %v4260 = vpop.f32.mrb[0].mxu0
        %v4261 = vadd.f32 %v4100, %v4260
        %v4262 = vpop.f32.mrb[0].mxu0
        %v4263 = vpop.f32.mrb[0].mxu0
        %v4264 = vadd.f32 %v4103, %v4263
        %v4265 = vpop.f32.mrb[0].mxu0
        %4266 = vmatprep.mubr.bf16.mxu0 0
        %4267 = vmatmul.mubr.bf16.gmra.mrb[0].mxu0 %v2893
        %v4268 = vpop.f32.mrb[0].mxu0
        %v4269 = vadd.f32 %v4108, %v4268
        %v4270 = vpop.f32.mrb[0].mxu0
        %v4271 = vpop.f32.mrb[0].mxu0
        %v4272 = vadd.f32 %v4111, %v4271
        %v4273 = vpop.f32.mrb[0].mxu0
        %4274 = vdwg.mxu0
        %v4275 = vld [vmem:[%s5] sm:$0x1]
        %v4277 = vlaneseq
        %v4278 = vshrl.u32 %v4277, 7
        %v4279 = vsub.s32 0, %v4278
        %v4280 = vrot.slane %v4275, %v4279
        %v4282 = vmul.f32 %v4149, %v4280
        %v4283 = vmul.f32 %v4152, %v4280
        %v4284 = vmul.f32 %v4157, %v4280
        %v4285 = vmul.f32 %v4160, %v4280
        %v4286 = vmul.f32 %v4165, %v4280
        %v4287 = vmul.f32 %v4168, %v4280
        %v4288 = vmul.f32 %v4173, %v4280
        %v4289 = vmul.f32 %v4176, %v4280
        %v4290 = vmul.f32 %v4181, %v4280
        %v4291 = vmul.f32 %v4184, %v4280
        %v4292 = vmul.f32 %v4189, %v4280
        %v4293 = vmul.f32 %v4192, %v4280
        %v4294 = vmul.f32 %v4197, %v4280
        %v4295 = vmul.f32 %v4200, %v4280
        %v4296 = vmul.f32 %v4205, %v4280
        %v4297 = vmul.f32 %v4208, %v4280
        %v4298 = vmul.f32 %v4213, %v4280
        %v4299 = vmul.f32 %v4216, %v4280
        %v4300 = vmul.f32 %v4221, %v4280
        %v4301 = vmul.f32 %v4224, %v4280
        %v4302 = vmul.f32 %v4229, %v4280
        %v4303 = vmul.f32 %v4232, %v4280
        %v4304 = vmul.f32 %v4237, %v4280
        %v4305 = vmul.f32 %v4240, %v4280
        %v4306 = vmul.f32 %v4245, %v4280
        %v4307 = vmul.f32 %v4248, %v4280
        %v4308 = vmul.f32 %v4253, %v4280
        %v4309 = vmul.f32 %v4256, %v4280
        %v4310 = vmul.f32 %v4261, %v4280
        %v4311 = vmul.f32 %v4264, %v4280
        %v4312 = vmul.f32 %v4269, %v4280
        %v4313 = vmul.f32 %v4272, %v4280
        %v4314 = vld [vmem:[%s6] sm:$0x1]
        %v4316 = vlaneseq
        %v4317 = vshrl.u32 %v4316, 7
        %v4318 = vsub.s32 0, %v4317
        %v4319 = vrot.slane %v4314, %v4318
        %v4321 = vadd.f32 %v4282, %v4319
        %v4322 = vadd.f32 %v4283, %v4319
        %v4323 = vadd.f32 %v4284, %v4319
        %v4324 = vadd.f32 %v4285, %v4319
        %v4325 = vadd.f32 %v4286, %v4319
        %v4326 = vadd.f32 %v4287, %v4319
        %v4327 = vadd.f32 %v4288, %v4319
        %v4328 = vadd.f32 %v4289, %v4319
        %v4329 = vadd.f32 %v4290, %v4319
        %v4330 = vadd.f32 %v4291, %v4319
        %v4331 = vadd.f32 %v4292, %v4319
        %v4332 = vadd.f32 %v4293, %v4319
        %v4333 = vadd.f32 %v4294, %v4319
        %v4334 = vadd.f32 %v4295, %v4319
        %v4335 = vadd.f32 %v4296, %v4319
        %v4336 = vadd.f32 %v4297, %v4319
        %v4337 = vadd.f32 %v4298, %v4319
        %v4338 = vadd.f32 %v4299, %v4319
        %v4339 = vadd.f32 %v4300, %v4319
        %v4340 = vadd.f32 %v4301, %v4319
        %v4341 = vadd.f32 %v4302, %v4319
        %v4342 = vadd.f32 %v4303, %v4319
        %v4343 = vadd.f32 %v4304, %v4319
        %v4344 = vadd.f32 %v4305, %v4319
        %v4345 = vadd.f32 %v4306, %v4319
        %v4346 = vadd.f32 %v4307, %v4319
        %v4347 = vadd.f32 %v4308, %v4319
        %v4348 = vadd.f32 %v4309, %v4319
        %v4349 = vadd.f32 %v4310, %v4319
        %v4350 = vadd.f32 %v4311, %v4319
        %v4351 = vadd.f32 %v4312, %v4319
        %v4352 = vadd.f32 %v4313, %v4319
        %vm4353 = vsmask.f32 3328
        %vm4354 = vsmask.f32 7440
        %vm4355 = vmor %vm4353, %vm4354
        %v4357 = vshrl.u32 %v417, 16
        %v4359 = vrot.slane %v4357, 4
        %v4360 = vshll.u32 %v417, 16
        %v4362 = vrot.slane %v4360, 5
        %v4363 = vor.u32 %v4359, %v4362
        %v4364 = vrot.slane %v4363, 4
        %v4366 = vshll.u32 %v418, 16
        %v4368 = vrot.slane %v4366, 5
        %v4369 = vsel %vm4355, %v4364, %v4368
        %v4370 = vshrl.u32 %v418, 16
        %v4372 = vrot.slane %v4370, 4
        %v4373 = vor.u32 %v4372, %v4368
        %v4374 = vrot.slane %v4373, 4
        %v4376 = vshll.u32 %v419, 16
        %v4378 = vrot.slane %v4376, 5
        %v4379 = vsel %vm4355, %v4374, %v4378
        %v4381 = vshrl.u32 %v420, 16
        %v4383 = vrot.slane %v4381, 4
        %v4384 = vshll.u32 %v420, 16
        %v4386 = vrot.slane %v4384, 5
        %v4387 = vor.u32 %v4383, %v4386
        %v4388 = vrot.slane %v4387, 4
        %v4390 = vshll.u32 %v421, 16
        %v4392 = vrot.slane %v4390, 5
        %v4393 = vsel %vm4355, %v4388, %v4392
        %v4394 = vshrl.u32 %v421, 16
        %v4396 = vrot.slane %v4394, 4
        %v4397 = vor.u32 %v4396, %v4392
        %v4398 = vrot.slane %v4397, 4
        %v4400 = vshll.u32 %v422, 16
        %v4402 = vrot.slane %v4400, 5
        %v4403 = vsel %vm4355, %v4398, %v4402
        %v4405 = vshrl.u32 %v423, 16
        %v4407 = vrot.slane %v4405, 4
        %v4408 = vshll.u32 %v423, 16
        %v4410 = vrot.slane %v4408, 5
        %v4411 = vor.u32 %v4407, %v4410
        %v4412 = vrot.slane %v4411, 4
        %v4414 = vshll.u32 %v424, 16
        %v4416 = vrot.slane %v4414, 5
        %v4417 = vsel %vm4355, %v4412, %v4416
        %v4418 = vshrl.u32 %v424, 16
        %v4420 = vrot.slane %v4418, 4
        %v4421 = vor.u32 %v4420, %v4416
        %v4422 = vrot.slane %v4421, 4
        %v4424 = vshll.u32 %v425, 16
        %v4426 = vrot.slane %v4424, 5
        %v4427 = vsel %vm4355, %v4422, %v4426
        %v4429 = vshrl.u32 %v426, 16
        %v4431 = vrot.slane %v4429, 4
        %v4432 = vshll.u32 %v426, 16
        %v4434 = vrot.slane %v4432, 5
        %v4435 = vor.u32 %v4431, %v4434
        %v4436 = vrot.slane %v4435, 4
        %v4438 = vshll.u32 %v427, 16
        %v4440 = vrot.slane %v4438, 5
        %v4441 = vsel %vm4355, %v4436, %v4440
        %v4442 = vshrl.u32 %v427, 16
        %v4444 = vrot.slane %v4442, 4
        %v4445 = vor.u32 %v4444, %v4440
        %v4446 = vrot.slane %v4445, 4
        %v4448 = vshll.u32 %v428, 16
        %v4450 = vrot.slane %v4448, 5
        %v4451 = vsel %vm4355, %v4446, %v4450
        %v4453 = vshrl.u32 %v429, 16
        %v4455 = vrot.slane %v4453, 4
        %v4456 = vshll.u32 %v429, 16
        %v4458 = vrot.slane %v4456, 5
        %v4459 = vor.u32 %v4455, %v4458
        %v4460 = vrot.slane %v4459, 4
        %v4462 = vshll.u32 %v430, 16
        %v4464 = vrot.slane %v4462, 5
        %v4465 = vsel %vm4355, %v4460, %v4464
        %v4466 = vshrl.u32 %v430, 16
        %v4468 = vrot.slane %v4466, 4
        %v4469 = vor.u32 %v4468, %v4464
        %v4470 = vrot.slane %v4469, 4
        %v4472 = vshll.u32 %v431, 16
        %v4474 = vrot.slane %v4472, 5
        %v4475 = vsel %vm4355, %v4470, %v4474
        %v4477 = vshrl.u32 %v432, 16
        %v4479 = vrot.slane %v4477, 4
        %v4480 = vshll.u32 %v432, 16
        %v4482 = vrot.slane %v4480, 5
        %v4483 = vor.u32 %v4479, %v4482
        %v4484 = vrot.slane %v4483, 4
        %v4486 = vshll.u32 %v433, 16
        %v4488 = vrot.slane %v4486, 5
        %v4489 = vsel %vm4355, %v4484, %v4488
        %v4490 = vshrl.u32 %v433, 16
        %v4492 = vrot.slane %v4490, 4
        %v4493 = vor.u32 %v4492, %v4488
        %v4494 = vrot.slane %v4493, 4
        %v4496 = vshll.u32 %v434, 16
        %v4498 = vrot.slane %v4496, 5
        %v4499 = vsel %vm4355, %v4494, %v4498
        %v4501 = vshrl.u32 %v435, 16
        %v4503 = vrot.slane %v4501, 4
        %v4504 = vshll.u32 %v435, 16
        %v4506 = vrot.slane %v4504, 5
        %v4507 = vor.u32 %v4503, %v4506
        %v4508 = vrot.slane %v4507, 4
        %v4510 = vshll.u32 %v436, 16
        %v4512 = vrot.slane %v4510, 5
        %v4513 = vsel %vm4355, %v4508, %v4512
        %v4514 = vshrl.u32 %v436, 16
        %v4516 = vrot.slane %v4514, 4
        %v4517 = vor.u32 %v4516, %v4512
        %v4518 = vrot.slane %v4517, 4
        %v4520 = vshll.u32 %v437, 16
        %v4522 = vrot.slane %v4520, 5
        %v4523 = vsel %vm4355, %v4518, %v4522
        %v4525 = vshrl.u32 %v438, 16
        %v4527 = vrot.slane %v4525, 4
        %v4528 = vshll.u32 %v438, 16
        %v4530 = vrot.slane %v4528, 5
        %v4531 = vor.u32 %v4527, %v4530
        %v4532 = vrot.slane %v4531, 4
        %v4534 = vshll.u32 %v439, 16
        %v4536 = vrot.slane %v4534, 5
        %v4537 = vsel %vm4355, %v4532, %v4536
        %v4538 = vshrl.u32 %v439, 16
        %v4540 = vrot.slane %v4538, 4
        %v4541 = vor.u32 %v4540, %v4536
        %v4542 = vrot.slane %v4541, 4
        %v4544 = vshll.u32 %v440, 16
        %v4546 = vrot.slane %v4544, 5
        %v4547 = vsel %vm4355, %v4542, %v4546
        %v4549 = vshrl.u32 %v441, 16
        %v4551 = vrot.slane %v4549, 4
        %v4552 = vshll.u32 %v441, 16
        %v4554 = vrot.slane %v4552, 5
        %v4555 = vor.u32 %v4551, %v4554
        %v4556 = vrot.slane %v4555, 4
        %v4558 = vshll.u32 %v442, 16
        %v4560 = vrot.slane %v4558, 5
        %v4561 = vsel %vm4355, %v4556, %v4560
        %v4562 = vshrl.u32 %v442, 16
        %v4564 = vrot.slane %v4562, 4
        %v4565 = vor.u32 %v4564, %v4560
        %v4566 = vrot.slane %v4565, 4
        %v4568 = vshll.u32 %v443, 16
        %v4570 = vrot.slane %v4568, 5
        %v4571 = vsel %vm4355, %v4566, %v4570
        %v4573 = vshrl.u32 %v444, 16
        %v4575 = vrot.slane %v4573, 4
        %v4576 = vshll.u32 %v444, 16
        %v4578 = vrot.slane %v4576, 5
        %v4579 = vor.u32 %v4575, %v4578
        %v4580 = vrot.slane %v4579, 4
        %v4582 = vshll.u32 %v445, 16
        %v4584 = vrot.slane %v4582, 5
        %v4585 = vsel %vm4355, %v4580, %v4584
        %v4586 = vshrl.u32 %v445, 16
        %v4588 = vrot.slane %v4586, 4
        %v4589 = vor.u32 %v4588, %v4584
        %v4590 = vrot.slane %v4589, 4
        %v4592 = vshll.u32 %v446, 16
        %v4594 = vrot.slane %v4592, 5
        %v4595 = vsel %vm4355, %v4590, %v4594
        %v4597 = vshrl.u32 %v447, 16
        %v4599 = vrot.slane %v4597, 4
        %v4600 = vshll.u32 %v447, 16
        %v4602 = vrot.slane %v4600, 5
        %v4603 = vor.u32 %v4599, %v4602
        %v4604 = vrot.slane %v4603, 4
        %v4606 = vshll.u32 %v448, 16
        %v4608 = vrot.slane %v4606, 5
        %v4609 = vsel %vm4355, %v4604, %v4608
        %v4610 = vshrl.u32 %v448, 16
        %v4612 = vrot.slane %v4610, 4
        %v4613 = vor.u32 %v4612, %v4608
        %v4614 = vrot.slane %v4613, 4
        %v4616 = vshll.u32 %v449, 16
        %v4618 = vrot.slane %v4616, 5
        %v4619 = vsel %vm4355, %v4614, %v4618
        %v4621 = vshrl.u32 %v450, 16
        %v4623 = vrot.slane %v4621, 4
        %v4624 = vshll.u32 %v450, 16
        %v4626 = vrot.slane %v4624, 5
        %v4627 = vor.u32 %v4623, %v4626
        %v4628 = vrot.slane %v4627, 4
        %v4630 = vshll.u32 %v451, 16
        %v4632 = vrot.slane %v4630, 5
        %v4633 = vsel %vm4355, %v4628, %v4632
        %v4634 = vshrl.u32 %v451, 16
        %v4636 = vrot.slane %v4634, 4
        %v4637 = vor.u32 %v4636, %v4632
        %v4638 = vrot.slane %v4637, 4
        %v4640 = vshll.u32 %v452, 16
        %v4642 = vrot.slane %v4640, 5
        %v4643 = vsel %vm4355, %v4638, %v4642
        %v4645 = vshrl.u32 %v453, 16
        %v4647 = vrot.slane %v4645, 4
        %v4648 = vshll.u32 %v453, 16
        %v4650 = vrot.slane %v4648, 5
        %v4651 = vor.u32 %v4647, %v4650
        %v4652 = vrot.slane %v4651, 4
        %v4654 = vshll.u32 %v454, 16
        %v4656 = vrot.slane %v4654, 5
        %v4657 = vsel %vm4355, %v4652, %v4656
        %v4658 = vshrl.u32 %v454, 16
        %v4660 = vrot.slane %v4658, 4
        %v4661 = vor.u32 %v4660, %v4656
        %v4662 = vrot.slane %v4661, 4
        %v4664 = vshll.u32 %v455, 16
        %v4666 = vrot.slane %v4664, 5
        %v4667 = vsel %vm4355, %v4662, %v4666
        %v4669 = vshrl.u32 %v456, 16
        %v4671 = vrot.slane %v4669, 4
        %v4672 = vshll.u32 %v456, 16
        %v4674 = vrot.slane %v4672, 5
        %v4675 = vor.u32 %v4671, %v4674
        %v4676 = vrot.slane %v4675, 4
        %v4678 = vshll.u32 %v457, 16
        %v4680 = vrot.slane %v4678, 5
        %v4681 = vsel %vm4355, %v4676, %v4680
        %v4682 = vshrl.u32 %v457, 16
        %v4684 = vrot.slane %v4682, 4
        %v4685 = vor.u32 %v4684, %v4680
        %v4686 = vrot.slane %v4685, 4
        %v4688 = vshll.u32 %v458, 16
        %v4690 = vrot.slane %v4688, 5
        %v4691 = vsel %vm4355, %v4686, %v4690
        %v4693 = vshrl.u32 %v459, 16
        %v4695 = vrot.slane %v4693, 4
        %v4696 = vshll.u32 %v459, 16
        %v4698 = vrot.slane %v4696, 5
        %v4699 = vor.u32 %v4695, %v4698
        %v4700 = vrot.slane %v4699, 4
        %v4702 = vshll.u32 %v460, 16
        %v4704 = vrot.slane %v4702, 5
        %v4705 = vsel %vm4355, %v4700, %v4704
        %v4706 = vshrl.u32 %v460, 16
        %v4708 = vrot.slane %v4706, 4
        %v4709 = vor.u32 %v4708, %v4704
        %v4710 = vrot.slane %v4709, 4
        %v4712 = vshll.u32 %v461, 16
        %v4714 = vrot.slane %v4712, 5
        %v4715 = vsel %vm4355, %v4710, %v4714
        %v4717 = vshrl.u32 %v462, 16
        %v4719 = vrot.slane %v4717, 4
        %v4720 = vshll.u32 %v462, 16
        %v4722 = vrot.slane %v4720, 5
        %v4723 = vor.u32 %v4719, %v4722
        %v4724 = vrot.slane %v4723, 4
        %v4726 = vshll.u32 %v463, 16
        %v4728 = vrot.slane %v4726, 5
        %v4729 = vsel %vm4355, %v4724, %v4728
        %v4730 = vshrl.u32 %v463, 16
        %v4732 = vrot.slane %v4730, 4
        %v4733 = vor.u32 %v4732, %v4728
        %v4734 = vrot.slane %v4733, 4
        %v4736 = vshll.u32 %v464, 16
        %v4738 = vrot.slane %v4736, 5
        %v4739 = vsel %vm4355, %v4734, %v4738
        %v4740 = vld [vmem:[%s7] sm:$0xf]
        %v4741 = vld [vmem:[%s7 + $0x4] sm:$0xf]
        %v4742 = vld [vmem:[%s7 + $0x8] sm:$0xf]
        %v4743 = vld [vmem:[%s7 + $0xc] sm:$0xf]
        %v4744 = vld [vmem:[%s7 + $0x10] sm:$0xf]
        %v4745 = vld [vmem:[%s7 + $0x14] sm:$0xf]
        %v4746 = vld [vmem:[%s7 + $0x18] sm:$0xf]
        %v4747 = vld [vmem:[%s7 + $0x1c] sm:$0xf]
        %v4748 = vld [vmem:[%s7 + $0x20] sm:$0xf]
        %v4749 = vld [vmem:[%s7 + $0x24] sm:$0xf]
        %v4750 = vld [vmem:[%s7 + $0x28] sm:$0xf]
        %v4751 = vld [vmem:[%s7 + $0x2c] sm:$0xf]
        %v4752 = vld [vmem:[%s7 + $0x30] sm:$0xf]
        %v4753 = vld [vmem:[%s7 + $0x34] sm:$0xf]
        %v4754 = vld [vmem:[%s7 + $0x38] sm:$0xf]
        %v4755 = vld [vmem:[%s7 + $0x3c] sm:$0xf]
        %v4756 = vunpack.c.l.b16 %v4369
        %v4757 = vunpack.c.l.b16 %v4379
        %v4758 = vunpack.c.l.b16 %v4393
        %v4759 = vunpack.c.l.b16 %v4403
        %v4760 = vunpack.c.l.b16 %v4417
        %v4761 = vunpack.c.l.b16 %v4427
        %v4762 = vunpack.c.l.b16 %v4441
        %v4763 = vunpack.c.l.b16 %v4451
        %v4764 = vunpack.c.l.b16 %v4465
        %v4765 = vunpack.c.l.b16 %v4475
        %v4766 = vunpack.c.l.b16 %v4489
        %v4767 = vunpack.c.l.b16 %v4499
        %v4768 = vunpack.c.l.b16 %v4513
        %v4769 = vunpack.c.l.b16 %v4523
        %v4770 = vunpack.c.l.b16 %v4537
        %v4771 = vunpack.c.l.b16 %v4547
        %v4772 = vunpack.c.l.b16 %v4561
        %v4773 = vunpack.c.l.b16 %v4571
        %v4774 = vunpack.c.l.b16 %v4585
        %v4775 = vunpack.c.l.b16 %v4595
        %v4776 = vunpack.c.l.b16 %v4609
        %v4777 = vunpack.c.l.b16 %v4619
        %v4778 = vunpack.c.l.b16 %v4633
        %v4779 = vunpack.c.l.b16 %v4643
        %v4780 = vunpack.c.l.b16 %v4657
        %v4781 = vunpack.c.l.b16 %v4667
        %v4782 = vunpack.c.l.b16 %v4681
        %v4783 = vunpack.c.l.b16 %v4691
        %v4784 = vunpack.c.l.b16 %v4705
        %v4785 = vunpack.c.l.b16 %v4715
        %v4786 = vunpack.c.l.b16 %v4729
        %v4787 = vunpack.c.l.b16 %v4739
        %v4788 = vpack.c.b16 %v4757, %v4756
        %v4789 = vpack.c.b16 %v4759, %v4758
        %v4790 = vpack.c.b16 %v4761, %v4760
        %v4791 = vpack.c.b16 %v4763, %v4762
        %v4792 = vpack.c.b16 %v4765, %v4764
        %v4793 = vpack.c.b16 %v4767, %v4766
        %v4794 = vpack.c.b16 %v4769, %v4768
        %v4795 = vpack.c.b16 %v4771, %v4770
        %v4796 = vpack.c.b16 %v4773, %v4772
        %v4797 = vpack.c.b16 %v4775, %v4774
        %v4798 = vpack.c.b16 %v4777, %v4776
        %v4799 = vpack.c.b16 %v4779, %v4778
        %v4800 = vpack.c.b16 %v4781, %v4780
        %v4801 = vpack.c.b16 %v4783, %v4782
        %v4802 = vpack.c.b16 %v4785, %v4784
        %v4803 = vpack.c.b16 %v4787, %v4786
        %v4836 = vunpack.c.l.b16 %v4740
        %v4837 = vunpack.c.l.b16 %v4741
        %v4838 = vunpack.c.l.b16 %v4742
        %v4839 = vunpack.c.l.b16 %v4743
        %v4840 = vunpack.c.l.b16 %v4744
        %v4841 = vunpack.c.l.b16 %v4745
        %v4842 = vunpack.c.l.b16 %v4746
        %v4843 = vunpack.c.l.b16 %v4747
        %v4844 = vunpack.c.l.b16 %v4748
        %v4845 = vunpack.c.l.b16 %v4749
        %v4846 = vunpack.c.l.b16 %v4750
        %v4847 = vunpack.c.l.b16 %v4751
        %v4848 = vunpack.c.l.b16 %v4752
        %v4849 = vunpack.c.l.b16 %v4753
        %v4850 = vunpack.c.l.b16 %v4754
        %v4851 = vunpack.c.l.b16 %v4755
        %v4852 = vpack.c.b16 %v4837, %v4836
        %v4853 = vpack.c.b16 %v4839, %v4838
        %v4854 = vpack.c.b16 %v4841, %v4840
        %v4855 = vpack.c.b16 %v4843, %v4842
        %v4856 = vpack.c.b16 %v4845, %v4844
        %v4857 = vpack.c.b16 %v4847, %v4846
        %v4858 = vpack.c.b16 %v4849, %v4848
        %v4859 = vpack.c.b16 %v4851, %v4850
        %4868 = vmatprep.subr.bf16.mxu0 0
        %4869 = vmatpush1.bf16.msra.mxu0 %v4852
        %4870 = vmatprep.subr.bf16.mxu0 0
        %4871 = vmatpush1.bf16.msra.mxu0 %v4853
        %4872 = vmatprep.subr.bf16.mxu0 0
        %4873 = vmatpush1.bf16.msra.mxu0 %v4854
        %4874 = vmatprep.subr.bf16.mxu0 0
        %4875 = vmatpush1.bf16.msra.mxu0 %v4855
        %4876 = vmatprep.subr.bf16.mxu0 0
        %4877 = vmatpush1.bf16.msra.mxu0 %v4856
        %4878 = vmatprep.subr.bf16.mxu0 0
        %4879 = vmatpush1.bf16.msra.mxu0 %v4857
        %4880 = vmatprep.subr.bf16.mxu0 0
        %4881 = vmatpush1.bf16.msra.mxu0 %v4858
        %4882 = vmatprep.subr.bf16.mxu0 0
        %4883 = vmatpush1.bf16.msra.mxu0 %v4859
        %4884 = vmatprep.subr.bf16.mxu0 0
        %4885 = vmatpush1.bf16.msra.mxu0 0
        %4886 = vmatprep.subr.bf16.mxu0 0
        %4887 = vmatpush1.bf16.msra.mxu0 0
        %4888 = vmatprep.subr.bf16.mxu0 0
        %4889 = vmatpush1.bf16.msra.mxu0 0
        %4890 = vmatprep.subr.bf16.mxu0 0
        %4891 = vmatpush1.bf16.msra.mxu0 0
        %4892 = vmatprep.subr.bf16.mxu0 0
        %4893 = vmatpush1.bf16.msra.mxu0 0
        %4894 = vmatprep.subr.bf16.mxu0 0
        %4895 = vmatpush1.bf16.msra.mxu0 0
        %4896 = vmatprep.subr.bf16.mxu0 0
        %4897 = vmatpush1.bf16.msra.mxu0 0
        %4898 = vmatprep.subr.bf16.mxu0 0
        %4899 = vmatpush1.bf16.msra.mxu0 0
        %4900 = vmatprep.mubr.bf16.mxu0 0
        %4901 = vmatmul.mubr.bf16.gmra.mrb[0].mxu0 %v4788
        %v4902 = vpop.f32.mrb[0].mxu0
        %v4903 = vadd.f32 0.0, %v4902
        %v4904 = vpop.f32.mrb[0].mxu0
        %v4905 = vpop.f32.mrb[0].mxu0
        %v4906 = vadd.f32 0.0, %v4905
        %v4907 = vpop.f32.mrb[0].mxu0
        %4908 = vmatprep.mubr.bf16.mxu0 0
        %4909 = vmatmul.mubr.bf16.gmra.mrb[0].mxu0 %v4789
        %v4910 = vpop.f32.mrb[0].mxu0
        %v4911 = vadd.f32 0.0, %v4910
        %v4912 = vpop.f32.mrb[0].mxu0
        %v4913 = vpop.f32.mrb[0].mxu0
        %v4914 = vadd.f32 0.0, %v4913
        %v4915 = vpop.f32.mrb[0].mxu0
        %4916 = vmatprep.mubr.bf16.mxu0 0
        %4917 = vmatmul.mubr.bf16.gmra.mrb[0].mxu0 %v4790
        %v4918 = vpop.f32.mrb[0].mxu0
        %v4919 = vadd.f32 0.0, %v4918
        %v4920 = vpop.f32.mrb[0].mxu0
        %v4921 = vpop.f32.mrb[0].mxu0
        %v4922 = vadd.f32 0.0, %v4921
        %v4923 = vpop.f32.mrb[0].mxu0
        %4924 = vmatprep.mubr.bf16.mxu0 0
        %4925 = vmatmul.mubr.bf16.gmra.mrb[0].mxu0 %v4791
        %v4926 = vpop.f32.mrb[0].mxu0
        %v4927 = vadd.f32 0.0, %v4926
        %v4928 = vpop.f32.mrb[0].mxu0
        %v4929 = vpop.f32.mrb[0].mxu0
        %v4930 = vadd.f32 0.0, %v4929
        %v4931 = vpop.f32.mrb[0].mxu0
        %4932 = vmatprep.mubr.bf16.mxu0 0
        %4933 = vmatmul.mubr.bf16.gmra.mrb[0].mxu0 %v4792
        %v4934 = vpop.f32.mrb[0].mxu0
        %v4935 = vadd.f32 0.0, %v4934
        %v4936 = vpop.f32.mrb[0].mxu0
        %v4937 = vpop.f32.mrb[0].mxu0
        %v4938 = vadd.f32 0.0, %v4937
        %v4939 = vpop.f32.mrb[0].mxu0
        %4940 = vmatprep.mubr.bf16.mxu0 0
        %4941 = vmatmul.mubr.bf16.gmra.mrb[0].mxu0 %v4793
        %v4942 = vpop.f32.mrb[0].mxu0
        %v4943 = vadd.f32 0.0, %v4942
        %v4944 = vpop.f32.mrb[0].mxu0
        %v4945 = vpop.f32.mrb[0].mxu0
        %v4946 = vadd.f32 0.0, %v4945
        %v4947 = vpop.f32.mrb[0].mxu0
        %4948 = vmatprep.mubr.bf16.mxu0 0
        %4949 = vmatmul.mubr.bf16.gmra.mrb[0].mxu0 %v4794
        %v4950 = vpop.f32.mrb[0].mxu0
        %v4951 = vadd.f32 0.0, %v4950
        %v4952 = vpop.f32.mrb[0].mxu0
        %v4953 = vpop.f32.mrb[0].mxu0
        %v4954 = vadd.f32 0.0, %v4953
        %v4955 = vpop.f32.mrb[0].mxu0
        %4956 = vmatprep.mubr.bf16.mxu0 0
        %4957 = vmatmul.mubr.bf16.gmra.mrb[0].mxu0 %v4795
        %v4958 = vpop.f32.mrb[0].mxu0
        %v4959 = vadd.f32 0.0, %v4958
        %v4960 = vpop.f32.mrb[0].mxu0
        %v4961 = vpop.f32.mrb[0].mxu0
        %v4962 = vadd.f32 0.0, %v4961
        %v4963 = vpop.f32.mrb[0].mxu0
        %4964 = vmatprep.mubr.bf16.mxu0 0
        %4965 = vmatmul.mubr.bf16.gmra.mrb[0].mxu0 %v4796
        %v4966 = vpop.f32.mrb[0].mxu0
        %v4967 = vadd.f32 0.0, %v4966
        %v4968 = vpop.f32.mrb[0].mxu0
        %v4969 = vpop.f32.mrb[0].mxu0
        %v4970 = vadd.f32 0.0, %v4969
        %v4971 = vpop.f32.mrb[0].mxu0
        %4972 = vmatprep.mubr.bf16.mxu0 0
        %4973 = vmatmul.mubr.bf16.gmra.mrb[0].mxu0 %v4797
        %v4974 = vpop.f32.mrb[0].mxu0
        %v4975 = vadd.f32 0.0, %v4974
        %v4976 = vpop.f32.mrb[0].mxu0
        %v4977 = vpop.f32.mrb[0].mxu0
        %v4978 = vadd.f32 0.0, %v4977
        %v4979 = vpop.f32.mrb[0].mxu0
        %4980 = vmatprep.mubr.bf16.mxu0 0
        %4981 = vmatmul.mubr.bf16.gmra.mrb[0].mxu0 %v4798
        %v4982 = vpop.f32.mrb[0].mxu0
        %v4983 = vadd.f32 0.0, %v4982
        %v4984 = vpop.f32.mrb[0].mxu0
        %v4985 = vpop.f32.mrb[0].mxu0
        %v4986 = vadd.f32 0.0, %v4985
        %v4987 = vpop.f32.mrb[0].mxu0
        %4988 = vmatprep.mubr.bf16.mxu0 0
        %4989 = vmatmul.mubr.bf16.gmra.mrb[0].mxu0 %v4799
        %v4990 = vpop.f32.mrb[0].mxu0
        %v4991 = vadd.f32 0.0, %v4990
        %v4992 = vpop.f32.mrb[0].mxu0
        %v4993 = vpop.f32.mrb[0].mxu0
        %v4994 = vadd.f32 0.0, %v4993
        %v4995 = vpop.f32.mrb[0].mxu0
        %4996 = vmatprep.mubr.bf16.mxu0 0
        %4997 = vmatmul.mubr.bf16.gmra.mrb[0].mxu0 %v4800
        %v4998 = vpop.f32.mrb[0].mxu0
        %v4999 = vadd.f32 0.0, %v4998
        %v5000 = vpop.f32.mrb[0].mxu0
        %v5001 = vpop.f32.mrb[0].mxu0
        %v5002 = vadd.f32 0.0, %v5001
        %v5003 = vpop.f32.mrb[0].mxu0
        %5004 = vmatprep.mubr.bf16.mxu0 0
        %5005 = vmatmul.mubr.bf16.gmra.mrb[0].mxu0 %v4801
        %v5006 = vpop.f32.mrb[0].mxu0
        %v5007 = vadd.f32 0.0, %v5006
        %v5008 = vpop.f32.mrb[0].mxu0
        %v5009 = vpop.f32.mrb[0].mxu0
        %v5010 = vadd.f32 0.0, %v5009
        %v5011 = vpop.f32.mrb[0].mxu0
        %5012 = vmatprep.mubr.bf16.mxu0 0
        %5013 = vmatmul.mubr.bf16.gmra.mrb[0].mxu0 %v4802
        %v5014 = vpop.f32.mrb[0].mxu0
        %v5015 = vadd.f32 0.0, %v5014
        %v5016 = vpop.f32.mrb[0].mxu0
        %v5017 = vpop.f32.mrb[0].mxu0
        %v5018 = vadd.f32 0.0, %v5017
        %v5019 = vpop.f32.mrb[0].mxu0
        %5020 = vmatprep.mubr.bf16.mxu0 0
        %5021 = vmatmul.mubr.bf16.gmra.mrb[0].mxu0 %v4803
        %v5022 = vpop.f32.mrb[0].mxu0
        %v5023 = vadd.f32 0.0, %v5022
        %v5024 = vpop.f32.mrb[0].mxu0
        %v5025 = vpop.f32.mrb[0].mxu0
        %v5026 = vadd.f32 0.0, %v5025
        %v5027 = vpop.f32.mrb[0].mxu0
        %5028 = vdwg.mxu0
        %v5029 = vld [vmem:[%s8] sm:$0x1]
        %v5031 = vlaneseq
        %v5032 = vshrl.u32 %v5031, 7
        %v5033 = vsub.s32 0, %v5032
        %v5034 = vrot.slane %v5029, %v5033
        %v5036 = vmul.f32 %v4903, %v5034
        %v5037 = vmul.f32 %v4906, %v5034
        %v5038 = vmul.f32 %v4911, %v5034
        %v5039 = vmul.f32 %v4914, %v5034
        %v5040 = vmul.f32 %v4919, %v5034
        %v5041 = vmul.f32 %v4922, %v5034
        %v5042 = vmul.f32 %v4927, %v5034
        %v5043 = vmul.f32 %v4930, %v5034
        %v5044 = vmul.f32 %v4935, %v5034
        %v5045 = vmul.f32 %v4938, %v5034
        %v5046 = vmul.f32 %v4943, %v5034
        %v5047 = vmul.f32 %v4946, %v5034
        %v5048 = vmul.f32 %v4951, %v5034
        %v5049 = vmul.f32 %v4954, %v5034
        %v5050 = vmul.f32 %v4959, %v5034
        %v5051 = vmul.f32 %v4962, %v5034
        %v5052 = vmul.f32 %v4967, %v5034
        %v5053 = vmul.f32 %v4970, %v5034
        %v5054 = vmul.f32 %v4975, %v5034
        %v5055 = vmul.f32 %v4978, %v5034
        %v5056 = vmul.f32 %v4983, %v5034
        %v5057 = vmul.f32 %v4986, %v5034
        %v5058 = vmul.f32 %v4991, %v5034
        %v5059 = vmul.f32 %v4994, %v5034
        %v5060 = vmul.f32 %v4999, %v5034
        %v5061 = vmul.f32 %v5002, %v5034
        %v5062 = vmul.f32 %v5007, %v5034
        %v5063 = vmul.f32 %v5010, %v5034
        %v5064 = vmul.f32 %v5015, %v5034
        %v5065 = vmul.f32 %v5018, %v5034
        %v5066 = vmul.f32 %v5023, %v5034
        %v5067 = vmul.f32 %v5026, %v5034
        %v5068 = vld [vmem:[%s9] sm:$0x1]
        %v5070 = vlaneseq
        %v5071 = vshrl.u32 %v5070, 7
        %v5072 = vsub.s32 0, %v5071
        %v5073 = vrot.slane %v5068, %v5072
        %v5075 = vadd.f32 %v5036, %v5073
        %v5076 = vadd.f32 %v5037, %v5073
        %v5077 = vadd.f32 %v5038, %v5073
        %v5078 = vadd.f32 %v5039, %v5073
        %v5079 = vadd.f32 %v5040, %v5073
        %v5080 = vadd.f32 %v5041, %v5073
        %v5081 = vadd.f32 %v5042, %v5073
        %v5082 = vadd.f32 %v5043, %v5073
        %v5083 = vadd.f32 %v5044, %v5073
        %v5084 = vadd.f32 %v5045, %v5073
        %v5085 = vadd.f32 %v5046, %v5073
        %v5086 = vadd.f32 %v5047, %v5073
        %v5087 = vadd.f32 %v5048, %v5073
        %v5088 = vadd.f32 %v5049, %v5073
        %v5089 = vadd.f32 %v5050, %v5073
        %v5090 = vadd.f32 %v5051, %v5073
        %v5091 = vadd.f32 %v5052, %v5073
        %v5092 = vadd.f32 %v5053, %v5073
        %v5093 = vadd.f32 %v5054, %v5073
        %v5094 = vadd.f32 %v5055, %v5073
        %v5095 = vadd.f32 %v5056, %v5073
        %v5096 = vadd.f32 %v5057, %v5073
        %v5097 = vadd.f32 %v5058, %v5073
        %v5098 = vadd.f32 %v5059, %v5073
        %v5099 = vadd.f32 %v5060, %v5073
        %v5100 = vadd.f32 %v5061, %v5073
        %v5101 = vadd.f32 %v5062, %v5073
        %v5102 = vadd.f32 %v5063, %v5073
        %v5103 = vadd.f32 %v5064, %v5073
        %v5104 = vadd.f32 %v5065, %v5073
        %v5105 = vadd.f32 %v5066, %v5073
        %v5106 = vadd.f32 %v5067, %v5073
        %v5107 = vadd.f32 %v4321, %v5075
        %v5108 = vadd.f32 %v4322, %v5076
        %v5109 = vadd.f32 %v4323, %v5077
        %v5110 = vadd.f32 %v4324, %v5078
        %v5111 = vadd.f32 %v4325, %v5079
        %v5112 = vadd.f32 %v4326, %v5080
        %v5113 = vadd.f32 %v4327, %v5081
        %v5114 = vadd.f32 %v4328, %v5082
        %v5115 = vadd.f32 %v4329, %v5083
        %v5116 = vadd.f32 %v4330, %v5084
        %v5117 = vadd.f32 %v4331, %v5085
        %v5118 = vadd.f32 %v4332, %v5086
        %v5119 = vadd.f32 %v4333, %v5087
        %v5120 = vadd.f32 %v4334, %v5088
        %v5121 = vadd.f32 %v4335, %v5089
        %v5122 = vadd.f32 %v4336, %v5090
        %v5123 = vadd.f32 %v4337, %v5091
        %v5124 = vadd.f32 %v4338, %v5092
        %v5125 = vadd.f32 %v4339, %v5093
        %v5126 = vadd.f32 %v4340, %v5094
        %v5127 = vadd.f32 %v4341, %v5095
        %v5128 = vadd.f32 %v4342, %v5096
        %v5129 = vadd.f32 %v4343, %v5097
        %v5130 = vadd.f32 %v4344, %v5098
        %v5131 = vadd.f32 %v4345, %v5099
        %v5132 = vadd.f32 %v4346, %v5100
        %v5133 = vadd.f32 %v4347, %v5101
        %v5134 = vadd.f32 %v4348, %v5102
        %v5135 = vadd.f32 %v4349, %v5103
        %v5136 = vadd.f32 %v4350, %v5104
        %v5137 = vadd.f32 %v4351, %v5105
        %v5138 = vadd.f32 %v4352, %v5106
        %v5139 = vmax.f32 %v5107, 0.0
        %v5140 = vmax.f32 %v5108, 0.0
        %v5141 = vmax.f32 %v5109, 0.0
        %v5142 = vmax.f32 %v5110, 0.0
        %v5143 = vmax.f32 %v5111, 0.0
        %v5144 = vmax.f32 %v5112, 0.0
        %v5145 = vmax.f32 %v5113, 0.0
        %v5146 = vmax.f32 %v5114, 0.0
        %v5147 = vmax.f32 %v5115, 0.0
        %v5148 = vmax.f32 %v5116, 0.0
        %v5149 = vmax.f32 %v5117, 0.0
        %v5150 = vmax.f32 %v5118, 0.0
        %v5151 = vmax.f32 %v5119, 0.0
        %v5152 = vmax.f32 %v5120, 0.0
        %v5153 = vmax.f32 %v5121, 0.0
        %v5154 = vmax.f32 %v5122, 0.0
        %v5155 = vmax.f32 %v5123, 0.0
        %v5156 = vmax.f32 %v5124, 0.0
        %v5157 = vmax.f32 %v5125, 0.0
        %v5158 = vmax.f32 %v5126, 0.0
        %v5159 = vmax.f32 %v5127, 0.0
        %v5160 = vmax.f32 %v5128, 0.0
        %v5161 = vmax.f32 %v5129, 0.0
        %v5162 = vmax.f32 %v5130, 0.0
        %v5163 = vmax.f32 %v5131, 0.0
        %v5164 = vmax.f32 %v5132, 0.0
        %v5165 = vmax.f32 %v5133, 0.0
        %v5166 = vmax.f32 %v5134, 0.0
        %v5167 = vmax.f32 %v5135, 0.0
        %v5168 = vmax.f32 %v5136, 0.0
        %v5169 = vmax.f32 %v5137, 0.0
        %v5170 = vmax.f32 %v5138, 0.0
        %5171 = vst [vmem:[%s367] sm:$0xff] %v5139
        %5172 = vst [vmem:[%s367 + $0x8] sm:$0xff] %v5140
        %5173 = vst [vmem:[%s367 + $0x10] sm:$0xff] %v5141
        %5174 = vst [vmem:[%s367 + $0x18] sm:$0xff] %v5142
        %5175 = vst [vmem:[%s367 + $0x20] sm:$0xff] %v5143
        %5176 = vst [vmem:[%s367 + $0x28] sm:$0xff] %v5144
        %5177 = vst [vmem:[%s367 + $0x30] sm:$0xff] %v5145
        %5178 = vst [vmem:[%s367 + $0x38] sm:$0xff] %v5146
        %5179 = vst [vmem:[%s367 + $0x40] sm:$0xff] %v5147
        %5180 = vst [vmem:[%s367 + $0x48] sm:$0xff] %v5148
        %5181 = vst [vmem:[%s367 + $0x50] sm:$0xff] %v5149
        %5182 = vst [vmem:[%s367 + $0x58] sm:$0xff] %v5150
        %5183 = vst [vmem:[%s367 + $0x60] sm:$0xff] %v5151
        %5184 = vst [vmem:[%s367 + $0x68] sm:$0xff] %v5152
        %5185 = vst [vmem:[%s367 + $0x70] sm:$0xff] %v5153
        %5186 = vst [vmem:[%s367 + $0x78] sm:$0xff] %v5154
        %5187 = vst [vmem:[%s367 + $0x80] sm:$0xff] %v5155
        %5188 = vst [vmem:[%s367 + $0x88] sm:$0xff] %v5156
        %5189 = vst [vmem:[%s367 + $0x90] sm:$0xff] %v5157
        %5190 = vst [vmem:[%s367 + $0x98] sm:$0xff] %v5158
        %5191 = vst [vmem:[%s367 + $0xa0] sm:$0xff] %v5159
        %5192 = vst [vmem:[%s367 + $0xa8] sm:$0xff] %v5160
        %5193 = vst [vmem:[%s367 + $0xb0] sm:$0xff] %v5161
        %5194 = vst [vmem:[%s367 + $0xb8] sm:$0xff] %v5162
        %5195 = vst [vmem:[%s367 + $0xc0] sm:$0xff] %v5163
        %5196 = vst [vmem:[%s367 + $0xc8] sm:$0xff] %v5164
        %5197 = vst [vmem:[%s367 + $0xd0] sm:$0xff] %v5165
        %5198 = vst [vmem:[%s367 + $0xd8] sm:$0xff] %v5166
        %5199 = vst [vmem:[%s367 + $0xe0] sm:$0xff] %v5167
        %5200 = vst [vmem:[%s367 + $0xe8] sm:$0xff] %v5168
        %5201 = vst [vmem:[%s367 + $0xf0] sm:$0xff] %v5169
        %5202 = vst [vmem:[%s367 + $0xf8] sm:$0xff] %v5170
        %s5203 = sand.u32 %s248, 1
        %s5204 = scalar_lea.sflag [#allocation5], %s5203
        %s5205 = sand.u32 %s248, 1
        %s5206 = smul.addr %s5205, 256
        %s5207 = scalar_lea.vmem [#allocation6], %s5206
        // Predicated region
        $region65: #{tpu_custom_call.1} parent=59 // pred_check
          %p5208 = pneg %p258
        $region66: #{tpu_custom_call.1} parent=59 // pred_check_branch
          %5210 = sbr.rel (%p5208) target = $region68
        $region67: #{tpu_custom_call.1} parent=59 // pred_region
          %s5212 = ssub.s32 4096, 4096
          %5213 = vsyncadd %s5204, %s5212
          %s5214 = smul.addr %s25, 32
          %s5215 = smul.addr %s5214, 128
          %s5216 = scalar_lea.hbm %s10, %s5215
          %s5217 = sshll.u32 %s5207, 4
          %s5218 = int_to_ptr.vmem [resolvable:$true] %s5217
          %5223 = dma.vmem_to_hbm [thread:$0]  %s5218, 4096, %s5216, %s5204, 128, 128, 8
        $region68: #{tpu_custom_call.1} parent=59 // pred_fallthru
          _
      $region60: #{tpu_custom_call.1} parent=5 // pred_fallthru
        _
      %p5224 = scmp.le.s32.totalorder 2, %s20
      // Predicated region
      $region69: #{tpu_custom_call.1} parent=5 // pred_check
        %p5225 = pneg %p5224
      $region70: #{tpu_custom_call.1} parent=5 // pred_check_branch
        %5227 = sbr.rel (%p5225) target = $region72
      $region71: #{tpu_custom_call.1} parent=5 // pred_region
        %s5228 = ssub.s32 %s20, 2
        // Predicated region
        $region73: #{tpu_custom_call.1} parent=71 // pred_check
          %p5229 = pneg %p264
        $region74: #{tpu_custom_call.1} parent=71 // pred_check_branch
          %5231 = sbr.rel (%p5229) target = $region76
        $region75: #{tpu_custom_call.1} parent=71 // pred_region
          %s5232 = sand.u32 %s249, 1
          %s5233 = scalar_lea.sflag [#allocation5], %s5232
          %s5234 = sand.u32 %s249, 1
          %s5235 = smul.addr %s5234, 256
          %s5236 = scalar_lea.vmem [#allocation6], %s5235
          %5237 = dma.done %s5233, 4096
        $region76: #{tpu_custom_call.1} parent=71 // pred_fallthru
          _
      $region72: #{tpu_custom_call.1} parent=5 // pred_fallthru
        _
    $region6: #{tpu_custom_call.1} parent=1 // loop_footer
      %s24 = sadd.s32 1, %s20
    $region7: #{tpu_custom_call.1} parent=1 // loop_footer_branch
      %19 = sbr.rel target = $region3
    $region8: #{tpu_custom_call.1} parent=1 // loop_exit
      _
    %5238 = vsyncpa [#allocation4], 1
    %s5239 = scalar_lea.sflag [#allocation4], 1
    %5240 = vsyncpa %s5239, 1
    %5241 = vsyncpa [#allocation5], 1
    %s5242 = scalar_lea.sflag [#allocation5], 1
    %5243 = vsyncpa %s5242, 1

</llo_original>
